<compile_context>
chip_gen: v7x
topology: tpu7x:2x2x1
jax: 0.10.0
libtpu: 0.0.40
codegen_flags: <defaults>
</compile_context>

<pallas_src>
import jax
import jax.numpy as jnp
from jax.experimental import pallas as pl
from jax.experimental.pallas import tpu as pltpu


H1 = 800            # layer_1 / layer_4 real width
H2 = 600            # layer_2_* / layer_5_* real width
H1P = 896           # 800 -> 7*128: per-branch lane-aligned width of the fused layer-1 output
H2P = 640           # 600 -> 5*128: lane-aligned hidden width of layer 2/5
BATCH_TILE = 128    # batch grid tile for training-sized batches


def _round_up(x, m):
    return (x + m - 1) // m * m


def _critic_kernel(s_ref, a_ref, w1c_ref, b1c_ref,
                   w2s1_ref, w2a1_ref, b21_ref,
                   w2s2_ref, w2a2_ref, b22_ref,
                   w3_ref, w6_ref, b36_ref, out_ref):
    s = s_ref[...]                                   # (Bt, Sp)  bf16
    a = a_ref[...]                                   # (Bt, Ap)  bf16

    # layer_1 | layer_4 fused along the output dim: one MXU pass for both branches.
    # Bias-add / ReLU kept in f32 (works on v5e; bf16 only at the matmul inputs).
    h1c = jnp.dot(s, w1c_ref[...], preferred_element_type=jnp.float32) + b1c_ref[...]
    h1c = jnp.maximum(h1c, 0.0)                      # (Bt, 2*H1P) f32

    def branch(h1_f32, w2s_ref, w2a_ref, b2_ref, wrow_ref):
        # Contraction dim trimmed to the real 800 rows (no streamed zero pad);
        # the tiny K=Ap matmul for the action path is a separate, near-free pass.
        h2 = jnp.dot(h1_f32.astype(jnp.bfloat16), w2s_ref[...],
                     preferred_element_type=jnp.float32)
        h2 = h2 + jnp.dot(a, w2a_ref[...], preferred_element_type=jnp.float32)
        h2 = jnp.maximum(h2 + b2_ref[...], 0.0)      # (Bt, H2P) f32
        # N=1 head as VPU multiply + lane (XLU) reduction — keeps the MXU free.
        return jnp.sum(h2 * wrow_ref[...], axis=-1, keepdims=True)

    q1 = branch(h1c[:, :H1],          w2s1_ref, w2a1_ref, b21_ref, w3_ref)
    q2 = branch(h1c[:, H1P:H1P + H1], w2s2_ref, w2a2_ref, b22_ref, w6_ref)

    # Single store of the (Bt, 2) output block.
    out_ref[...] = jnp.concatenate([q1, q2], axis=-1) + b36_ref[...]


def prepare_critic_params(params):
    """One-time weight repacking: transpose to (in, out), zero-pad, bf16 cast, fuse.

    In an RL loop the same weights serve thousands of forwards; do this once per
    parameter update and reuse the result so the per-call path stays DMA-minimal.
    All padding is mathematically inert (zero weight rows/cols, zero bias, ReLU(0)=0).
    """
    f32, bf16 = jnp.float32, jnp.bfloat16
    state_dim = params["w1"].shape[1]
    action_dim = params["w2a"].shape[1]
    Sp = _round_up(max(state_dim, 1), 16)     # bf16 sublane pack for the first K dim
    Ap = _round_up(max(action_dim, 1), 16)

    def pad2(x, rows, cols):
        x = jnp.asarray(x, f32)
        return jnp.pad(x, ((0, rows - x.shape[0]), (0, cols - x.shape[1])))

    def wt(name, in_pad, out_pad):            # PyTorch (out, in) -> (in, out), padded, bf16
        return pad2(jnp.asarray(params[name], f32).T, in_pad, out_pad).astype(bf16)

    def brow(name, out_pad):
        return pad2(jnp.asarray(params[name], f32).reshape(1, -1), 1, out_pad)

    return dict(
        # layer_1 | layer_4 stacked along N (per-branch width padded to 896 so the
        # branch-2 slice of the fused output starts lane-aligned).
        w1c=jnp.concatenate([wt("w1", Sp, H1P), wt("w4", Sp, H1P)], axis=1),  # (Sp, 2*H1P)
        b1c=jnp.concatenate([brow("b1", H1P), brow("b4", H1P)], axis=1),      # (1, 2*H1P) f32
        # layer_2_s / layer_5_s: K dim left at the real 800 rows (no streamed zeros).
        w2s1=wt("w2s", H1, H2P),   # (800, 640) bf16
        w2a1=wt("w2a", Ap, H2P),   # (Ap, 640)  bf16
        b21=brow("b2a", H2P),      # (1, 640)   f32   (only layer_2_a's bias, as in the source)
        w2s2=wt("w5s", H1, H2P),
        w2a2=wt("w5a", Ap, H2P),
        b22=brow("b5a", H2P),
        # N=1 heads kept as f32 rows for the VPU/XLU reduction.
        w3=pad2(jnp.asarray(params["w3"], f32), 1, H2P),
        w6=pad2(jnp.asarray(params["w6"], f32), 1, H2P),
        b36=jnp.concatenate([jnp.asarray(params["b3"], f32).reshape(1, 1),
                             jnp.asarray(params["b6"], f32).reshape(1, 1)], axis=1),  # (1, 2)
    )


@jax.jit
def critic_forward(s, a, packed):
    """Per-call path: pad s/a, run the kernel over a batch grid with resident weights."""
    B = s.shape[0]
    Sp = packed["w1c"].shape[0]
    Ap = packed["w2a1"].shape[0]
    f32, bf16 = jnp.float32, jnp.bfloat16

    Bp = _round_up(max(B, 8), 8)
    Bt = min(Bp, BATCH_TILE)
    Bp = _round_up(Bp, Bt)
    n_tiles = Bp // Bt

    def pad2(x, rows, cols):
        x = jnp.asarray(x, f32)
        return jnp.pad(x, ((0, rows - x.shape[0]), (0, cols - x.shape[1])))

    s_p = pad2(s, Bp, Sp).astype(bf16)
    a_p = pad2(a, Bp, Ap).astype(bf16)

    w = packed
    operands = (s_p, a_p, w["w1c"], w["b1c"],
                w["w2s1"], w["w2a1"], w["b21"],
                w["w2s2"], w["w2a2"], w["b22"],
                w["w3"], w["w6"], w["b36"])

    def batch_spec(shape):
        return pl.BlockSpec(shape, lambda i: (i, 0))

    def const_spec(shape):      # constant block index -> weight stays resident in VMEM
        return pl.BlockSpec(shape, lambda i: (0, 0))

    in_specs = [batch_spec((Bt, Sp)), batch_spec((Bt, Ap))] + \
               [const_spec(x.shape) for x in operands[2:]]

    flops = int(2 * Bp * (Sp * 2 * H1P + (H1 + Ap) * H2P * 2 + 2 * H2P))
    weight_bytes = sum(int(x.size) * x.dtype.itemsize for x in operands[2:])
    bytes_accessed = int(weight_bytes
                         + s_p.size * s_p.dtype.itemsize
                         + a_p.size * a_p.dtype.itemsize
                         + Bp * 2 * 4)

    out = pl.pallas_call(
        _critic_kernel,
        grid=(n_tiles,),
        out_shape=jax.ShapeDtypeStruct((Bp, 2), f32),
        in_specs=in_specs,
        out_specs=pl.BlockSpec((Bt, 2), lambda i: (i, 0)),
        compiler_params=pltpu.CompilerParams(
            dimension_semantics=("parallel",),     # v7x: split batch across both TCs
            vmem_limit_bytes=16 * 1024 * 1024),
        cost_estimate=pl.CostEstimate(flops=flops, transcendentals=0,
                                      bytes_accessed=bytes_accessed),
    )(*operands)

    return out[:B, 0:1], out[:B, 1:2]


def _init_params(key, state_dim, action_dim):
    """Deterministic synthetic parameters matching nn.Linear shapes (out, in)."""
    shapes = {
        "w1":  (H1, state_dim),  "b1":  (H1,),
        "w2s": (H2, H1),
        "w2a": (H2, action_dim), "b2a": (H2,),
        "w3":  (1, H2),          "b3":  (1,),
        "w4":  (H1, state_dim),  "b4":  (H1,),
        "w5s": (H2, H1),
        "w5a": (H2, action_dim), "b5a": (H2,),
        "w6":  (1, H2),          "b6":  (1,),
    }
    params = {}
    keys = jax.random.split(key, len(shapes))
    for k, (name, shp) in zip(keys, sorted(shapes.items())):
        fan_in = shp[-1] if len(shp) > 1 else 1
        bound = 1.0 / jnp.sqrt(jnp.float32(max(fan_in, 1)))
        params[name] = jax.random.uniform(k, shp, jnp.float32, -bound, bound)
    return params


def _reference(s, a, p):
    """Pure-JAX f32 reference mirroring the PyTorch forward exactly."""
    def branch(w1, b1, w2s, w2a, b2a, w3, b3):
        s1 = jax.nn.relu(s @ w1.T + b1)
        h = jax.nn.relu(s1 @ w2s.T + a @ w2a.T + b2a)
        return h @ w3.T + b3
    q1 = branch(p["w1"], p["b1"], p["w2s"], p["w2a"], p["b2a"], p["w3"], p["b3"])
    q2 = branch(p["w4"], p["b4"], p["w5s"], p["w5a"], p["b5a"], p["w6"], p["b6"])
    return q1, q2


if __name__ == "__main__":
    key = jax.random.PRNGKey(0)
    B, state_dim, action_dim = 2, 24, 2

    k_s, k_a, k_p = jax.random.split(key, 3)
    s = jax.random.normal(k_s, (B, state_dim), jnp.float32)
    a = jax.random.uniform(k_a, (B, action_dim), jnp.float32, -1.0, 1.0)
    params = _init_params(k_p, state_dim, action_dim)

    # One-time repack; reused across every subsequent forward call.
    packed = prepare_critic_params(params)
    jax.block_until_ready(packed)

    q1, q2 = critic_forward(s, a, packed)
    jax.block_until_ready((q1, q2))

    q1_ref, q2_ref = _reference(s, a, params)
    assert q1.shape == (B, 1) and q2.shape == (B, 1)
    # bf16 weights / bf16 matmul inputs -> relaxed tolerance vs. the f32 reference.
    assert jnp.allclose(q1, q1_ref, atol=2e-2, rtol=2e-2)
    assert jnp.allclose(q2, q2_ref, atol=2e-2, rtol=2e-2)

    print("KERNEL_OK")
</pallas_src>

<mosaic_0001>
module attributes {stable_mosaic.version = 11 : i64} {
  func.func @_critic_kernel(%arg0: i32, %arg1: memref<8x32xbf16, #tpu.memory_space<vmem>>, %arg2: memref<8x16xbf16, #tpu.memory_space<vmem>>, %arg3: memref<32x1792xbf16, #tpu.memory_space<vmem>>, %arg4: memref<1x1792xf32, #tpu.memory_space<vmem>>, %arg5: memref<800x640xbf16, #tpu.memory_space<vmem>>, %arg6: memref<16x640xbf16, #tpu.memory_space<vmem>>, %arg7: memref<1x640xf32, #tpu.memory_space<vmem>>, %arg8: memref<800x640xbf16, #tpu.memory_space<vmem>>, %arg9: memref<16x640xbf16, #tpu.memory_space<vmem>>, %arg10: memref<1x640xf32, #tpu.memory_space<vmem>>, %arg11: memref<1x640xf32, #tpu.memory_space<vmem>>, %arg12: memref<1x640xf32, #tpu.memory_space<vmem>>, %arg13: memref<1x2xf32, #tpu.memory_space<vmem>>, %arg14: memref<8x2xf32, #tpu.memory_space<vmem>>) attributes {dimension_semantics = [#tpu.dimension_semantics<parallel>], iteration_bounds = array<i64: 1>, scalar_prefetch = 0 : i64, scratch_operands = 0 : i64, tpu.core_type = #tpu.core_type<tc>, window_params = [{transform_indices = @transform_0, window_bounds = array<i64: 8, 32>}, {transform_indices = @transform_1, window_bounds = array<i64: 8, 16>}, {pipeline_mode = #tpu.pipeline_mode<synchronous>, transform_indices = @transform_2, window_bounds = array<i64: 32, 1792>}, {pipeline_mode = #tpu.pipeline_mode<synchronous>, transform_indices = @transform_3, window_bounds = array<i64: 1, 1792>}, {pipeline_mode = #tpu.pipeline_mode<synchronous>, transform_indices = @transform_4, window_bounds = array<i64: 800, 640>}, {pipeline_mode = #tpu.pipeline_mode<synchronous>, transform_indices = @transform_5, window_bounds = array<i64: 16, 640>}, {pipeline_mode = #tpu.pipeline_mode<synchronous>, transform_indices = @transform_6, window_bounds = array<i64: 1, 640>}, {pipeline_mode = #tpu.pipeline_mode<synchronous>, transform_indices = @transform_7, window_bounds = array<i64: 800, 640>}, {pipeline_mode = #tpu.pipeline_mode<synchronous>, transform_indices = @transform_8, window_bounds = array<i64: 16, 640>}, {pipeline_mode = #tpu.pipeline_mode<synchronous>, transform_indices = @transform_9, window_bounds = array<i64: 1, 640>}, {pipeline_mode = #tpu.pipeline_mode<synchronous>, transform_indices = @transform_10, window_bounds = array<i64: 1, 640>}, {pipeline_mode = #tpu.pipeline_mode<synchronous>, transform_indices = @transform_11, window_bounds = array<i64: 1, 640>}, {pipeline_mode = #tpu.pipeline_mode<synchronous>, transform_indices = @transform_12, window_bounds = array<i64: 1, 2>}, {transform_indices = @transform_13, window_bounds = array<i64: 8, 2>}]} {
    %c0 = arith.constant 0 : index
    %c0_0 = arith.constant 0 : index
    %0 = vector.load %arg1[%c0, %c0_0] : memref<8x32xbf16, #tpu.memory_space<vmem>>, vector<8x32xbf16>
    %c0_1 = arith.constant 0 : index
    %c0_2 = arith.constant 0 : index
    %1 = vector.load %arg2[%c0_1, %c0_2] : memref<8x16xbf16, #tpu.memory_space<vmem>>, vector<8x16xbf16>
    %c0_3 = arith.constant 0 : index
    %c0_4 = arith.constant 0 : index
    %2 = vector.load %arg3[%c0_3, %c0_4] : memref<32x1792xbf16, #tpu.memory_space<vmem>>, vector<32x1792xbf16>
    %cst = arith.constant dense<0.000000e+00> : vector<8x1792xf32>
    %3 = tpu.matmul %0, %2, %cst {dimension_numbers = #tpu.dot_dimension_numbers<[1], [0], [0], [1], [0, 0, 1, 1], [], []>} : vector<8x32xbf16>, vector<32x1792xbf16>, vector<8x1792xf32> -> vector<8x1792xf32>
    %c0_5 = arith.constant 0 : index
    %c0_6 = arith.constant 0 : index
    %4 = vector.load %arg4[%c0_5, %c0_6] : memref<1x1792xf32, #tpu.memory_space<vmem>>, vector<1x1792xf32>
    %5 = vector.broadcast %4 : vector<1x1792xf32> to vector<8x1792xf32>
    %6 = arith.addf %3, %5 : vector<8x1792xf32>
    %cst_7 = arith.constant 0.000000e+00 : f32
    %7 = vector.broadcast %cst_7 : f32 to vector<8x1792xf32>
    %8 = arith.maximumf %6, %7 : vector<8x1792xf32>
    %9 = vector.extract_strided_slice %8 {offsets = [0, 0], sizes = [8, 800], strides = [1, 1]} : vector<8x1792xf32> to vector<8x800xf32>
    %10 = arith.truncf %9 : vector<8x800xf32> to vector<8x800xbf16>
    %c0_8 = arith.constant 0 : index
    %c0_9 = arith.constant 0 : index
    %11 = vector.load %arg5[%c0_8, %c0_9] : memref<800x640xbf16, #tpu.memory_space<vmem>>, vector<800x640xbf16>
    %cst_10 = arith.constant dense<0.000000e+00> : vector<8x640xf32>
    %12 = tpu.matmul %10, %11, %cst_10 {dimension_numbers = #tpu.dot_dimension_numbers<[1], [0], [0], [1], [0, 0, 1, 1], [], []>} : vector<8x800xbf16>, vector<800x640xbf16>, vector<8x640xf32> -> vector<8x640xf32>
    %c0_11 = arith.constant 0 : index
    %c0_12 = arith.constant 0 : index
    %13 = vector.load %arg6[%c0_11, %c0_12] : memref<16x640xbf16, #tpu.memory_space<vmem>>, vector<16x640xbf16>
    %cst_13 = arith.constant dense<0.000000e+00> : vector<8x640xf32>
    %14 = tpu.matmul %1, %13, %cst_13 {dimension_numbers = #tpu.dot_dimension_numbers<[1], [0], [0], [1], [0, 0, 1, 1], [], []>} : vector<8x16xbf16>, vector<16x640xbf16>, vector<8x640xf32> -> vector<8x640xf32>
    %15 = arith.addf %12, %14 : vector<8x640xf32>
    %c0_14 = arith.constant 0 : index
    %c0_15 = arith.constant 0 : index
    %16 = vector.load %arg7[%c0_14, %c0_15] : memref<1x640xf32, #tpu.memory_space<vmem>>, vector<1x640xf32>
    %17 = vector.broadcast %16 : vector<1x640xf32> to vector<8x640xf32>
    %18 = arith.addf %15, %17 : vector<8x640xf32>
    %cst_16 = arith.constant 0.000000e+00 : f32
    %19 = vector.broadcast %cst_16 : f32 to vector<8x640xf32>
    %20 = arith.maximumf %18, %19 : vector<8x640xf32>
    %c0_17 = arith.constant 0 : index
    %c0_18 = arith.constant 0 : index
    %21 = vector.load %arg11[%c0_17, %c0_18] : memref<1x640xf32, #tpu.memory_space<vmem>>, vector<1x640xf32>
    %22 = vector.broadcast %21 : vector<1x640xf32> to vector<8x640xf32>
    %23 = arith.mulf %20, %22 : vector<8x640xf32>
    %cst_19 = arith.constant dense<0.000000e+00> : vector<8xf32>
    %24 = vector.multi_reduction <add>, %23, %cst_19 [1] : vector<8x640xf32> to vector<8xf32>
    %25 = vector.shape_cast %24 : vector<8xf32> to vector<8x1xf32>
    %26 = vector.extract_strided_slice %8 {offsets = [0, 896], sizes = [8, 800], strides = [1, 1]} : vector<8x1792xf32> to vector<8x800xf32>
    %27 = arith.truncf %26 : vector<8x800xf32> to vector<8x800xbf16>
    %c0_20 = arith.constant 0 : index
    %c0_21 = arith.constant 0 : index
    %28 = vector.load %arg8[%c0_20, %c0_21] : memref<800x640xbf16, #tpu.memory_space<vmem>>, vector<800x640xbf16>
    %cst_22 = arith.constant dense<0.000000e+00> : vector<8x640xf32>
    %29 = tpu.matmul %27, %28, %cst_22 {dimension_numbers = #tpu.dot_dimension_numbers<[1], [0], [0], [1], [0, 0, 1, 1], [], []>} : vector<8x800xbf16>, vector<800x640xbf16>, vector<8x640xf32> -> vector<8x640xf32>
    %c0_23 = arith.constant 0 : index
    %c0_24 = arith.constant 0 : index
    %30 = vector.load %arg9[%c0_23, %c0_24] : memref<16x640xbf16, #tpu.memory_space<vmem>>, vector<16x640xbf16>
    %cst_25 = arith.constant dense<0.000000e+00> : vector<8x640xf32>
    %31 = tpu.matmul %1, %30, %cst_25 {dimension_numbers = #tpu.dot_dimension_numbers<[1], [0], [0], [1], [0, 0, 1, 1], [], []>} : vector<8x16xbf16>, vector<16x640xbf16>, vector<8x640xf32> -> vector<8x640xf32>
    %32 = arith.addf %29, %31 : vector<8x640xf32>
    %c0_26 = arith.constant 0 : index
    %c0_27 = arith.constant 0 : index
    %33 = vector.load %arg10[%c0_26, %c0_27] : memref<1x640xf32, #tpu.memory_space<vmem>>, vector<1x640xf32>
    %34 = vector.broadcast %33 : vector<1x640xf32> to vector<8x640xf32>
    %35 = arith.addf %32, %34 : vector<8x640xf32>
    %cst_28 = arith.constant 0.000000e+00 : f32
    %36 = vector.broadcast %cst_28 : f32 to vector<8x640xf32>
    %37 = arith.maximumf %35, %36 : vector<8x640xf32>
    %c0_29 = arith.constant 0 : index
    %c0_30 = arith.constant 0 : index
    %38 = vector.load %arg12[%c0_29, %c0_30] : memref<1x640xf32, #tpu.memory_space<vmem>>, vector<1x640xf32>
    %39 = vector.broadcast %38 : vector<1x640xf32> to vector<8x640xf32>
    %40 = arith.mulf %37, %39 : vector<8x640xf32>
    %cst_31 = arith.constant dense<0.000000e+00> : vector<8xf32>
    %41 = vector.multi_reduction <add>, %40, %cst_31 [1] : vector<8x640xf32> to vector<8xf32>
    %42 = vector.shape_cast %41 : vector<8xf32> to vector<8x1xf32>
    %43 = tpu.concatenate %25, %42 in 1 : vector<8x1xf32>, vector<8x1xf32> -> vector<8x2xf32>
    %c0_32 = arith.constant 0 : index
    %c0_33 = arith.constant 0 : index
    %44 = vector.load %arg13[%c0_32, %c0_33] : memref<1x2xf32, #tpu.memory_space<vmem>>, vector<1x2xf32>
    %45 = vector.broadcast %44 : vector<1x2xf32> to vector<8x2xf32>
    %46 = arith.addf %43, %45 : vector<8x2xf32>
    %c0_34 = arith.constant 0 : index
    %c0_35 = arith.constant 0 : index
    %47 = vector.load %arg14[%c0_34, %c0_35] : memref<8x2xf32, #tpu.memory_space<vmem>>, vector<8x2xf32>
    tpu.vector_store %arg14[%c0_34, %c0_35], %46 {strides = array<i32>} : memref<8x2xf32, #tpu.memory_space<vmem>>, vector<8x2xf32>,
    return
  }
  func.func @transform_0(%arg0: i32) -> (i32, i32) {
    %c0_i32 = arith.constant 0 : i32
    %c0_i32_0 = arith.constant 0 : i32
    return %arg0, %c0_i32 : i32, i32
  }
  func.func @transform_1(%arg0: i32) -> (i32, i32) {
    %c0_i32 = arith.constant 0 : i32
    %c0_i32_0 = arith.constant 0 : i32
    return %arg0, %c0_i32 : i32, i32
  }
  func.func @transform_2(%arg0: i32) -> (i32, i32) {
    %c0_i32 = arith.constant 0 : i32
    %c0_i32_0 = arith.constant 0 : i32
    %c0_i32_1 = arith.constant 0 : i32
    return %c0_i32, %c0_i32_0 : i32, i32
  }
  func.func @transform_3(%arg0: i32) -> (i32, i32) {
    %c0_i32 = arith.constant 0 : i32
    %c0_i32_0 = arith.constant 0 : i32
    %c0_i32_1 = arith.constant 0 : i32
    return %c0_i32, %c0_i32_0 : i32, i32
  }
  func.func @transform_4(%arg0: i32) -> (i32, i32) {
    %c0_i32 = arith.constant 0 : i32
    %c0_i32_0 = arith.constant 0 : i32
    %c0_i32_1 = arith.constant 0 : i32
    return %c0_i32, %c0_i32_0 : i32, i32
  }
  func.func @transform_5(%arg0: i32) -> (i32, i32) {
    %c0_i32 = arith.constant 0 : i32
    %c0_i32_0 = arith.constant 0 : i32
    %c0_i32_1 = arith.constant 0 : i32
    return %c0_i32, %c0_i32_0 : i32, i32
  }
  func.func @transform_6(%arg0: i32) -> (i32, i32) {
    %c0_i32 = arith.constant 0 : i32
    %c0_i32_0 = arith.constant 0 : i32
    %c0_i32_1 = arith.constant 0 : i32
    return %c0_i32, %c0_i32_0 : i32, i32
  }
  func.func @transform_7(%arg0: i32) -> (i32, i32) {
    %c0_i32 = arith.constant 0 : i32
    %c0_i32_0 = arith.constant 0 : i32
    %c0_i32_1 = arith.constant 0 : i32
    return %c0_i32, %c0_i32_0 : i32, i32
  }
  func.func @transform_8(%arg0: i32) -> (i32, i32) {
    %c0_i32 = arith.constant 0 : i32
    %c0_i32_0 = arith.constant 0 : i32
    %c0_i32_1 = arith.constant 0 : i32
    return %c0_i32, %c0_i32_0 : i32, i32
  }
  func.func @transform_9(%arg0: i32) -> (i32, i32) {
    %c0_i32 = arith.constant 0 : i32
    %c0_i32_0 = arith.constant 0 : i32
    %c0_i32_1 = arith.constant 0 : i32
    return %c0_i32, %c0_i32_0 : i32, i32
  }
  func.func @transform_10(%arg0: i32) -> (i32, i32) {
    %c0_i32 = arith.constant 0 : i32
    %c0_i32_0 = arith.constant 0 : i32
    %c0_i32_1 = arith.constant 0 : i32
    return %c0_i32, %c0_i32_0 : i32, i32
  }
  func.func @transform_11(%arg0: i32) -> (i32, i32) {
    %c0_i32 = arith.constant 0 : i32
    %c0_i32_0 = arith.constant 0 : i32
    %c0_i32_1 = arith.constant 0 : i32
    return %c0_i32, %c0_i32_0 : i32, i32
  }
  func.func @transform_12(%arg0: i32) -> (i32, i32) {
    %c0_i32 = arith.constant 0 : i32
    %c0_i32_0 = arith.constant 0 : i32
    %c0_i32_1 = arith.constant 0 : i32
    return %c0_i32, %c0_i32_0 : i32, i32
  }
  func.func @transform_13(%arg0: i32) -> (i32, i32) {
    %c0_i32 = arith.constant 0 : i32
    %c0_i32_0 = arith.constant 0 : i32
    return %arg0, %c0_i32 : i32, i32
  }
}

</mosaic_0001>

<llo_original>
// kernel: critic_forward.1
$region0: #{critic_forward.1}
  #allocation0 [shape = 'u32[]', space=smem, size = 0x4, offset = 0x4, fixed_abs, tag = 'smem constant byte address 0x4 - core index']
  #allocation1 [shape = 'u32[144,128]{1,0:T(1,128)}', space=vmem, size = 0x12000, scoped, tag = 'internal scratch']
  %s0 = inlined_call_operand.vmem [shape: bf16[8,32], index: 0, kind: input, shape index: {}]
  %s1 = inlined_call_operand.vmem [shape: bf16[8,16], index: 1, kind: input, shape index: {}]
  %s2 = inlined_call_operand.hbm [shape: bf16[32,1792], index: 2, kind: input, shape index: {}]
  %s3 = inlined_call_operand.hbm [shape: f32[1,1792], index: 3, kind: input, shape index: {}]
  %s4 = inlined_call_operand.hbm [shape: bf16[800,640], index: 4, kind: input, shape index: {}]
  %s5 = inlined_call_operand.vmem [shape: bf16[16,640], index: 5, kind: input, shape index: {}]
  %s6 = inlined_call_operand.vmem [shape: f32[1,640], index: 6, kind: input, shape index: {}]
  %s7 = inlined_call_operand.hbm [shape: bf16[800,640], index: 7, kind: input, shape index: {}]
  %s8 = inlined_call_operand.hbm [shape: bf16[16,640], index: 8, kind: input, shape index: {}]
  %s9 = inlined_call_operand.hbm [shape: f32[1,640], index: 9, kind: input, shape index: {}]
  %s10 = inlined_call_operand.vmem [shape: f32[1,640], index: 10, kind: input, shape index: {}]
  %s11 = inlined_call_operand.vmem [shape: f32[1,640], index: 11, kind: input, shape index: {}]
  %s12 = inlined_call_operand.vmem [shape: f32[1,2], index: 12, kind: input, shape index: {}]
  %s13 = inlined_call_operand.vmem [shape: f32[8,2], index: 13, kind: output, shape index: {}]
  %s14 = sld [smem:[#allocation0]]
  $region86: #{critic_forward.1} parent=0
    _
  %s16 = ssub.s32 1, %s14
  %s17 = scalar_select 0, %s16, %s14
  $region1: #{critic_forward.1} parent=0
    #allocation2 [shape = 'u8[114688]{0}', space=vmem, size = 0x1c000, scoped, tag = 'input window, operand 2, single buffered']
    #allocation3 [shape = 's32[1]{0}', space=sflag, size = 0x4, scoped, tag = 'scoped memory for critic_forward.1']
    #allocation4 [shape = 'u8[7168]{0}', space=vmem, size = 0x1c00, scoped, tag = 'input window, operand 3, single buffered']
    #allocation5 [shape = 's32[1]{0}', space=sflag, size = 0x4, scoped, tag = 'scoped memory for critic_forward.1']
    #allocation6 [shape = 'u8[1024000]{0}', space=vmem, size = 0xfa000, scoped, tag = 'input window, operand 4, single buffered']
    #allocation7 [shape = 'u8[1024000]{0}', space=vmem, size = 0xfa000, scoped, tag = 'input window, operand 7, single buffered']
    #allocation8 [shape = 's32[1]{0}', space=sflag, size = 0x4, scoped, tag = 'scoped memory for critic_forward.1']
    #allocation9 [shape = 'u8[20480]{0}', space=vmem, size = 0x5000, scoped, tag = 'input window, operand 8, single buffered']
    #allocation10 [shape = 'u8[2560]{0}', space=vmem, size = 0xc00, scoped, tag = 'input window, operand 9, single buffered']
    #allocation11 [shape = 's32[1]{0}', space=sflag, size = 0x4, scoped, tag = 'scoped memory for critic_forward.1']
    %18 = vsyncpa [#allocation3], 0
    %19 = vsyncpa [#allocation5], 0
    %20 = vsyncpa [#allocation8], 0
    %21 = vsyncpa [#allocation11], 0
    // Predicated region
    $region2: #{critic_forward.1} parent=1 // pred_check
      _
    $region3: #{critic_forward.1} parent=1 // pred_check_branch
      %23 = sbr.rel (0) target = $region5
    $region4: #{critic_forward.1} parent=1 // pred_region
      _
    $region5: #{critic_forward.1} parent=1 // pred_fallthru
      _
    // Predicated region
    $region6: #{critic_forward.1} parent=1 // pred_check
      _
    $region7: #{critic_forward.1} parent=1 // pred_check_branch
      %25 = sbr.rel (0) target = $region9
    $region8: #{critic_forward.1} parent=1 // pred_region
      _
    $region9: #{critic_forward.1} parent=1 // pred_fallthru
      _
    // Predicated region
    $region10: #{critic_forward.1} parent=1 // pred_check
      _
    $region11: #{critic_forward.1} parent=1 // pred_check_branch
      %27 = sbr.rel (0) target = $region13
    $region12: #{critic_forward.1} parent=1 // pred_region
      %s29 = ssub.s32 3584, 3584
      %30 = vsyncadd [#allocation3], %s29
      %s31 = sshll.u32 [#allocation2], 4
      %s32 = int_to_ptr.vmem [resolvable:$true] %s31
      %37 = dma.hbm_to_vmem [thread:$0]  %s2, 3584, %s32, [#allocation3], 896, 896, 56
    $region13: #{critic_forward.1} parent=1 // pred_fallthru
      _
    // Predicated region
    $region14: #{critic_forward.1} parent=1 // pred_check
      _
    $region15: #{critic_forward.1} parent=1 // pred_check_branch
      %39 = sbr.rel (0) target = $region17
    $region16: #{critic_forward.1} parent=1 // pred_region
      %s41 = ssub.s32 224, 224
      %42 = vsyncadd [#allocation5], %s41
      %s44 = sshll.u32 [#allocation4], 4
      %s45 = int_to_ptr.vmem [resolvable:$true] %s44
      %47 = dma.hbm_to_vmem [thread:$0]  %s3, 224, %s45, [#allocation5]
    $region17: #{critic_forward.1} parent=1 // pred_fallthru
      _
    // Predicated region
    $region18: #{critic_forward.1} parent=1 // pred_check
      _
    $region19: #{critic_forward.1} parent=1 // pred_check_branch
      %49 = sbr.rel (0) target = $region21
    $region20: #{critic_forward.1} parent=1 // pred_region
      %s51 = ssub.s32 32000, 32000
      %52 = vsyncadd [#allocation5], %s51
      %s53 = sshll.u32 [#allocation6], 4
      %s54 = int_to_ptr.vmem [resolvable:$true] %s53
      %59 = dma.hbm_to_vmem [thread:$0]  %s4, 32000, %s54, [#allocation5], 320, 320, 20
    $region21: #{critic_forward.1} parent=1 // pred_fallthru
      _
    // Predicated region
    $region22: #{critic_forward.1} parent=1 // pred_check
      _
    $region23: #{critic_forward.1} parent=1 // pred_check_branch
      %61 = sbr.rel (0) target = $region25
    $region24: #{critic_forward.1} parent=1 // pred_region
      _
    $region25: #{critic_forward.1} parent=1 // pred_fallthru
      _
    // Predicated region
    $region26: #{critic_forward.1} parent=1 // pred_check
      _
    $region27: #{critic_forward.1} parent=1 // pred_check_branch
      %63 = sbr.rel (0) target = $region29
    $region28: #{critic_forward.1} parent=1 // pred_region
      _
    $region29: #{critic_forward.1} parent=1 // pred_fallthru
      _
    // Predicated region
    $region30: #{critic_forward.1} parent=1 // pred_check
      _
    $region31: #{critic_forward.1} parent=1 // pred_check_branch
      %65 = sbr.rel (0) target = $region33
    $region32: #{critic_forward.1} parent=1 // pred_region
      %s67 = ssub.s32 32000, 32000
      %68 = vsyncadd [#allocation8], %s67
      %s69 = sshll.u32 [#allocation7], 4
      %s70 = int_to_ptr.vmem [resolvable:$true] %s69
      %75 = dma.hbm_to_vmem [thread:$0]  %s7, 32000, %s70, [#allocation8], 320, 320, 20
    $region33: #{critic_forward.1} parent=1 // pred_fallthru
      _
    // Predicated region
    $region34: #{critic_forward.1} parent=1 // pred_check
      _
    $region35: #{critic_forward.1} parent=1 // pred_check_branch
      %77 = sbr.rel (0) target = $region37
    $region36: #{critic_forward.1} parent=1 // pred_region
      %s79 = ssub.s32 640, 640
      %80 = vsyncadd [#allocation8], %s79
      %s81 = sshll.u32 [#allocation9], 4
      %s82 = int_to_ptr.vmem [resolvable:$true] %s81
      %87 = dma.hbm_to_vmem [thread:$0]  %s8, 640, %s82, [#allocation8], 320, 320, 20
    $region37: #{critic_forward.1} parent=1 // pred_fallthru
      _
    // Predicated region
    $region38: #{critic_forward.1} parent=1 // pred_check
      _
    $region39: #{critic_forward.1} parent=1 // pred_check_branch
      %89 = sbr.rel (0) target = $region41
    $region40: #{critic_forward.1} parent=1 // pred_region
      %s91 = ssub.s32 80, 80
      %92 = vsyncadd [#allocation11], %s91
      %s94 = sshll.u32 [#allocation10], 4
      %s95 = int_to_ptr.vmem [resolvable:$true] %s94
      %97 = dma.hbm_to_vmem [thread:$0]  %s9, 80, %s95, [#allocation11]
    $region41: #{critic_forward.1} parent=1 // pred_fallthru
      _
    // Predicated region
    $region42: #{critic_forward.1} parent=1 // pred_check
      _
    $region43: #{critic_forward.1} parent=1 // pred_check_branch
      %99 = sbr.rel (0) target = $region45
    $region44: #{critic_forward.1} parent=1 // pred_region
      _
    $region45: #{critic_forward.1} parent=1 // pred_fallthru
      _
    // Predicated region
    $region46: #{critic_forward.1} parent=1 // pred_check
      _
    $region47: #{critic_forward.1} parent=1 // pred_check_branch
      %101 = sbr.rel (0) target = $region49
    $region48: #{critic_forward.1} parent=1 // pred_region
      _
    $region49: #{critic_forward.1} parent=1 // pred_fallthru
      _
    // Predicated region
    $region50: #{critic_forward.1} parent=1 // pred_check
      _
    $region51: #{critic_forward.1} parent=1 // pred_check_branch
      %103 = sbr.rel (0) target = $region53
    $region52: #{critic_forward.1} parent=1 // pred_region
      _
    $region53: #{critic_forward.1} parent=1 // pred_fallthru
      _
    // Predicated region
    $region54: #{critic_forward.1} parent=1 // pred_check
      _
    $region55: #{critic_forward.1} parent=1 // pred_check_branch
      %105 = sbr.rel (0) target = $region57
    $region56: #{critic_forward.1} parent=1 // pred_region
      %106 = dma.done [#allocation3], 3584
    $region57: #{critic_forward.1} parent=1 // pred_fallthru
      _
    // Predicated region
    $region58: #{critic_forward.1} parent=1 // pred_check
      _
    $region59: #{critic_forward.1} parent=1 // pred_check_branch
      %108 = sbr.rel (0) target = $region61
    $region60: #{critic_forward.1} parent=1 // pred_region
      %109 = dma.done [#allocation5], 224
    $region61: #{critic_forward.1} parent=1 // pred_fallthru
      _
    // Predicated region
    $region62: #{critic_forward.1} parent=1 // pred_check
      _
    $region63: #{critic_forward.1} parent=1 // pred_check_branch
      %111 = sbr.rel (0) target = $region65
    $region64: #{critic_forward.1} parent=1 // pred_region
      %112 = dma.done [#allocation5], 32000
    $region65: #{critic_forward.1} parent=1 // pred_fallthru
      _
    // Predicated region
    $region66: #{critic_forward.1} parent=1 // pred_check
      _
    $region67: #{critic_forward.1} parent=1 // pred_check_branch
      %114 = sbr.rel (0) target = $region69
    $region68: #{critic_forward.1} parent=1 // pred_region
      %115 = dma.done [#allocation8], 32000
    $region69: #{critic_forward.1} parent=1 // pred_fallthru
      _
    // Predicated region
    $region70: #{critic_forward.1} parent=1 // pred_check
      _
    $region71: #{critic_forward.1} parent=1 // pred_check_branch
      %117 = sbr.rel (0) target = $region73
    $region72: #{critic_forward.1} parent=1 // pred_region
      %118 = dma.done [#allocation8], 640
    $region73: #{critic_forward.1} parent=1 // pred_fallthru
      _
    // Predicated region
    $region74: #{critic_forward.1} parent=1 // pred_check
      _
    $region75: #{critic_forward.1} parent=1 // pred_check_branch
      %120 = sbr.rel (0) target = $region77
    $region76: #{critic_forward.1} parent=1 // pred_region
      %121 = dma.done [#allocation11], 80
    $region77: #{critic_forward.1} parent=1 // pred_fallthru
      _
    %v123 = vld [vmem:[%s0] sm:$0xf]
    %v124 = vld [vmem:[%s1] sm:$0xf]
    %v125 = vld [vmem:[#allocation2] sm:$0xff]
    %v126 = vld [vmem:[#allocation2 + $0x8] sm:$0xff]
    %v127 = vld [vmem:[#allocation2 + $0x10] sm:$0xff]
    %v128 = vld [vmem:[#allocation2 + $0x18] sm:$0xff]
    %v129 = vld [vmem:[#allocation2 + $0x20] sm:$0xff]
    %v130 = vld [vmem:[#allocation2 + $0x28] sm:$0xff]
    %v131 = vld [vmem:[#allocation2 + $0x30] sm:$0xff]
    %v132 = vld [vmem:[#allocation2 + $0x38] sm:$0xff]
    %v133 = vld [vmem:[#allocation2 + $0x40] sm:$0xff]
    %v134 = vld [vmem:[#allocation2 + $0x48] sm:$0xff]
    %v135 = vld [vmem:[#allocation2 + $0x50] sm:$0xff]
    %v136 = vld [vmem:[#allocation2 + $0x58] sm:$0xff]
    %v137 = vld [vmem:[#allocation2 + $0x60] sm:$0xff]
    %v138 = vld [vmem:[#allocation2 + $0x68] sm:$0xff]
    %v139 = vld [vmem:[#allocation2 + $0x70] sm:$0xff]
    %v140 = vld [vmem:[#allocation2 + $0x78] sm:$0xff]
    %v141 = vld [vmem:[#allocation2 + $0x80] sm:$0xff]
    %v142 = vld [vmem:[#allocation2 + $0x88] sm:$0xff]
    %v143 = vld [vmem:[#allocation2 + $0x90] sm:$0xff]
    %v144 = vld [vmem:[#allocation2 + $0x98] sm:$0xff]
    %v145 = vld [vmem:[#allocation2 + $0xa0] sm:$0xff]
    %v146 = vld [vmem:[#allocation2 + $0xa8] sm:$0xff]
    %v147 = vld [vmem:[#allocation2 + $0xb0] sm:$0xff]
    %v148 = vld [vmem:[#allocation2 + $0xb8] sm:$0xff]
    %v149 = vld [vmem:[#allocation2 + $0xc0] sm:$0xff]
    %v150 = vld [vmem:[#allocation2 + $0xc8] sm:$0xff]
    %v151 = vld [vmem:[#allocation2 + $0xd0] sm:$0xff]
    %v152 = vld [vmem:[#allocation2 + $0xd8] sm:$0xff]
    %v153 = vld [vmem:[#allocation4] sm:$0xff]
    %v154 = vld [vmem:[#allocation4 + $0x8] sm:$0x3f]
    %v157 = vlaneseq
    %v158 = vshrl.u32 %v157, 7
    %v159 = vsub.s32 0, %v158
    %v160 = vrot.slane %v153, %v159
    %v161 = vlaneseq
    %v162 = vshrl.u32 %v161, 7
    %v163 = vsub.s32 1, %v162
    %v164 = vrot.slane %v153, %v163
    %v165 = vlaneseq
    %v166 = vshrl.u32 %v165, 7
    %v167 = vsub.s32 2, %v166
    %v168 = vrot.slane %v153, %v167
    %v169 = vlaneseq
    %v170 = vshrl.u32 %v169, 7
    %v171 = vsub.s32 3, %v170
    %v172 = vrot.slane %v153, %v171
    %v173 = vlaneseq
    %v174 = vshrl.u32 %v173, 7
    %v175 = vsub.s32 4, %v174
    %v176 = vrot.slane %v153, %v175
    %v177 = vlaneseq
    %v178 = vshrl.u32 %v177, 7
    %v179 = vsub.s32 5, %v178
    %v180 = vrot.slane %v153, %v179
    %v181 = vlaneseq
    %v182 = vshrl.u32 %v181, 7
    %v183 = vsub.s32 6, %v182
    %v184 = vrot.slane %v153, %v183
    %v185 = vlaneseq
    %v186 = vshrl.u32 %v185, 7
    %v187 = vsub.s32 7, %v186
    %v188 = vrot.slane %v153, %v187
    %v189 = vlaneseq
    %v190 = vshrl.u32 %v189, 7
    %v191 = vsub.s32 0, %v190
    %v192 = vrot.slane %v154, %v191
    %v193 = vlaneseq
    %v194 = vshrl.u32 %v193, 7
    %v195 = vsub.s32 1, %v194
    %v196 = vrot.slane %v154, %v195
    %v197 = vlaneseq
    %v198 = vshrl.u32 %v197, 7
    %v199 = vsub.s32 2, %v198
    %v200 = vrot.slane %v154, %v199
    %v201 = vlaneseq
    %v202 = vshrl.u32 %v201, 7
    %v203 = vsub.s32 3, %v202
    %v204 = vrot.slane %v154, %v203
    %v205 = vlaneseq
    %v206 = vshrl.u32 %v205, 7
    %v207 = vsub.s32 4, %v206
    %v208 = vrot.slane %v154, %v207
    %v209 = vlaneseq
    %v210 = vshrl.u32 %v209, 7
    %v211 = vsub.s32 5, %v210
    %v212 = vrot.slane %v154, %v211
    %v255 = vunpack.c.l.b16 %v125
    %v256 = vunpack.c.h.b16 %v125
    %v257 = vunpack.c.l.b16 %v126
    %v258 = vunpack.c.h.b16 %v126
    %v259 = vunpack.c.l.b16 %v127
    %v260 = vunpack.c.h.b16 %v127
    %v261 = vunpack.c.l.b16 %v128
    %v262 = vunpack.c.h.b16 %v128
    %v263 = vunpack.c.l.b16 %v129
    %v264 = vunpack.c.h.b16 %v129
    %v265 = vunpack.c.l.b16 %v130
    %v266 = vunpack.c.h.b16 %v130
    %v267 = vunpack.c.l.b16 %v131
    %v268 = vunpack.c.h.b16 %v131
    %v269 = vunpack.c.l.b16 %v132
    %v270 = vunpack.c.h.b16 %v132
    %v271 = vunpack.c.l.b16 %v133
    %v272 = vunpack.c.h.b16 %v133
    %v273 = vunpack.c.l.b16 %v134
    %v274 = vunpack.c.h.b16 %v134
    %v275 = vunpack.c.l.b16 %v135
    %v276 = vunpack.c.h.b16 %v135
    %v277 = vunpack.c.l.b16 %v136
    %v278 = vunpack.c.h.b16 %v136
    %v279 = vunpack.c.l.b16 %v137
    %v280 = vunpack.c.h.b16 %v137
    %v281 = vunpack.c.l.b16 %v138
    %v282 = vunpack.c.h.b16 %v138
    %v283 = vunpack.c.l.b16 %v139
    %v284 = vunpack.c.h.b16 %v139
    %v285 = vunpack.c.l.b16 %v140
    %v286 = vunpack.c.h.b16 %v140
    %v287 = vunpack.c.l.b16 %v141
    %v288 = vunpack.c.h.b16 %v141
    %v289 = vunpack.c.l.b16 %v142
    %v290 = vunpack.c.h.b16 %v142
    %v291 = vunpack.c.l.b16 %v143
    %v292 = vunpack.c.h.b16 %v143
    %v293 = vunpack.c.l.b16 %v144
    %v294 = vunpack.c.h.b16 %v144
    %v295 = vunpack.c.l.b16 %v145
    %v296 = vunpack.c.h.b16 %v145
    %v297 = vunpack.c.l.b16 %v146
    %v298 = vunpack.c.h.b16 %v146
    %v299 = vunpack.c.l.b16 %v147
    %v300 = vunpack.c.h.b16 %v147
    %v301 = vunpack.c.l.b16 %v148
    %v302 = vunpack.c.h.b16 %v148
    %v303 = vunpack.c.l.b16 %v149
    %v304 = vunpack.c.h.b16 %v149
    %v305 = vunpack.c.l.b16 %v150
    %v306 = vunpack.c.h.b16 %v150
    %v307 = vunpack.c.l.b16 %v151
    %v308 = vunpack.c.h.b16 %v151
    %v309 = vunpack.c.l.b16 %v152
    %v310 = vunpack.c.h.b16 %v152
    %v311 = vpack.c.b16 %v269, %v255
    %v312 = vpack.c.b16 %v270, %v256
    %v313 = vpack.c.b16 %v271, %v257
    %v314 = vpack.c.b16 %v272, %v258
    %v315 = vpack.c.b16 %v273, %v259
    %v316 = vpack.c.b16 %v274, %v260
    %v317 = vpack.c.b16 %v275, %v261
    %v318 = vpack.c.b16 %v276, %v262
    %v319 = vpack.c.b16 %v277, %v263
    %v320 = vpack.c.b16 %v278, %v264
    %v321 = vpack.c.b16 %v279, %v265
    %v322 = vpack.c.b16 %v280, %v266
    %v323 = vpack.c.b16 %v281, %v267
    %v324 = vpack.c.b16 %v282, %v268
    %v325 = vpack.c.b16 %v297, %v283
    %v326 = vpack.c.b16 %v298, %v284
    %v327 = vpack.c.b16 %v299, %v285
    %v328 = vpack.c.b16 %v300, %v286
    %v329 = vpack.c.b16 %v301, %v287
    %v330 = vpack.c.b16 %v302, %v288
    %v331 = vpack.c.b16 %v303, %v289
    %v332 = vpack.c.b16 %v304, %v290
    %v333 = vpack.c.b16 %v305, %v291
    %v334 = vpack.c.b16 %v306, %v292
    %v335 = vpack.c.b16 %v307, %v293
    %v336 = vpack.c.b16 %v308, %v294
    %v337 = vpack.c.b16 %v309, %v295
    %v338 = vpack.c.b16 %v310, %v296
    %vm367 = vcmask 261120
    %v369 = vsel %vm367, %v123, 0
    %371 = vmatprep.subr.bf16.mxu0 %v312
    %372 = vmatpush1.bf16.msra.mxu0 %v311
    %373 = vmatprep.subr.bf16.mxu0 %v326
    %374 = vmatpush1.bf16.msra.mxu0 %v325
    %375 = vmatprep.subr.bf16.mxu0 0
    %376 = vmatpush1.bf16.msra.mxu0 0
    %377 = vmatprep.subr.bf16.mxu0 0
    %378 = vmatpush1.bf16.msra.mxu0 0
    %379 = vmatprep.subr.bf16.mxu0 0
    %380 = vmatpush1.bf16.msra.mxu0 0
    %381 = vmatprep.subr.bf16.mxu0 0
    %382 = vmatpush1.bf16.msra.mxu0 0
    %383 = vmatprep.subr.bf16.mxu0 0
    %384 = vmatpush1.bf16.msra.mxu0 0
    %385 = vmatprep.subr.bf16.mxu0 0
    %386 = vmatpush1.bf16.msra.mxu0 0
    %387 = vmatprep.subr.bf16.mxu0 0
    %388 = vmatpush1.bf16.msra.mxu0 0
    %389 = vmatprep.subr.bf16.mxu0 0
    %390 = vmatpush1.bf16.msra.mxu0 0
    %391 = vmatprep.subr.bf16.mxu0 0
    %392 = vmatpush1.bf16.msra.mxu0 0
    %393 = vmatprep.subr.bf16.mxu0 0
    %394 = vmatpush1.bf16.msra.mxu0 0
    %395 = vmatprep.subr.bf16.mxu0 0
    %396 = vmatpush1.bf16.msra.mxu0 0
    %397 = vmatprep.subr.bf16.mxu0 0
    %398 = vmatpush1.bf16.msra.mxu0 0
    %399 = vmatprep.subr.bf16.mxu0 0
    %400 = vmatpush1.bf16.msra.mxu0 0
    %401 = vmatprep.subr.bf16.mxu0 0
    %402 = vmatpush1.bf16.msra.mxu0 0
    %403 = vmatprep.mubr.bf16.mxu0 0
    %404 = vmatmul.mubr.bf16.gmra.mrb[0].mxu0 %v369
    %v405 = vpop.f32.mrb[0].mxu0
    %v406 = vadd.f32 %v160, %v405
    %v407 = vpop.f32.mrb[0].mxu0
    %v408 = vadd.f32 %v164, %v407
    %v409 = vpop.f32.mrb[0].mxu0
    %v410 = vpop.f32.mrb[0].mxu0
    %411 = vdwg.mxu0
    %412 = vmatprep.subr.bf16.mxu0 %v314
    %413 = vmatpush1.bf16.msra.mxu0 %v313
    %414 = vmatprep.subr.bf16.mxu0 %v328
    %415 = vmatpush1.bf16.msra.mxu0 %v327
    %416 = vmatprep.subr.bf16.mxu0 0
    %417 = vmatpush1.bf16.msra.mxu0 0
    %418 = vmatprep.subr.bf16.mxu0 0
    %419 = vmatpush1.bf16.msra.mxu0 0
    %420 = vmatprep.subr.bf16.mxu0 0
    %421 = vmatpush1.bf16.msra.mxu0 0
    %422 = vmatprep.subr.bf16.mxu0 0
    %423 = vmatpush1.bf16.msra.mxu0 0
    %424 = vmatprep.subr.bf16.mxu0 0
    %425 = vmatpush1.bf16.msra.mxu0 0
    %426 = vmatprep.subr.bf16.mxu0 0
    %427 = vmatpush1.bf16.msra.mxu0 0
    %428 = vmatprep.subr.bf16.mxu0 0
    %429 = vmatpush1.bf16.msra.mxu0 0
    %430 = vmatprep.subr.bf16.mxu0 0
    %431 = vmatpush1.bf16.msra.mxu0 0
    %432 = vmatprep.subr.bf16.mxu0 0
    %433 = vmatpush1.bf16.msra.mxu0 0
    %434 = vmatprep.subr.bf16.mxu0 0
    %435 = vmatpush1.bf16.msra.mxu0 0
    %436 = vmatprep.subr.bf16.mxu0 0
    %437 = vmatpush1.bf16.msra.mxu0 0
    %438 = vmatprep.subr.bf16.mxu0 0
    %439 = vmatpush1.bf16.msra.mxu0 0
    %440 = vmatprep.subr.bf16.mxu0 0
    %441 = vmatpush1.bf16.msra.mxu0 0
    %442 = vmatprep.subr.bf16.mxu0 0
    %443 = vmatpush1.bf16.msra.mxu0 0
    %444 = vmatprep.mubr.bf16.mxu0 0
    %445 = vmatmul.mubr.bf16.gmra.mrb[0].mxu0 %v369
    %v446 = vpop.f32.mrb[0].mxu0
    %v447 = vadd.f32 %v168, %v446
    %v448 = vpop.f32.mrb[0].mxu0
    %v449 = vadd.f32 %v172, %v448
    %v450 = vpop.f32.mrb[0].mxu0
    %v451 = vpop.f32.mrb[0].mxu0
    %452 = vdwg.mxu0
    %453 = vmatprep.subr.bf16.mxu0 %v316
    %454 = vmatpush1.bf16.msra.mxu0 %v315
    %455 = vmatprep.subr.bf16.mxu0 %v330
    %456 = vmatpush1.bf16.msra.mxu0 %v329
    %457 = vmatprep.subr.bf16.mxu0 0
    %458 = vmatpush1.bf16.msra.mxu0 0
    %459 = vmatprep.subr.bf16.mxu0 0
    %460 = vmatpush1.bf16.msra.mxu0 0
    %461 = vmatprep.subr.bf16.mxu0 0
    %462 = vmatpush1.bf16.msra.mxu0 0
    %463 = vmatprep.subr.bf16.mxu0 0
    %464 = vmatpush1.bf16.msra.mxu0 0
    %465 = vmatprep.subr.bf16.mxu0 0
    %466 = vmatpush1.bf16.msra.mxu0 0
    %467 = vmatprep.subr.bf16.mxu0 0
    %468 = vmatpush1.bf16.msra.mxu0 0
    %469 = vmatprep.subr.bf16.mxu0 0
    %470 = vmatpush1.bf16.msra.mxu0 0
    %471 = vmatprep.subr.bf16.mxu0 0
    %472 = vmatpush1.bf16.msra.mxu0 0
    %473 = vmatprep.subr.bf16.mxu0 0
    %474 = vmatpush1.bf16.msra.mxu0 0
    %475 = vmatprep.subr.bf16.mxu0 0
    %476 = vmatpush1.bf16.msra.mxu0 0
    %477 = vmatprep.subr.bf16.mxu0 0
    %478 = vmatpush1.bf16.msra.mxu0 0
    %479 = vmatprep.subr.bf16.mxu0 0
    %480 = vmatpush1.bf16.msra.mxu0 0
    %481 = vmatprep.subr.bf16.mxu0 0
    %482 = vmatpush1.bf16.msra.mxu0 0
    %483 = vmatprep.subr.bf16.mxu0 0
    %484 = vmatpush1.bf16.msra.mxu0 0
    %485 = vmatprep.mubr.bf16.mxu0 0
    %486 = vmatmul.mubr.bf16.gmra.mrb[0].mxu0 %v369
    %v487 = vpop.f32.mrb[0].mxu0
    %v488 = vadd.f32 %v176, %v487
    %v489 = vpop.f32.mrb[0].mxu0
    %v490 = vadd.f32 %v180, %v489
    %v491 = vpop.f32.mrb[0].mxu0
    %v492 = vpop.f32.mrb[0].mxu0
    %493 = vdwg.mxu0
    %494 = vmatprep.subr.bf16.mxu0 %v318
    %495 = vmatpush1.bf16.msra.mxu0 %v317
    %496 = vmatprep.subr.bf16.mxu0 %v332
    %497 = vmatpush1.bf16.msra.mxu0 %v331
    %498 = vmatprep.subr.bf16.mxu0 0
    %499 = vmatpush1.bf16.msra.mxu0 0
    %500 = vmatprep.subr.bf16.mxu0 0
    %501 = vmatpush1.bf16.msra.mxu0 0
    %502 = vmatprep.subr.bf16.mxu0 0
    %503 = vmatpush1.bf16.msra.mxu0 0
    %504 = vmatprep.subr.bf16.mxu0 0
    %505 = vmatpush1.bf16.msra.mxu0 0
    %506 = vmatprep.subr.bf16.mxu0 0
    %507 = vmatpush1.bf16.msra.mxu0 0
    %508 = vmatprep.subr.bf16.mxu0 0
    %509 = vmatpush1.bf16.msra.mxu0 0
    %510 = vmatprep.subr.bf16.mxu0 0
    %511 = vmatpush1.bf16.msra.mxu0 0
    %512 = vmatprep.subr.bf16.mxu0 0
    %513 = vmatpush1.bf16.msra.mxu0 0
    %514 = vmatprep.subr.bf16.mxu0 0
    %515 = vmatpush1.bf16.msra.mxu0 0
    %516 = vmatprep.subr.bf16.mxu0 0
    %517 = vmatpush1.bf16.msra.mxu0 0
    %518 = vmatprep.subr.bf16.mxu0 0
    %519 = vmatpush1.bf16.msra.mxu0 0
    %520 = vmatprep.subr.bf16.mxu0 0
    %521 = vmatpush1.bf16.msra.mxu0 0
    %522 = vmatprep.subr.bf16.mxu0 0
    %523 = vmatpush1.bf16.msra.mxu0 0
    %524 = vmatprep.subr.bf16.mxu0 0
    %525 = vmatpush1.bf16.msra.mxu0 0
    %526 = vmatprep.mubr.bf16.mxu0 0
    %527 = vmatmul.mubr.bf16.gmra.mrb[0].mxu0 %v369
    %v528 = vpop.f32.mrb[0].mxu0
    %v529 = vadd.f32 %v184, %v528
    %v530 = vpop.f32.mrb[0].mxu0
    %v531 = vadd.f32 %v188, %v530
    %v532 = vpop.f32.mrb[0].mxu0
    %v533 = vpop.f32.mrb[0].mxu0
    %534 = vdwg.mxu0
    %535 = vmatprep.subr.bf16.mxu0 %v320
    %536 = vmatpush1.bf16.msra.mxu0 %v319
    %537 = vmatprep.subr.bf16.mxu0 %v334
    %538 = vmatpush1.bf16.msra.mxu0 %v333
    %539 = vmatprep.subr.bf16.mxu0 0
    %540 = vmatpush1.bf16.msra.mxu0 0
    %541 = vmatprep.subr.bf16.mxu0 0
    %542 = vmatpush1.bf16.msra.mxu0 0
    %543 = vmatprep.subr.bf16.mxu0 0
    %544 = vmatpush1.bf16.msra.mxu0 0
    %545 = vmatprep.subr.bf16.mxu0 0
    %546 = vmatpush1.bf16.msra.mxu0 0
    %547 = vmatprep.subr.bf16.mxu0 0
    %548 = vmatpush1.bf16.msra.mxu0 0
    %549 = vmatprep.subr.bf16.mxu0 0
    %550 = vmatpush1.bf16.msra.mxu0 0
    %551 = vmatprep.subr.bf16.mxu0 0
    %552 = vmatpush1.bf16.msra.mxu0 0
    %553 = vmatprep.subr.bf16.mxu0 0
    %554 = vmatpush1.bf16.msra.mxu0 0
    %555 = vmatprep.subr.bf16.mxu0 0
    %556 = vmatpush1.bf16.msra.mxu0 0
    %557 = vmatprep.subr.bf16.mxu0 0
    %558 = vmatpush1.bf16.msra.mxu0 0
    %559 = vmatprep.subr.bf16.mxu0 0
    %560 = vmatpush1.bf16.msra.mxu0 0
    %561 = vmatprep.subr.bf16.mxu0 0
    %562 = vmatpush1.bf16.msra.mxu0 0
    %563 = vmatprep.subr.bf16.mxu0 0
    %564 = vmatpush1.bf16.msra.mxu0 0
    %565 = vmatprep.subr.bf16.mxu0 0
    %566 = vmatpush1.bf16.msra.mxu0 0
    %567 = vmatprep.mubr.bf16.mxu0 0
    %568 = vmatmul.mubr.bf16.gmra.mrb[0].mxu0 %v369
    %v569 = vpop.f32.mrb[0].mxu0
    %v570 = vadd.f32 %v192, %v569
    %v571 = vpop.f32.mrb[0].mxu0
    %v572 = vadd.f32 %v196, %v571
    %v573 = vpop.f32.mrb[0].mxu0
    %v574 = vpop.f32.mrb[0].mxu0
    %575 = vdwg.mxu0
    %576 = vmatprep.subr.bf16.mxu0 %v322
    %577 = vmatpush1.bf16.msra.mxu0 %v321
    %578 = vmatprep.subr.bf16.mxu0 %v336
    %579 = vmatpush1.bf16.msra.mxu0 %v335
    %580 = vmatprep.subr.bf16.mxu0 0
    %581 = vmatpush1.bf16.msra.mxu0 0
    %582 = vmatprep.subr.bf16.mxu0 0
    %583 = vmatpush1.bf16.msra.mxu0 0
    %584 = vmatprep.subr.bf16.mxu0 0
    %585 = vmatpush1.bf16.msra.mxu0 0
    %586 = vmatprep.subr.bf16.mxu0 0
    %587 = vmatpush1.bf16.msra.mxu0 0
    %588 = vmatprep.subr.bf16.mxu0 0
    %589 = vmatpush1.bf16.msra.mxu0 0
    %590 = vmatprep.subr.bf16.mxu0 0
    %591 = vmatpush1.bf16.msra.mxu0 0
    %592 = vmatprep.subr.bf16.mxu0 0
    %593 = vmatpush1.bf16.msra.mxu0 0
    %594 = vmatprep.subr.bf16.mxu0 0
    %595 = vmatpush1.bf16.msra.mxu0 0
    %596 = vmatprep.subr.bf16.mxu0 0
    %597 = vmatpush1.bf16.msra.mxu0 0
    %598 = vmatprep.subr.bf16.mxu0 0
    %599 = vmatpush1.bf16.msra.mxu0 0
    %600 = vmatprep.subr.bf16.mxu0 0
    %601 = vmatpush1.bf16.msra.mxu0 0
    %602 = vmatprep.subr.bf16.mxu0 0
    %603 = vmatpush1.bf16.msra.mxu0 0
    %604 = vmatprep.subr.bf16.mxu0 0
    %605 = vmatpush1.bf16.msra.mxu0 0
    %606 = vmatprep.subr.bf16.mxu0 0
    %607 = vmatpush1.bf16.msra.mxu0 0
    %608 = vmatprep.mubr.bf16.mxu0 0
    %609 = vmatmul.mubr.bf16.gmra.mrb[0].mxu0 %v369
    %v610 = vpop.f32.mrb[0].mxu0
    %v611 = vadd.f32 %v200, %v610
    %v612 = vpop.f32.mrb[0].mxu0
    %v613 = vadd.f32 %v204, %v612
    %v614 = vpop.f32.mrb[0].mxu0
    %v615 = vpop.f32.mrb[0].mxu0
    %616 = vdwg.mxu0
    %617 = vmatprep.subr.bf16.mxu0 %v324
    %618 = vmatpush1.bf16.msra.mxu0 %v323
    %619 = vmatprep.subr.bf16.mxu0 %v338
    %620 = vmatpush1.bf16.msra.mxu0 %v337
    %621 = vmatprep.subr.bf16.mxu0 0
    %622 = vmatpush1.bf16.msra.mxu0 0
    %623 = vmatprep.subr.bf16.mxu0 0
    %624 = vmatpush1.bf16.msra.mxu0 0
    %625 = vmatprep.subr.bf16.mxu0 0
    %626 = vmatpush1.bf16.msra.mxu0 0
    %627 = vmatprep.subr.bf16.mxu0 0
    %628 = vmatpush1.bf16.msra.mxu0 0
    %629 = vmatprep.subr.bf16.mxu0 0
    %630 = vmatpush1.bf16.msra.mxu0 0
    %631 = vmatprep.subr.bf16.mxu0 0
    %632 = vmatpush1.bf16.msra.mxu0 0
    %633 = vmatprep.subr.bf16.mxu0 0
    %634 = vmatpush1.bf16.msra.mxu0 0
    %635 = vmatprep.subr.bf16.mxu0 0
    %636 = vmatpush1.bf16.msra.mxu0 0
    %637 = vmatprep.subr.bf16.mxu0 0
    %638 = vmatpush1.bf16.msra.mxu0 0
    %639 = vmatprep.subr.bf16.mxu0 0
    %640 = vmatpush1.bf16.msra.mxu0 0
    %641 = vmatprep.subr.bf16.mxu0 0
    %642 = vmatpush1.bf16.msra.mxu0 0
    %643 = vmatprep.subr.bf16.mxu0 0
    %644 = vmatpush1.bf16.msra.mxu0 0
    %645 = vmatprep.subr.bf16.mxu0 0
    %646 = vmatpush1.bf16.msra.mxu0 0
    %647 = vmatprep.subr.bf16.mxu0 0
    %648 = vmatpush1.bf16.msra.mxu0 0
    %649 = vmatprep.mubr.bf16.mxu0 0
    %650 = vmatmul.mubr.bf16.gmra.mrb[0].mxu0 %v369
    %v651 = vpop.f32.mrb[0].mxu0
    %v652 = vadd.f32 %v208, %v651
    %v653 = vpop.f32.mrb[0].mxu0
    %v654 = vadd.f32 %v212, %v653
    %v655 = vpop.f32.mrb[0].mxu0
    %v656 = vpop.f32.mrb[0].mxu0
    %657 = vdwg.mxu0
    %v658 = vmax.f32 %v406, 0.0
    %v659 = vmax.f32 %v408, 0.0
    %v660 = vmax.f32 %v447, 0.0
    %v661 = vmax.f32 %v449, 0.0
    %v662 = vmax.f32 %v488, 0.0
    %v663 = vmax.f32 %v490, 0.0
    %v664 = vmax.f32 %v529, 0.0
    %v665 = vmax.f32 %v531, 0.0
    %v666 = vmax.f32 %v570, 0.0
    %v667 = vmax.f32 %v572, 0.0
    %v668 = vmax.f32 %v611, 0.0
    %v669 = vmax.f32 %v613, 0.0
    %v670 = vmax.f32 %v652, 0.0
    %v671 = vmax.f32 %v654, 0.0
    %v672 = vpack.c.bf16 %v658, %v658
    %v673 = vpack.c.bf16 %v659, %v659
    %v674 = vpack.c.bf16 %v660, %v660
    %v675 = vpack.c.bf16 %v661, %v661
    %v676 = vpack.c.bf16 %v662, %v662
    %v677 = vpack.c.bf16 %v663, %v663
    %v678 = vpack.c.bf16 %v664, %v664
    %v679 = vld [vmem:[#allocation6] sm:$0xff]
    %v680 = vld [vmem:[#allocation6 + $0x8] sm:$0xff]
    %v681 = vld [vmem:[#allocation6 + $0x10] sm:$0xf]
    %v682 = vld [vmem:[#allocation6 + $0x14] sm:$0xff]
    %v683 = vld [vmem:[#allocation6 + $0x1c] sm:$0xff]
    %v684 = vld [vmem:[#allocation6 + $0x24] sm:$0xf]
    %v685 = vld [vmem:[#allocation6 + $0x28] sm:$0xff]
    %v686 = vld [vmem:[#allocation6 + $0x30] sm:$0xff]
    %v687 = vld [vmem:[#allocation6 + $0x38] sm:$0xf]
    %v688 = vld [vmem:[#allocation6 + $0x3c] sm:$0xff]
    %v689 = vld [vmem:[#allocation6 + $0x44] sm:$0xff]
    %v690 = vld [vmem:[#allocation6 + $0x4c] sm:$0xf]
    %v691 = vld [vmem:[#allocation6 + $0x50] sm:$0xff]
    %v692 = vld [vmem:[#allocation6 + $0x58] sm:$0xff]
    %v693 = vld [vmem:[#allocation6 + $0x60] sm:$0xf]
    %v694 = vld [vmem:[#allocation6 + $0x64] sm:$0xff]
    %v695 = vld [vmem:[#allocation6 + $0x6c] sm:$0xff]
    %v696 = vld [vmem:[#allocation6 + $0x74] sm:$0xf]
    %v697 = vld [vmem:[#allocation6 + $0x78] sm:$0xff]
    %v698 = vld [vmem:[#allocation6 + $0x80] sm:$0xff]
    %v699 = vld [vmem:[#allocation6 + $0x88] sm:$0xf]
    %v700 = vld [vmem:[#allocation6 + $0x8c] sm:$0xff]
    %v701 = vld [vmem:[#allocation6 + $0x94] sm:$0xff]
    %v702 = vld [vmem:[#allocation6 + $0x9c] sm:$0xf]
    %v703 = vld [vmem:[#allocation6 + $0xa0] sm:$0xff]
    %v704 = vld [vmem:[#allocation6 + $0xa8] sm:$0xff]
    %v705 = vld [vmem:[#allocation6 + $0xb0] sm:$0xf]
    %v706 = vld [vmem:[#allocation6 + $0xb4] sm:$0xff]
    %v707 = vld [vmem:[#allocation6 + $0xbc] sm:$0xff]
    %v708 = vld [vmem:[#allocation6 + $0xc4] sm:$0xf]
    %v709 = vld [vmem:[#allocation6 + $0xc8] sm:$0xff]
    %v710 = vld [vmem:[#allocation6 + $0xd0] sm:$0xff]
    %v711 = vld [vmem:[#allocation6 + $0xd8] sm:$0xf]
    %v712 = vld [vmem:[#allocation6 + $0xdc] sm:$0xff]
    %v713 = vld [vmem:[#allocation6 + $0xe4] sm:$0xff]
    %v714 = vld [vmem:[#allocation6 + $0xec] sm:$0xf]
    %v715 = vld [vmem:[#allocation6 + $0xf0] sm:$0xff]
    %v716 = vld [vmem:[#allocation6 + $0xf8] sm:$0xff]
    %v717 = vld [vmem:[#allocation6 + $0x100] sm:$0xf]
    %v718 = vld [vmem:[#allocation6 + $0x104] sm:$0xff]
    %v719 = vld [vmem:[#allocation6 + $0x10c] sm:$0xff]
    %v720 = vld [vmem:[#allocation6 + $0x114] sm:$0xf]
    %v721 = vld [vmem:[#allocation6 + $0x118] sm:$0xff]
    %v722 = vld [vmem:[#allocation6 + $0x120] sm:$0xff]
    %v723 = vld [vmem:[#allocation6 + $0x128] sm:$0xf]
    %v724 = vld [vmem:[#allocation6 + $0x12c] sm:$0xff]
    %v725 = vld [vmem:[#allocation6 + $0x134] sm:$0xff]
    %v726 = vld [vmem:[#allocation6 + $0x13c] sm:$0xf]
    %v727 = vld [vmem:[#allocation6 + $0x140] sm:$0xff]
    %v728 = vld [vmem:[#allocation6 + $0x148] sm:$0xff]
    %v729 = vld [vmem:[#allocation6 + $0x150] sm:$0xf]
    %v730 = vld [vmem:[#allocation6 + $0x154] sm:$0xff]
    %v731 = vld [vmem:[#allocation6 + $0x15c] sm:$0xff]
    %v732 = vld [vmem:[#allocation6 + $0x164] sm:$0xf]
    %v733 = vld [vmem:[#allocation6 + $0x168] sm:$0xff]
    %v734 = vld [vmem:[#allocation6 + $0x170] sm:$0xff]
    %v735 = vld [vmem:[#allocation6 + $0x178] sm:$0xf]
    %v736 = vld [vmem:[#allocation6 + $0x17c] sm:$0xff]
    %v737 = vld [vmem:[#allocation6 + $0x184] sm:$0xff]
    %v738 = vld [vmem:[#allocation6 + $0x18c] sm:$0xf]
    %v739 = vld [vmem:[#allocation6 + $0x190] sm:$0xff]
    %v740 = vld [vmem:[#allocation6 + $0x198] sm:$0xff]
    %v741 = vld [vmem:[#allocation6 + $0x1a0] sm:$0xf]
    %v742 = vld [vmem:[#allocation6 + $0x1a4] sm:$0xff]
    %v743 = vld [vmem:[#allocation6 + $0x1ac] sm:$0xff]
    %v744 = vld [vmem:[#allocation6 + $0x1b4] sm:$0xf]
    %v745 = vld [vmem:[#allocation6 + $0x1b8] sm:$0xff]
    %v746 = vld [vmem:[#allocation6 + $0x1c0] sm:$0xff]
    %v747 = vld [vmem:[#allocation6 + $0x1c8] sm:$0xf]
    %v748 = vld [vmem:[#allocation6 + $0x1cc] sm:$0xff]
    %v749 = vld [vmem:[#allocation6 + $0x1d4] sm:$0xff]
    %v750 = vld [vmem:[#allocation6 + $0x1dc] sm:$0xf]
    %v751 = vld [vmem:[#allocation6 + $0x1e0] sm:$0xff]
    %v752 = vld [vmem:[#allocation6 + $0x1e8] sm:$0xff]
    %v753 = vld [vmem:[#allocation6 + $0x1f0] sm:$0xf]
    %v754 = vld [vmem:[#allocation6 + $0x1f4] sm:$0xff]
    %v755 = vld [vmem:[#allocation6 + $0x1fc] sm:$0xff]
    %v756 = vld [vmem:[#allocation6 + $0x204] sm:$0xf]
    %v757 = vld [vmem:[#allocation6 + $0x208] sm:$0xff]
    %v758 = vld [vmem:[#allocation6 + $0x210] sm:$0xff]
    %v759 = vld [vmem:[#allocation6 + $0x218] sm:$0xf]
    %v760 = vld [vmem:[#allocation6 + $0x21c] sm:$0xff]
    %v761 = vld [vmem:[#allocation6 + $0x224] sm:$0xff]
    %v762 = vld [vmem:[#allocation6 + $0x22c] sm:$0xf]
    %v763 = vld [vmem:[#allocation6 + $0x230] sm:$0xff]
    %v764 = vld [vmem:[#allocation6 + $0x238] sm:$0xff]
    %v765 = vld [vmem:[#allocation6 + $0x240] sm:$0xf]
    %v766 = vld [vmem:[#allocation6 + $0x244] sm:$0xff]
    %v767 = vld [vmem:[#allocation6 + $0x24c] sm:$0xff]
    %v768 = vld [vmem:[#allocation6 + $0x254] sm:$0xf]
    %v769 = vld [vmem:[#allocation6 + $0x258] sm:$0xff]
    %v770 = vld [vmem:[#allocation6 + $0x260] sm:$0xff]
    %v771 = vld [vmem:[#allocation6 + $0x268] sm:$0xf]
    %v772 = vld [vmem:[#allocation6 + $0x26c] sm:$0xff]
    %v773 = vld [vmem:[#allocation6 + $0x274] sm:$0xff]
    %v774 = vld [vmem:[#allocation6 + $0x27c] sm:$0xf]
    %v775 = vld [vmem:[#allocation6 + $0x280] sm:$0xff]
    %v776 = vld [vmem:[#allocation6 + $0x288] sm:$0xff]
    %v777 = vld [vmem:[#allocation6 + $0x290] sm:$0xf]
    %v778 = vld [vmem:[#allocation6 + $0x294] sm:$0xff]
    %v779 = vld [vmem:[#allocation6 + $0x29c] sm:$0xff]
    %v780 = vld [vmem:[#allocation6 + $0x2a4] sm:$0xf]
    %v781 = vld [vmem:[#allocation6 + $0x2a8] sm:$0xff]
    %v782 = vld [vmem:[#allocation6 + $0x2b0] sm:$0xff]
    %v783 = vld [vmem:[#allocation6 + $0x2b8] sm:$0xf]
    %v784 = vld [vmem:[#allocation6 + $0x2bc] sm:$0xff]
    %v785 = vld [vmem:[#allocation6 + $0x2c4] sm:$0xff]
    %v786 = vld [vmem:[#allocation6 + $0x2cc] sm:$0xf]
    %v787 = vld [vmem:[#allocation6 + $0x2d0] sm:$0xff]
    %v788 = vld [vmem:[#allocation6 + $0x2d8] sm:$0xff]
    %v789 = vld [vmem:[#allocation6 + $0x2e0] sm:$0xf]
    %v790 = vld [vmem:[#allocation6 + $0x2e4] sm:$0xff]
    %v791 = vld [vmem:[#allocation6 + $0x2ec] sm:$0xff]
    %v792 = vld [vmem:[#allocation6 + $0x2f4] sm:$0xf]
    %v793 = vld [vmem:[#allocation6 + $0x2f8] sm:$0xff]
    %v794 = vld [vmem:[#allocation6 + $0x300] sm:$0xff]
    %v795 = vld [vmem:[#allocation6 + $0x308] sm:$0xf]
    %v796 = vld [vmem:[#allocation6 + $0x30c] sm:$0xff]
    %v797 = vld [vmem:[#allocation6 + $0x314] sm:$0xff]
    %v798 = vld [vmem:[#allocation6 + $0x31c] sm:$0xf]
    %v799 = vld [vmem:[#allocation6 + $0x320] sm:$0xff]
    %v800 = vld [vmem:[#allocation6 + $0x328] sm:$0xff]
    %v801 = vld [vmem:[#allocation6 + $0x330] sm:$0xf]
    %v802 = vld [vmem:[#allocation6 + $0x334] sm:$0xff]
    %v803 = vld [vmem:[#allocation6 + $0x33c] sm:$0xff]
    %v804 = vld [vmem:[#allocation6 + $0x344] sm:$0xf]
    %v805 = vld [vmem:[#allocation6 + $0x348] sm:$0xff]
    %v806 = vld [vmem:[#allocation6 + $0x350] sm:$0xff]
    %v807 = vld [vmem:[#allocation6 + $0x358] sm:$0xf]
    %v808 = vld [vmem:[#allocation6 + $0x35c] sm:$0xff]
    %v809 = vld [vmem:[#allocation6 + $0x364] sm:$0xff]
    %v810 = vld [vmem:[#allocation6 + $0x36c] sm:$0xf]
    %v811 = vld [vmem:[#allocation6 + $0x370] sm:$0xff]
    %v812 = vld [vmem:[#allocation6 + $0x378] sm:$0xff]
    %v813 = vld [vmem:[#allocation6 + $0x380] sm:$0xf]
    %v814 = vld [vmem:[#allocation6 + $0x384] sm:$0xff]
    %v815 = vld [vmem:[#allocation6 + $0x38c] sm:$0xff]
    %v816 = vld [vmem:[#allocation6 + $0x394] sm:$0xf]
    %v817 = vld [vmem:[#allocation6 + $0x398] sm:$0xff]
    %v818 = vld [vmem:[#allocation6 + $0x3a0] sm:$0xff]
    %v819 = vld [vmem:[#allocation6 + $0x3a8] sm:$0xf]
    %v820 = vld [vmem:[#allocation6 + $0x3ac] sm:$0xff]
    %v821 = vld [vmem:[#allocation6 + $0x3b4] sm:$0xff]
    %v822 = vld [vmem:[#allocation6 + $0x3bc] sm:$0xf]
    %v823 = vld [vmem:[#allocation6 + $0x3c0] sm:$0xff]
    %v824 = vld [vmem:[#allocation6 + $0x3c8] sm:$0xff]
    %v825 = vld [vmem:[#allocation6 + $0x3d0] sm:$0xf]
    %v826 = vld [vmem:[#allocation6 + $0x3d4] sm:$0xff]
    %v827 = vld [vmem:[#allocation6 + $0x3dc] sm:$0xff]
    %v828 = vld [vmem:[#allocation6 + $0x3e4] sm:$0xf]
    %v829 = vld [vmem:[#allocation6 + $0x3e8] sm:$0xff]
    %v830 = vld [vmem:[#allocation6 + $0x3f0] sm:$0xff]
    %v831 = vld [vmem:[#allocation6 + $0x3f8] sm:$0xf]
    %v832 = vld [vmem:[#allocation6 + $0x3fc] sm:$0xff]
    %v833 = vld [vmem:[#allocation6 + $0x404] sm:$0xff]
    %v834 = vld [vmem:[#allocation6 + $0x40c] sm:$0xf]
    %v835 = vld [vmem:[#allocation6 + $0x410] sm:$0xff]
    %v836 = vld [vmem:[#allocation6 + $0x418] sm:$0xff]
    %v837 = vld [vmem:[#allocation6 + $0x420] sm:$0xf]
    %v838 = vld [vmem:[#allocation6 + $0x424] sm:$0xff]
    %v839 = vld [vmem:[#allocation6 + $0x42c] sm:$0xff]
    %v840 = vld [vmem:[#allocation6 + $0x434] sm:$0xf]
    %v841 = vld [vmem:[#allocation6 + $0x438] sm:$0xff]
    %v842 = vld [vmem:[#allocation6 + $0x440] sm:$0xff]
    %v843 = vld [vmem:[#allocation6 + $0x448] sm:$0xf]
    %v844 = vld [vmem:[#allocation6 + $0x44c] sm:$0xff]
    %v845 = vld [vmem:[#allocation6 + $0x454] sm:$0xff]
    %v846 = vld [vmem:[#allocation6 + $0x45c] sm:$0xf]
    %v847 = vld [vmem:[#allocation6 + $0x460] sm:$0xff]
    %v848 = vld [vmem:[#allocation6 + $0x468] sm:$0xff]
    %v849 = vld [vmem:[#allocation6 + $0x470] sm:$0xf]
    %v850 = vld [vmem:[#allocation6 + $0x474] sm:$0xff]
    %v851 = vld [vmem:[#allocation6 + $0x47c] sm:$0xff]
    %v852 = vld [vmem:[#allocation6 + $0x484] sm:$0xf]
    %v853 = vld [vmem:[#allocation6 + $0x488] sm:$0xff]
    %v854 = vld [vmem:[#allocation6 + $0x490] sm:$0xff]
    %v855 = vld [vmem:[#allocation6 + $0x498] sm:$0xf]
    %v856 = vld [vmem:[#allocation6 + $0x49c] sm:$0xff]
    %v857 = vld [vmem:[#allocation6 + $0x4a4] sm:$0xff]
    %v858 = vld [vmem:[#allocation6 + $0x4ac] sm:$0xf]
    %v859 = vld [vmem:[#allocation6 + $0x4b0] sm:$0xff]
    %v860 = vld [vmem:[#allocation6 + $0x4b8] sm:$0xff]
    %v861 = vld [vmem:[#allocation6 + $0x4c0] sm:$0xf]
    %v862 = vld [vmem:[#allocation6 + $0x4c4] sm:$0xff]
    %v863 = vld [vmem:[#allocation6 + $0x4cc] sm:$0xff]
    %v864 = vld [vmem:[#allocation6 + $0x4d4] sm:$0xf]
    %v865 = vld [vmem:[#allocation6 + $0x4d8] sm:$0xff]
    %v866 = vld [vmem:[#allocation6 + $0x4e0] sm:$0xff]
    %v867 = vld [vmem:[#allocation6 + $0x4e8] sm:$0xf]
    %v868 = vld [vmem:[#allocation6 + $0x4ec] sm:$0xff]
    %v869 = vld [vmem:[#allocation6 + $0x4f4] sm:$0xff]
    %v870 = vld [vmem:[#allocation6 + $0x4fc] sm:$0xf]
    %v871 = vld [vmem:[#allocation6 + $0x500] sm:$0xff]
    %v872 = vld [vmem:[#allocation6 + $0x508] sm:$0xff]
    %v873 = vld [vmem:[#allocation6 + $0x510] sm:$0xf]
    %v874 = vld [vmem:[#allocation6 + $0x514] sm:$0xff]
    %v875 = vld [vmem:[#allocation6 + $0x51c] sm:$0xff]
    %v876 = vld [vmem:[#allocation6 + $0x524] sm:$0xf]
    %v877 = vld [vmem:[#allocation6 + $0x528] sm:$0xff]
    %v878 = vld [vmem:[#allocation6 + $0x530] sm:$0xff]
    %v879 = vld [vmem:[#allocation6 + $0x538] sm:$0xf]
    %v880 = vld [vmem:[#allocation6 + $0x53c] sm:$0xff]
    %v881 = vld [vmem:[#allocation6 + $0x544] sm:$0xff]
    %v882 = vld [vmem:[#allocation6 + $0x54c] sm:$0xf]
    %v883 = vld [vmem:[#allocation6 + $0x550] sm:$0xff]
    %v884 = vld [vmem:[#allocation6 + $0x558] sm:$0xff]
    %v885 = vld [vmem:[#allocation6 + $0x560] sm:$0xf]
    %v886 = vld [vmem:[#allocation6 + $0x564] sm:$0xff]
    %v887 = vld [vmem:[#allocation6 + $0x56c] sm:$0xff]
    %v888 = vld [vmem:[#allocation6 + $0x574] sm:$0xf]
    %v889 = vld [vmem:[#allocation6 + $0x578] sm:$0xff]
    %v890 = vld [vmem:[#allocation6 + $0x580] sm:$0xff]
    %v891 = vld [vmem:[#allocation6 + $0x588] sm:$0xf]
    %v892 = vld [vmem:[#allocation6 + $0x58c] sm:$0xff]
    %v893 = vld [vmem:[#allocation6 + $0x594] sm:$0xff]
    %v894 = vld [vmem:[#allocation6 + $0x59c] sm:$0xf]
    %v895 = vld [vmem:[#allocation6 + $0x5a0] sm:$0xff]
    %v896 = vld [vmem:[#allocation6 + $0x5a8] sm:$0xff]
    %v897 = vld [vmem:[#allocation6 + $0x5b0] sm:$0xf]
    %v898 = vld [vmem:[#allocation6 + $0x5b4] sm:$0xff]
    %v899 = vld [vmem:[#allocation6 + $0x5bc] sm:$0xff]
    %v900 = vld [vmem:[#allocation6 + $0x5c4] sm:$0xf]
    %v901 = vld [vmem:[#allocation6 + $0x5c8] sm:$0xff]
    %v902 = vld [vmem:[#allocation6 + $0x5d0] sm:$0xff]
    %v903 = vld [vmem:[#allocation6 + $0x5d8] sm:$0xf]
    %v904 = vld [vmem:[#allocation6 + $0x5dc] sm:$0xff]
    %v905 = vld [vmem:[#allocation6 + $0x5e4] sm:$0xff]
    %v906 = vld [vmem:[#allocation6 + $0x5ec] sm:$0xf]
    %v907 = vld [vmem:[#allocation6 + $0x5f0] sm:$0xff]
    %v908 = vld [vmem:[#allocation6 + $0x5f8] sm:$0xff]
    %v909 = vld [vmem:[#allocation6 + $0x600] sm:$0xf]
    %v910 = vld [vmem:[#allocation6 + $0x604] sm:$0xff]
    %v911 = vld [vmem:[#allocation6 + $0x60c] sm:$0xff]
    %v912 = vld [vmem:[#allocation6 + $0x614] sm:$0xf]
    %v913 = vld [vmem:[#allocation6 + $0x618] sm:$0xff]
    %v914 = vld [vmem:[#allocation6 + $0x620] sm:$0xff]
    %v915 = vld [vmem:[#allocation6 + $0x628] sm:$0xf]
    %v916 = vld [vmem:[#allocation6 + $0x62c] sm:$0xff]
    %v917 = vld [vmem:[#allocation6 + $0x634] sm:$0xff]
    %v918 = vld [vmem:[#allocation6 + $0x63c] sm:$0xf]
    %v919 = vld [vmem:[#allocation6 + $0x640] sm:$0xff]
    %v920 = vld [vmem:[#allocation6 + $0x648] sm:$0xff]
    %v921 = vld [vmem:[#allocation6 + $0x650] sm:$0xf]
    %v922 = vld [vmem:[#allocation6 + $0x654] sm:$0xff]
    %v923 = vld [vmem:[#allocation6 + $0x65c] sm:$0xff]
    %v924 = vld [vmem:[#allocation6 + $0x664] sm:$0xf]
    %v925 = vld [vmem:[#allocation6 + $0x668] sm:$0xff]
    %v926 = vld [vmem:[#allocation6 + $0x670] sm:$0xff]
    %v927 = vld [vmem:[#allocation6 + $0x678] sm:$0xf]
    %v928 = vld [vmem:[#allocation6 + $0x67c] sm:$0xff]
    %v929 = vld [vmem:[#allocation6 + $0x684] sm:$0xff]
    %v930 = vld [vmem:[#allocation6 + $0x68c] sm:$0xf]
    %v931 = vld [vmem:[#allocation6 + $0x690] sm:$0xff]
    %v932 = vld [vmem:[#allocation6 + $0x698] sm:$0xff]
    %v933 = vld [vmem:[#allocation6 + $0x6a0] sm:$0xf]
    %v934 = vld [vmem:[#allocation6 + $0x6a4] sm:$0xff]
    %v935 = vld [vmem:[#allocation6 + $0x6ac] sm:$0xff]
    %v936 = vld [vmem:[#allocation6 + $0x6b4] sm:$0xf]
    %v937 = vld [vmem:[#allocation6 + $0x6b8] sm:$0xff]
    %v938 = vld [vmem:[#allocation6 + $0x6c0] sm:$0xff]
    %v939 = vld [vmem:[#allocation6 + $0x6c8] sm:$0xf]
    %v940 = vld [vmem:[#allocation6 + $0x6cc] sm:$0xff]
    %v941 = vld [vmem:[#allocation6 + $0x6d4] sm:$0xff]
    %v942 = vld [vmem:[#allocation6 + $0x6dc] sm:$0xf]
    %v943 = vld [vmem:[#allocation6 + $0x6e0] sm:$0xff]
    %v944 = vld [vmem:[#allocation6 + $0x6e8] sm:$0xff]
    %v945 = vld [vmem:[#allocation6 + $0x6f0] sm:$0xf]
    %v946 = vld [vmem:[#allocation6 + $0x6f4] sm:$0xff]
    %v947 = vld [vmem:[#allocation6 + $0x6fc] sm:$0xff]
    %v948 = vld [vmem:[#allocation6 + $0x704] sm:$0xf]
    %v949 = vld [vmem:[#allocation6 + $0x708] sm:$0xff]
    %v950 = vld [vmem:[#allocation6 + $0x710] sm:$0xff]
    %v951 = vld [vmem:[#allocation6 + $0x718] sm:$0xf]
    %v952 = vld [vmem:[#allocation6 + $0x71c] sm:$0xff]
    %v953 = vld [vmem:[#allocation6 + $0x724] sm:$0xff]
    %v954 = vld [vmem:[#allocation6 + $0x72c] sm:$0xf]
    %v955 = vld [vmem:[#allocation6 + $0x730] sm:$0xff]
    %v956 = vld [vmem:[#allocation6 + $0x738] sm:$0xff]
    %v957 = vld [vmem:[#allocation6 + $0x740] sm:$0xf]
    %v958 = vld [vmem:[#allocation6 + $0x744] sm:$0xff]
    %v959 = vld [vmem:[#allocation6 + $0x74c] sm:$0xff]
    %v960 = vld [vmem:[#allocation6 + $0x754] sm:$0xf]
    %v961 = vld [vmem:[#allocation6 + $0x758] sm:$0xff]
    %v962 = vld [vmem:[#allocation6 + $0x760] sm:$0xff]
    %v963 = vld [vmem:[#allocation6 + $0x768] sm:$0xf]
    %v964 = vld [vmem:[#allocation6 + $0x76c] sm:$0xff]
    %v965 = vld [vmem:[#allocation6 + $0x774] sm:$0xff]
    %v966 = vld [vmem:[#allocation6 + $0x77c] sm:$0xf]
    %v967 = vld [vmem:[#allocation6 + $0x780] sm:$0xff]
    %v968 = vld [vmem:[#allocation6 + $0x788] sm:$0xff]
    %v969 = vld [vmem:[#allocation6 + $0x790] sm:$0xf]
    %v970 = vld [vmem:[#allocation6 + $0x794] sm:$0xff]
    %v971 = vld [vmem:[#allocation6 + $0x79c] sm:$0xff]
    %v972 = vld [vmem:[#allocation6 + $0x7a4] sm:$0xf]
    %v973 = vld [vmem:[#allocation6 + $0x7a8] sm:$0xff]
    %v974 = vld [vmem:[#allocation6 + $0x7b0] sm:$0xff]
    %v975 = vld [vmem:[#allocation6 + $0x7b8] sm:$0xf]
    %v976 = vld [vmem:[#allocation6 + $0x7bc] sm:$0xff]
    %v977 = vld [vmem:[#allocation6 + $0x7c4] sm:$0xff]
    %v978 = vld [vmem:[#allocation6 + $0x7cc] sm:$0xf]
    %v979 = vld [vmem:[%s5] sm:$0xff]
    %v980 = vld [vmem:[%s5 + $0x8] sm:$0xff]
    %v981 = vld [vmem:[%s5 + $0x10] sm:$0xf]
    %v982 = vld [vmem:[%s5 + $0x14] sm:$0xff]
    %v983 = vld [vmem:[%s5 + $0x1c] sm:$0xff]
    %v984 = vld [vmem:[%s5 + $0x24] sm:$0xf]
    %v991 = vunpack.c.l.b16 %v979
    %v992 = vunpack.c.h.b16 %v979
    %v993 = vunpack.c.l.b16 %v980
    %v994 = vunpack.c.h.b16 %v980
    %v995 = vunpack.c.l.b16 %v981
    %v996 = vunpack.c.l.b16 %v982
    %v997 = vunpack.c.h.b16 %v982
    %v998 = vunpack.c.l.b16 %v983
    %v999 = vunpack.c.h.b16 %v983
    %v1000 = vunpack.c.l.b16 %v984
    %v1001 = vpack.c.b16 %v996, %v991
    %v1002 = vpack.c.b16 %v997, %v992
    %v1003 = vpack.c.b16 %v998, %v993
    %v1004 = vpack.c.b16 %v999, %v994
    %v1005 = vpack.c.b16 %v1000, %v995
    %vm1011 = vcmask 130048
    %v1013 = vsel %vm1011, %v124, 0
    %1015 = vmatprep.subr.bf16.mxu0 %v1002
    %1016 = vmatpush1.bf16.msra.mxu0 %v1001
    %1017 = vmatprep.subr.bf16.mxu0 0
    %1018 = vmatpush1.bf16.msra.mxu0 0
    %1019 = vmatprep.subr.bf16.mxu0 0
    %1020 = vmatpush1.bf16.msra.mxu0 0
    %1021 = vmatprep.subr.bf16.mxu0 0
    %1022 = vmatpush1.bf16.msra.mxu0 0
    %1023 = vmatprep.subr.bf16.mxu0 0
    %1024 = vmatpush1.bf16.msra.mxu0 0
    %1025 = vmatprep.subr.bf16.mxu0 0
    %1026 = vmatpush1.bf16.msra.mxu0 0
    %1027 = vmatprep.subr.bf16.mxu0 0
    %1028 = vmatpush1.bf16.msra.mxu0 0
    %1029 = vmatprep.subr.bf16.mxu0 0
    %1030 = vmatpush1.bf16.msra.mxu0 0
    %1031 = vmatprep.subr.bf16.mxu0 0
    %1032 = vmatpush1.bf16.msra.mxu0 0
    %1033 = vmatprep.subr.bf16.mxu0 0
    %1034 = vmatpush1.bf16.msra.mxu0 0
    %1035 = vmatprep.subr.bf16.mxu0 0
    %1036 = vmatpush1.bf16.msra.mxu0 0
    %1037 = vmatprep.subr.bf16.mxu0 0
    %1038 = vmatpush1.bf16.msra.mxu0 0
    %1039 = vmatprep.subr.bf16.mxu0 0
    %1040 = vmatpush1.bf16.msra.mxu0 0
    %1041 = vmatprep.subr.bf16.mxu0 0
    %1042 = vmatpush1.bf16.msra.mxu0 0
    %1043 = vmatprep.subr.bf16.mxu0 0
    %1044 = vmatpush1.bf16.msra.mxu0 0
    %1045 = vmatprep.subr.bf16.mxu0 0
    %1046 = vmatpush1.bf16.msra.mxu0 0
    %1047 = vmatprep.mubr.bf16.mxu0 0
    %1048 = vmatmul.mubr.bf16.gmra.mrb[0].mxu0 %v1013
    %v1049 = vpop.f32.mrb[0].mxu0
    %v1050 = vadd.f32 0.0, %v1049
    %v1051 = vpop.f32.mrb[0].mxu0
    %v1052 = vadd.f32 0.0, %v1051
    %v1053 = vpop.f32.mrb[0].mxu0
    %v1054 = vpop.f32.mrb[0].mxu0
    %1055 = vdwg.mxu0
    %1056 = vmatprep.subr.bf16.mxu0 %v1004
    %1057 = vmatpush1.bf16.msra.mxu0 %v1003
    %1058 = vmatprep.subr.bf16.mxu0 0
    %1059 = vmatpush1.bf16.msra.mxu0 0
    %1060 = vmatprep.subr.bf16.mxu0 0
    %1061 = vmatpush1.bf16.msra.mxu0 0
    %1062 = vmatprep.subr.bf16.mxu0 0
    %1063 = vmatpush1.bf16.msra.mxu0 0
    %1064 = vmatprep.subr.bf16.mxu0 0
    %1065 = vmatpush1.bf16.msra.mxu0 0
    %1066 = vmatprep.subr.bf16.mxu0 0
    %1067 = vmatpush1.bf16.msra.mxu0 0
    %1068 = vmatprep.subr.bf16.mxu0 0
    %1069 = vmatpush1.bf16.msra.mxu0 0
    %1070 = vmatprep.subr.bf16.mxu0 0
    %1071 = vmatpush1.bf16.msra.mxu0 0
    %1072 = vmatprep.subr.bf16.mxu0 0
    %1073 = vmatpush1.bf16.msra.mxu0 0
    %1074 = vmatprep.subr.bf16.mxu0 0
    %1075 = vmatpush1.bf16.msra.mxu0 0
    %1076 = vmatprep.subr.bf16.mxu0 0
    %1077 = vmatpush1.bf16.msra.mxu0 0
    %1078 = vmatprep.subr.bf16.mxu0 0
    %1079 = vmatpush1.bf16.msra.mxu0 0
    %1080 = vmatprep.subr.bf16.mxu0 0
    %1081 = vmatpush1.bf16.msra.mxu0 0
    %1082 = vmatprep.subr.bf16.mxu0 0
    %1083 = vmatpush1.bf16.msra.mxu0 0
    %1084 = vmatprep.subr.bf16.mxu0 0
    %1085 = vmatpush1.bf16.msra.mxu0 0
    %1086 = vmatprep.subr.bf16.mxu0 0
    %1087 = vmatpush1.bf16.msra.mxu0 0
    %1088 = vmatprep.mubr.bf16.mxu0 0
    %1089 = vmatmul.mubr.bf16.gmra.mrb[0].mxu0 %v1013
    %v1090 = vpop.f32.mrb[0].mxu0
    %v1091 = vadd.f32 0.0, %v1090
    %v1092 = vpop.f32.mrb[0].mxu0
    %v1093 = vadd.f32 0.0, %v1092
    %v1094 = vpop.f32.mrb[0].mxu0
    %v1095 = vpop.f32.mrb[0].mxu0
    %1096 = vdwg.mxu0
    %1097 = vmatprep.subr.bf16.mxu0 0
    %1098 = vmatpush1.bf16.msra.mxu0 %v1005
    %1099 = vmatprep.subr.bf16.mxu0 0
    %1100 = vmatpush1.bf16.msra.mxu0 0
    %1101 = vmatprep.subr.bf16.mxu0 0
    %1102 = vmatpush1.bf16.msra.mxu0 0
    %1103 = vmatprep.subr.bf16.mxu0 0
    %1104 = vmatpush1.bf16.msra.mxu0 0
    %1105 = vmatprep.subr.bf16.mxu0 0
    %1106 = vmatpush1.bf16.msra.mxu0 0
    %1107 = vmatprep.subr.bf16.mxu0 0
    %1108 = vmatpush1.bf16.msra.mxu0 0
    %1109 = vmatprep.subr.bf16.mxu0 0
    %1110 = vmatpush1.bf16.msra.mxu0 0
    %1111 = vmatprep.subr.bf16.mxu0 0
    %1112 = vmatpush1.bf16.msra.mxu0 0
    %1113 = vmatprep.subr.bf16.mxu0 0
    %1114 = vmatpush1.bf16.msra.mxu0 0
    %1115 = vmatprep.subr.bf16.mxu0 0
    %1116 = vmatpush1.bf16.msra.mxu0 0
    %1117 = vmatprep.subr.bf16.mxu0 0
    %1118 = vmatpush1.bf16.msra.mxu0 0
    %1119 = vmatprep.subr.bf16.mxu0 0
    %1120 = vmatpush1.bf16.msra.mxu0 0
    %1121 = vmatprep.subr.bf16.mxu0 0
    %1122 = vmatpush1.bf16.msra.mxu0 0
    %1123 = vmatprep.subr.bf16.mxu0 0
    %1124 = vmatpush1.bf16.msra.mxu0 0
    %1125 = vmatprep.subr.bf16.mxu0 0
    %1126 = vmatpush1.bf16.msra.mxu0 0
    %1127 = vmatprep.subr.bf16.mxu0 0
    %1128 = vmatpush1.bf16.msra.mxu0 0
    %1129 = vmatprep.mubr.bf16.mxu0 0
    %1130 = vmatmul.mubr.bf16.gmra.mrb[0].mxu0 %v1013
    %v1131 = vpop.f32.mrb[0].mxu0
    %v1132 = vadd.f32 0.0, %v1131
    %v1133 = vpop.f32.mrb[0].mxu0
    %v1134 = vpop.f32.mrb[0].mxu0
    %v1135 = vpop.f32.mrb[0].mxu0
    %1136 = vdwg.mxu0
    %v1437 = vunpack.c.l.b16 %v679
    %v1438 = vunpack.c.h.b16 %v679
    %v1439 = vunpack.c.l.b16 %v680
    %v1440 = vunpack.c.h.b16 %v680
    %v1441 = vunpack.c.l.b16 %v681
    %v1442 = vunpack.c.l.b16 %v682
    %v1443 = vunpack.c.h.b16 %v682
    %v1444 = vunpack.c.l.b16 %v683
    %v1445 = vunpack.c.h.b16 %v683
    %v1446 = vunpack.c.l.b16 %v684
    %v1447 = vunpack.c.l.b16 %v685
    %v1448 = vunpack.c.h.b16 %v685
    %v1449 = vunpack.c.l.b16 %v686
    %v1450 = vunpack.c.h.b16 %v686
    %v1451 = vunpack.c.l.b16 %v687
    %v1452 = vunpack.c.l.b16 %v688
    %v1453 = vunpack.c.h.b16 %v688
    %v1454 = vunpack.c.l.b16 %v689
    %v1455 = vunpack.c.h.b16 %v689
    %v1456 = vunpack.c.l.b16 %v690
    %v1457 = vunpack.c.l.b16 %v691
    %v1458 = vunpack.c.h.b16 %v691
    %v1459 = vunpack.c.l.b16 %v692
    %v1460 = vunpack.c.h.b16 %v692
    %v1461 = vunpack.c.l.b16 %v693
    %v1462 = vunpack.c.l.b16 %v694
    %v1463 = vunpack.c.h.b16 %v694
    %v1464 = vunpack.c.l.b16 %v695
    %v1465 = vunpack.c.h.b16 %v695
    %v1466 = vunpack.c.l.b16 %v696
    %v1467 = vunpack.c.l.b16 %v697
    %v1468 = vunpack.c.h.b16 %v697
    %v1469 = vunpack.c.l.b16 %v698
    %v1470 = vunpack.c.h.b16 %v698
    %v1471 = vunpack.c.l.b16 %v699
    %v1472 = vunpack.c.l.b16 %v700
    %v1473 = vunpack.c.h.b16 %v700
    %v1474 = vunpack.c.l.b16 %v701
    %v1475 = vunpack.c.h.b16 %v701
    %v1476 = vunpack.c.l.b16 %v702
    %v1477 = vunpack.c.l.b16 %v703
    %v1478 = vunpack.c.h.b16 %v703
    %v1479 = vunpack.c.l.b16 %v704
    %v1480 = vunpack.c.h.b16 %v704
    %v1481 = vunpack.c.l.b16 %v705
    %v1482 = vunpack.c.l.b16 %v706
    %v1483 = vunpack.c.h.b16 %v706
    %v1484 = vunpack.c.l.b16 %v707
    %v1485 = vunpack.c.h.b16 %v707
    %v1486 = vunpack.c.l.b16 %v708
    %v1487 = vunpack.c.l.b16 %v709
    %v1488 = vunpack.c.h.b16 %v709
    %v1489 = vunpack.c.l.b16 %v710
    %v1490 = vunpack.c.h.b16 %v710
    %v1491 = vunpack.c.l.b16 %v711
    %v1492 = vunpack.c.l.b16 %v712
    %v1493 = vunpack.c.h.b16 %v712
    %v1494 = vunpack.c.l.b16 %v713
    %v1495 = vunpack.c.h.b16 %v713
    %v1496 = vunpack.c.l.b16 %v714
    %v1497 = vunpack.c.l.b16 %v715
    %v1498 = vunpack.c.h.b16 %v715
    %v1499 = vunpack.c.l.b16 %v716
    %v1500 = vunpack.c.h.b16 %v716
    %v1501 = vunpack.c.l.b16 %v717
    %v1502 = vunpack.c.l.b16 %v718
    %v1503 = vunpack.c.h.b16 %v718
    %v1504 = vunpack.c.l.b16 %v719
    %v1505 = vunpack.c.h.b16 %v719
    %v1506 = vunpack.c.l.b16 %v720
    %v1507 = vunpack.c.l.b16 %v721
    %v1508 = vunpack.c.h.b16 %v721
    %v1509 = vunpack.c.l.b16 %v722
    %v1510 = vunpack.c.h.b16 %v722
    %v1511 = vunpack.c.l.b16 %v723
    %v1512 = vunpack.c.l.b16 %v724
    %v1513 = vunpack.c.h.b16 %v724
    %v1514 = vunpack.c.l.b16 %v725
    %v1515 = vunpack.c.h.b16 %v725
    %v1516 = vunpack.c.l.b16 %v726
    %v1517 = vunpack.c.l.b16 %v727
    %v1518 = vunpack.c.h.b16 %v727
    %v1519 = vunpack.c.l.b16 %v728
    %v1520 = vunpack.c.h.b16 %v728
    %v1521 = vunpack.c.l.b16 %v729
    %v1522 = vunpack.c.l.b16 %v730
    %v1523 = vunpack.c.h.b16 %v730
    %v1524 = vunpack.c.l.b16 %v731
    %v1525 = vunpack.c.h.b16 %v731
    %v1526 = vunpack.c.l.b16 %v732
    %v1527 = vunpack.c.l.b16 %v733
    %v1528 = vunpack.c.h.b16 %v733
    %v1529 = vunpack.c.l.b16 %v734
    %v1530 = vunpack.c.h.b16 %v734
    %v1531 = vunpack.c.l.b16 %v735
    %v1532 = vunpack.c.l.b16 %v736
    %v1533 = vunpack.c.h.b16 %v736
    %v1534 = vunpack.c.l.b16 %v737
    %v1535 = vunpack.c.h.b16 %v737
    %v1536 = vunpack.c.l.b16 %v738
    %v1537 = vunpack.c.l.b16 %v739
    %v1538 = vunpack.c.h.b16 %v739
    %v1539 = vunpack.c.l.b16 %v740
    %v1540 = vunpack.c.h.b16 %v740
    %v1541 = vunpack.c.l.b16 %v741
    %v1542 = vunpack.c.l.b16 %v742
    %v1543 = vunpack.c.h.b16 %v742
    %v1544 = vunpack.c.l.b16 %v743
    %v1545 = vunpack.c.h.b16 %v743
    %v1546 = vunpack.c.l.b16 %v744
    %v1547 = vunpack.c.l.b16 %v745
    %v1548 = vunpack.c.h.b16 %v745
    %v1549 = vunpack.c.l.b16 %v746
    %v1550 = vunpack.c.h.b16 %v746
    %v1551 = vunpack.c.l.b16 %v747
    %v1552 = vunpack.c.l.b16 %v748
    %v1553 = vunpack.c.h.b16 %v748
    %v1554 = vunpack.c.l.b16 %v749
    %v1555 = vunpack.c.h.b16 %v749
    %v1556 = vunpack.c.l.b16 %v750
    %v1557 = vunpack.c.l.b16 %v751
    %v1558 = vunpack.c.h.b16 %v751
    %v1559 = vunpack.c.l.b16 %v752
    %v1560 = vunpack.c.h.b16 %v752
    %v1561 = vunpack.c.l.b16 %v753
    %v1562 = vunpack.c.l.b16 %v754
    %v1563 = vunpack.c.h.b16 %v754
    %v1564 = vunpack.c.l.b16 %v755
    %v1565 = vunpack.c.h.b16 %v755
    %v1566 = vunpack.c.l.b16 %v756
    %v1567 = vunpack.c.l.b16 %v757
    %v1568 = vunpack.c.h.b16 %v757
    %v1569 = vunpack.c.l.b16 %v758
    %v1570 = vunpack.c.h.b16 %v758
    %v1571 = vunpack.c.l.b16 %v759
    %v1572 = vunpack.c.l.b16 %v760
    %v1573 = vunpack.c.h.b16 %v760
    %v1574 = vunpack.c.l.b16 %v761
    %v1575 = vunpack.c.h.b16 %v761
    %v1576 = vunpack.c.l.b16 %v762
    %v1577 = vunpack.c.l.b16 %v763
    %v1578 = vunpack.c.h.b16 %v763
    %v1579 = vunpack.c.l.b16 %v764
    %v1580 = vunpack.c.h.b16 %v764
    %v1581 = vunpack.c.l.b16 %v765
    %v1582 = vunpack.c.l.b16 %v766
    %v1583 = vunpack.c.h.b16 %v766
    %v1584 = vunpack.c.l.b16 %v767
    %v1585 = vunpack.c.h.b16 %v767
    %v1586 = vunpack.c.l.b16 %v768
    %v1587 = vunpack.c.l.b16 %v769
    %v1588 = vunpack.c.h.b16 %v769
    %v1589 = vunpack.c.l.b16 %v770
    %v1590 = vunpack.c.h.b16 %v770
    %v1591 = vunpack.c.l.b16 %v771
    %v1592 = vunpack.c.l.b16 %v772
    %v1593 = vunpack.c.h.b16 %v772
    %v1594 = vunpack.c.l.b16 %v773
    %v1595 = vunpack.c.h.b16 %v773
    %v1596 = vunpack.c.l.b16 %v774
    %v1597 = vunpack.c.l.b16 %v775
    %v1598 = vunpack.c.h.b16 %v775
    %v1599 = vunpack.c.l.b16 %v776
    %v1600 = vunpack.c.h.b16 %v776
    %v1601 = vunpack.c.l.b16 %v777
    %v1602 = vunpack.c.l.b16 %v778
    %v1603 = vunpack.c.h.b16 %v778
    %v1604 = vunpack.c.l.b16 %v779
    %v1605 = vunpack.c.h.b16 %v779
    %v1606 = vunpack.c.l.b16 %v780
    %v1607 = vunpack.c.l.b16 %v781
    %v1608 = vunpack.c.h.b16 %v781
    %v1609 = vunpack.c.l.b16 %v782
    %v1610 = vunpack.c.h.b16 %v782
    %v1611 = vunpack.c.l.b16 %v783
    %v1612 = vunpack.c.l.b16 %v784
    %v1613 = vunpack.c.h.b16 %v784
    %v1614 = vunpack.c.l.b16 %v785
    %v1615 = vunpack.c.h.b16 %v785
    %v1616 = vunpack.c.l.b16 %v786
    %v1617 = vunpack.c.l.b16 %v787
    %v1618 = vunpack.c.h.b16 %v787
    %v1619 = vunpack.c.l.b16 %v788
    %v1620 = vunpack.c.h.b16 %v788
    %v1621 = vunpack.c.l.b16 %v789
    %v1622 = vunpack.c.l.b16 %v790
    %v1623 = vunpack.c.h.b16 %v790
    %v1624 = vunpack.c.l.b16 %v791
    %v1625 = vunpack.c.h.b16 %v791
    %v1626 = vunpack.c.l.b16 %v792
    %v1627 = vunpack.c.l.b16 %v793
    %v1628 = vunpack.c.h.b16 %v793
    %v1629 = vunpack.c.l.b16 %v794
    %v1630 = vunpack.c.h.b16 %v794
    %v1631 = vunpack.c.l.b16 %v795
    %v1632 = vunpack.c.l.b16 %v796
    %v1633 = vunpack.c.h.b16 %v796
    %v1634 = vunpack.c.l.b16 %v797
    %v1635 = vunpack.c.h.b16 %v797
    %v1636 = vunpack.c.l.b16 %v798
    %v1637 = vunpack.c.l.b16 %v799
    %v1638 = vunpack.c.h.b16 %v799
    %v1639 = vunpack.c.l.b16 %v800
    %v1640 = vunpack.c.h.b16 %v800
    %v1641 = vunpack.c.l.b16 %v801
    %v1642 = vunpack.c.l.b16 %v802
    %v1643 = vunpack.c.h.b16 %v802
    %v1644 = vunpack.c.l.b16 %v803
    %v1645 = vunpack.c.h.b16 %v803
    %v1646 = vunpack.c.l.b16 %v804
    %v1647 = vunpack.c.l.b16 %v805
    %v1648 = vunpack.c.h.b16 %v805
    %v1649 = vunpack.c.l.b16 %v806
    %v1650 = vunpack.c.h.b16 %v806
    %v1651 = vunpack.c.l.b16 %v807
    %v1652 = vunpack.c.l.b16 %v808
    %v1653 = vunpack.c.h.b16 %v808
    %v1654 = vunpack.c.l.b16 %v809
    %v1655 = vunpack.c.h.b16 %v809
    %v1656 = vunpack.c.l.b16 %v810
    %v1657 = vunpack.c.l.b16 %v811
    %v1658 = vunpack.c.h.b16 %v811
    %v1659 = vunpack.c.l.b16 %v812
    %v1660 = vunpack.c.h.b16 %v812
    %v1661 = vunpack.c.l.b16 %v813
    %v1662 = vunpack.c.l.b16 %v814
    %v1663 = vunpack.c.h.b16 %v814
    %v1664 = vunpack.c.l.b16 %v815
    %v1665 = vunpack.c.h.b16 %v815
    %v1666 = vunpack.c.l.b16 %v816
    %v1667 = vunpack.c.l.b16 %v817
    %v1668 = vunpack.c.h.b16 %v817
    %v1669 = vunpack.c.l.b16 %v818
    %v1670 = vunpack.c.h.b16 %v818
    %v1671 = vunpack.c.l.b16 %v819
    %v1672 = vunpack.c.l.b16 %v820
    %v1673 = vunpack.c.h.b16 %v820
    %v1674 = vunpack.c.l.b16 %v821
    %v1675 = vunpack.c.h.b16 %v821
    %v1676 = vunpack.c.l.b16 %v822
    %v1677 = vunpack.c.l.b16 %v823
    %v1678 = vunpack.c.h.b16 %v823
    %v1679 = vunpack.c.l.b16 %v824
    %v1680 = vunpack.c.h.b16 %v824
    %v1681 = vunpack.c.l.b16 %v825
    %v1682 = vunpack.c.l.b16 %v826
    %v1683 = vunpack.c.h.b16 %v826
    %v1684 = vunpack.c.l.b16 %v827
    %v1685 = vunpack.c.h.b16 %v827
    %v1686 = vunpack.c.l.b16 %v828
    %v1687 = vunpack.c.l.b16 %v829
    %v1688 = vunpack.c.h.b16 %v829
    %v1689 = vunpack.c.l.b16 %v830
    %v1690 = vunpack.c.h.b16 %v830
    %v1691 = vunpack.c.l.b16 %v831
    %v1692 = vunpack.c.l.b16 %v832
    %v1693 = vunpack.c.h.b16 %v832
    %v1694 = vunpack.c.l.b16 %v833
    %v1695 = vunpack.c.h.b16 %v833
    %v1696 = vunpack.c.l.b16 %v834
    %v1697 = vunpack.c.l.b16 %v835
    %v1698 = vunpack.c.h.b16 %v835
    %v1699 = vunpack.c.l.b16 %v836
    %v1700 = vunpack.c.h.b16 %v836
    %v1701 = vunpack.c.l.b16 %v837
    %v1702 = vunpack.c.l.b16 %v838
    %v1703 = vunpack.c.h.b16 %v838
    %v1704 = vunpack.c.l.b16 %v839
    %v1705 = vunpack.c.h.b16 %v839
    %v1706 = vunpack.c.l.b16 %v840
    %v1707 = vunpack.c.l.b16 %v841
    %v1708 = vunpack.c.h.b16 %v841
    %v1709 = vunpack.c.l.b16 %v842
    %v1710 = vunpack.c.h.b16 %v842
    %v1711 = vunpack.c.l.b16 %v843
    %v1712 = vunpack.c.l.b16 %v844
    %v1713 = vunpack.c.h.b16 %v844
    %v1714 = vunpack.c.l.b16 %v845
    %v1715 = vunpack.c.h.b16 %v845
    %v1716 = vunpack.c.l.b16 %v846
    %v1717 = vunpack.c.l.b16 %v847
    %v1718 = vunpack.c.h.b16 %v847
    %v1719 = vunpack.c.l.b16 %v848
    %v1720 = vunpack.c.h.b16 %v848
    %v1721 = vunpack.c.l.b16 %v849
    %v1722 = vunpack.c.l.b16 %v850
    %v1723 = vunpack.c.h.b16 %v850
    %v1724 = vunpack.c.l.b16 %v851
    %v1725 = vunpack.c.h.b16 %v851
    %v1726 = vunpack.c.l.b16 %v852
    %v1727 = vunpack.c.l.b16 %v853
    %v1728 = vunpack.c.h.b16 %v853
    %v1729 = vunpack.c.l.b16 %v854
    %v1730 = vunpack.c.h.b16 %v854
    %v1731 = vunpack.c.l.b16 %v855
    %v1732 = vunpack.c.l.b16 %v856
    %v1733 = vunpack.c.h.b16 %v856
    %v1734 = vunpack.c.l.b16 %v857
    %v1735 = vunpack.c.h.b16 %v857
    %v1736 = vunpack.c.l.b16 %v858
    %v1737 = vunpack.c.l.b16 %v859
    %v1738 = vunpack.c.h.b16 %v859
    %v1739 = vunpack.c.l.b16 %v860
    %v1740 = vunpack.c.h.b16 %v860
    %v1741 = vunpack.c.l.b16 %v861
    %v1742 = vunpack.c.l.b16 %v862
    %v1743 = vunpack.c.h.b16 %v862
    %v1744 = vunpack.c.l.b16 %v863
    %v1745 = vunpack.c.h.b16 %v863
    %v1746 = vunpack.c.l.b16 %v864
    %v1747 = vunpack.c.l.b16 %v865
    %v1748 = vunpack.c.h.b16 %v865
    %v1749 = vunpack.c.l.b16 %v866
    %v1750 = vunpack.c.h.b16 %v866
    %v1751 = vunpack.c.l.b16 %v867
    %v1752 = vunpack.c.l.b16 %v868
    %v1753 = vunpack.c.h.b16 %v868
    %v1754 = vunpack.c.l.b16 %v869
    %v1755 = vunpack.c.h.b16 %v869
    %v1756 = vunpack.c.l.b16 %v870
    %v1757 = vunpack.c.l.b16 %v871
    %v1758 = vunpack.c.h.b16 %v871
    %v1759 = vunpack.c.l.b16 %v872
    %v1760 = vunpack.c.h.b16 %v872
    %v1761 = vunpack.c.l.b16 %v873
    %v1762 = vunpack.c.l.b16 %v874
    %v1763 = vunpack.c.h.b16 %v874
    %v1764 = vunpack.c.l.b16 %v875
    %v1765 = vunpack.c.h.b16 %v875
    %v1766 = vunpack.c.l.b16 %v876
    %v1767 = vunpack.c.l.b16 %v877
    %v1768 = vunpack.c.h.b16 %v877
    %v1769 = vunpack.c.l.b16 %v878
    %v1770 = vunpack.c.h.b16 %v878
    %v1771 = vunpack.c.l.b16 %v879
    %v1772 = vunpack.c.l.b16 %v880
    %v1773 = vunpack.c.h.b16 %v880
    %v1774 = vunpack.c.l.b16 %v881
    %v1775 = vunpack.c.h.b16 %v881
    %v1776 = vunpack.c.l.b16 %v882
    %v1777 = vunpack.c.l.b16 %v883
    %v1778 = vunpack.c.h.b16 %v883
    %v1779 = vunpack.c.l.b16 %v884
    %v1780 = vunpack.c.h.b16 %v884
    %v1781 = vunpack.c.l.b16 %v885
    %v1782 = vunpack.c.l.b16 %v886
    %v1783 = vunpack.c.h.b16 %v886
    %v1784 = vunpack.c.l.b16 %v887
    %v1785 = vunpack.c.h.b16 %v887
    %v1786 = vunpack.c.l.b16 %v888
    %v1787 = vunpack.c.l.b16 %v889
    %v1788 = vunpack.c.h.b16 %v889
    %v1789 = vunpack.c.l.b16 %v890
    %v1790 = vunpack.c.h.b16 %v890
    %v1791 = vunpack.c.l.b16 %v891
    %v1792 = vunpack.c.l.b16 %v892
    %v1793 = vunpack.c.h.b16 %v892
    %v1794 = vunpack.c.l.b16 %v893
    %v1795 = vunpack.c.h.b16 %v893
    %v1796 = vunpack.c.l.b16 %v894
    %v1797 = vunpack.c.l.b16 %v895
    %v1798 = vunpack.c.h.b16 %v895
    %v1799 = vunpack.c.l.b16 %v896
    %v1800 = vunpack.c.h.b16 %v896
    %v1801 = vunpack.c.l.b16 %v897
    %v1802 = vunpack.c.l.b16 %v898
    %v1803 = vunpack.c.h.b16 %v898
    %v1804 = vunpack.c.l.b16 %v899
    %v1805 = vunpack.c.h.b16 %v899
    %v1806 = vunpack.c.l.b16 %v900
    %v1807 = vunpack.c.l.b16 %v901
    %v1808 = vunpack.c.h.b16 %v901
    %v1809 = vunpack.c.l.b16 %v902
    %v1810 = vunpack.c.h.b16 %v902
    %v1811 = vunpack.c.l.b16 %v903
    %v1812 = vunpack.c.l.b16 %v904
    %v1813 = vunpack.c.h.b16 %v904
    %v1814 = vunpack.c.l.b16 %v905
    %v1815 = vunpack.c.h.b16 %v905
    %v1816 = vunpack.c.l.b16 %v906
    %v1817 = vunpack.c.l.b16 %v907
    %v1818 = vunpack.c.h.b16 %v907
    %v1819 = vunpack.c.l.b16 %v908
    %v1820 = vunpack.c.h.b16 %v908
    %v1821 = vunpack.c.l.b16 %v909
    %v1822 = vunpack.c.l.b16 %v910
    %v1823 = vunpack.c.h.b16 %v910
    %v1824 = vunpack.c.l.b16 %v911
    %v1825 = vunpack.c.h.b16 %v911
    %v1826 = vunpack.c.l.b16 %v912
    %v1827 = vunpack.c.l.b16 %v913
    %v1828 = vunpack.c.h.b16 %v913
    %v1829 = vunpack.c.l.b16 %v914
    %v1830 = vunpack.c.h.b16 %v914
    %v1831 = vunpack.c.l.b16 %v915
    %v1832 = vunpack.c.l.b16 %v916
    %v1833 = vunpack.c.h.b16 %v916
    %v1834 = vunpack.c.l.b16 %v917
    %v1835 = vunpack.c.h.b16 %v917
    %v1836 = vunpack.c.l.b16 %v918
    %v1837 = vunpack.c.l.b16 %v919
    %v1838 = vunpack.c.h.b16 %v919
    %v1839 = vunpack.c.l.b16 %v920
    %v1840 = vunpack.c.h.b16 %v920
    %v1841 = vunpack.c.l.b16 %v921
    %v1842 = vunpack.c.l.b16 %v922
    %v1843 = vunpack.c.h.b16 %v922
    %v1844 = vunpack.c.l.b16 %v923
    %v1845 = vunpack.c.h.b16 %v923
    %v1846 = vunpack.c.l.b16 %v924
    %v1847 = vunpack.c.l.b16 %v925
    %v1848 = vunpack.c.h.b16 %v925
    %v1849 = vunpack.c.l.b16 %v926
    %v1850 = vunpack.c.h.b16 %v926
    %v1851 = vunpack.c.l.b16 %v927
    %v1852 = vunpack.c.l.b16 %v928
    %v1853 = vunpack.c.h.b16 %v928
    %v1854 = vunpack.c.l.b16 %v929
    %v1855 = vunpack.c.h.b16 %v929
    %v1856 = vunpack.c.l.b16 %v930
    %v1857 = vunpack.c.l.b16 %v931
    %v1858 = vunpack.c.h.b16 %v931
    %v1859 = vunpack.c.l.b16 %v932
    %v1860 = vunpack.c.h.b16 %v932
    %v1861 = vunpack.c.l.b16 %v933
    %v1862 = vunpack.c.l.b16 %v934
    %v1863 = vunpack.c.h.b16 %v934
    %v1864 = vunpack.c.l.b16 %v935
    %v1865 = vunpack.c.h.b16 %v935
    %v1866 = vunpack.c.l.b16 %v936
    %v1867 = vunpack.c.l.b16 %v937
    %v1868 = vunpack.c.h.b16 %v937
    %v1869 = vunpack.c.l.b16 %v938
    %v1870 = vunpack.c.h.b16 %v938
    %v1871 = vunpack.c.l.b16 %v939
    %v1872 = vunpack.c.l.b16 %v940
    %v1873 = vunpack.c.h.b16 %v940
    %v1874 = vunpack.c.l.b16 %v941
    %v1875 = vunpack.c.h.b16 %v941
    %v1876 = vunpack.c.l.b16 %v942
    %v1877 = vunpack.c.l.b16 %v943
    %v1878 = vunpack.c.h.b16 %v943
    %v1879 = vunpack.c.l.b16 %v944
    %v1880 = vunpack.c.h.b16 %v944
    %v1881 = vunpack.c.l.b16 %v945
    %v1882 = vunpack.c.l.b16 %v946
    %v1883 = vunpack.c.h.b16 %v946
    %v1884 = vunpack.c.l.b16 %v947
    %v1885 = vunpack.c.h.b16 %v947
    %v1886 = vunpack.c.l.b16 %v948
    %v1887 = vunpack.c.l.b16 %v949
    %v1888 = vunpack.c.h.b16 %v949
    %v1889 = vunpack.c.l.b16 %v950
    %v1890 = vunpack.c.h.b16 %v950
    %v1891 = vunpack.c.l.b16 %v951
    %v1892 = vunpack.c.l.b16 %v952
    %v1893 = vunpack.c.h.b16 %v952
    %v1894 = vunpack.c.l.b16 %v953
    %v1895 = vunpack.c.h.b16 %v953
    %v1896 = vunpack.c.l.b16 %v954
    %v1897 = vunpack.c.l.b16 %v955
    %v1898 = vunpack.c.h.b16 %v955
    %v1899 = vunpack.c.l.b16 %v956
    %v1900 = vunpack.c.h.b16 %v956
    %v1901 = vunpack.c.l.b16 %v957
    %v1902 = vunpack.c.l.b16 %v958
    %v1903 = vunpack.c.h.b16 %v958
    %v1904 = vunpack.c.l.b16 %v959
    %v1905 = vunpack.c.h.b16 %v959
    %v1906 = vunpack.c.l.b16 %v960
    %v1907 = vunpack.c.l.b16 %v961
    %v1908 = vunpack.c.h.b16 %v961
    %v1909 = vunpack.c.l.b16 %v962
    %v1910 = vunpack.c.h.b16 %v962
    %v1911 = vunpack.c.l.b16 %v963
    %v1912 = vunpack.c.l.b16 %v964
    %v1913 = vunpack.c.h.b16 %v964
    %v1914 = vunpack.c.l.b16 %v965
    %v1915 = vunpack.c.h.b16 %v965
    %v1916 = vunpack.c.l.b16 %v966
    %v1917 = vunpack.c.l.b16 %v967
    %v1918 = vunpack.c.h.b16 %v967
    %v1919 = vunpack.c.l.b16 %v968
    %v1920 = vunpack.c.h.b16 %v968
    %v1921 = vunpack.c.l.b16 %v969
    %v1922 = vunpack.c.l.b16 %v970
    %v1923 = vunpack.c.h.b16 %v970
    %v1924 = vunpack.c.l.b16 %v971
    %v1925 = vunpack.c.h.b16 %v971
    %v1926 = vunpack.c.l.b16 %v972
    %v1927 = vunpack.c.l.b16 %v973
    %v1928 = vunpack.c.h.b16 %v973
    %v1929 = vunpack.c.l.b16 %v974
    %v1930 = vunpack.c.h.b16 %v974
    %v1931 = vunpack.c.l.b16 %v975
    %v1932 = vunpack.c.l.b16 %v976
    %v1933 = vunpack.c.h.b16 %v976
    %v1934 = vunpack.c.l.b16 %v977
    %v1935 = vunpack.c.h.b16 %v977
    %v1936 = vunpack.c.l.b16 %v978
    %v1937 = vpack.c.b16 %v1442, %v1437
    %v1938 = vpack.c.b16 %v1443, %v1438
    %v1939 = vpack.c.b16 %v1444, %v1439
    %v1940 = vpack.c.b16 %v1445, %v1440
    %v1941 = vpack.c.b16 %v1446, %v1441
    %v1942 = vpack.c.b16 %v1452, %v1447
    %v1943 = vpack.c.b16 %v1453, %v1448
    %v1944 = vpack.c.b16 %v1454, %v1449
    %v1945 = vpack.c.b16 %v1455, %v1450
    %v1946 = vpack.c.b16 %v1456, %v1451
    %v1947 = vpack.c.b16 %v1462, %v1457
    %v1948 = vpack.c.b16 %v1463, %v1458
    %v1949 = vpack.c.b16 %v1464, %v1459
    %v1950 = vpack.c.b16 %v1465, %v1460
    %v1951 = vpack.c.b16 %v1466, %v1461
    %v1952 = vpack.c.b16 %v1472, %v1467
    %v1953 = vpack.c.b16 %v1473, %v1468
    %v1954 = vpack.c.b16 %v1474, %v1469
    %v1955 = vpack.c.b16 %v1475, %v1470
    %v1956 = vpack.c.b16 %v1476, %v1471
    %v1957 = vpack.c.b16 %v1482, %v1477
    %v1958 = vpack.c.b16 %v1483, %v1478
    %v1959 = vpack.c.b16 %v1484, %v1479
    %v1960 = vpack.c.b16 %v1485, %v1480
    %v1961 = vpack.c.b16 %v1486, %v1481
    %v1962 = vpack.c.b16 %v1492, %v1487
    %v1963 = vpack.c.b16 %v1493, %v1488
    %v1964 = vpack.c.b16 %v1494, %v1489
    %v1965 = vpack.c.b16 %v1495, %v1490
    %v1966 = vpack.c.b16 %v1496, %v1491
    %v1967 = vpack.c.b16 %v1502, %v1497
    %v1968 = vpack.c.b16 %v1503, %v1498
    %v1969 = vpack.c.b16 %v1504, %v1499
    %v1970 = vpack.c.b16 %v1505, %v1500
    %v1971 = vpack.c.b16 %v1506, %v1501
    %v1972 = vpack.c.b16 %v1512, %v1507
    %v1973 = vpack.c.b16 %v1513, %v1508
    %v1974 = vpack.c.b16 %v1514, %v1509
    %v1975 = vpack.c.b16 %v1515, %v1510
    %v1976 = vpack.c.b16 %v1516, %v1511
    %v1977 = vpack.c.b16 %v1522, %v1517
    %v1978 = vpack.c.b16 %v1523, %v1518
    %v1979 = vpack.c.b16 %v1524, %v1519
    %v1980 = vpack.c.b16 %v1525, %v1520
    %v1981 = vpack.c.b16 %v1526, %v1521
    %v1982 = vpack.c.b16 %v1532, %v1527
    %v1983 = vpack.c.b16 %v1533, %v1528
    %v1984 = vpack.c.b16 %v1534, %v1529
    %v1985 = vpack.c.b16 %v1535, %v1530
    %v1986 = vpack.c.b16 %v1536, %v1531
    %v1987 = vpack.c.b16 %v1542, %v1537
    %v1988 = vpack.c.b16 %v1543, %v1538
    %v1989 = vpack.c.b16 %v1544, %v1539
    %v1990 = vpack.c.b16 %v1545, %v1540
    %v1991 = vpack.c.b16 %v1546, %v1541
    %v1992 = vpack.c.b16 %v1552, %v1547
    %v1993 = vpack.c.b16 %v1553, %v1548
    %v1994 = vpack.c.b16 %v1554, %v1549
    %v1995 = vpack.c.b16 %v1555, %v1550
    %v1996 = vpack.c.b16 %v1556, %v1551
    %v1997 = vpack.c.b16 %v1562, %v1557
    %v1998 = vpack.c.b16 %v1563, %v1558
    %v1999 = vpack.c.b16 %v1564, %v1559
    %v2000 = vpack.c.b16 %v1565, %v1560
    %v2001 = vpack.c.b16 %v1566, %v1561
    %v2002 = vpack.c.b16 %v1572, %v1567
    %v2003 = vpack.c.b16 %v1573, %v1568
    %v2004 = vpack.c.b16 %v1574, %v1569
    %v2005 = vpack.c.b16 %v1575, %v1570
    %v2006 = vpack.c.b16 %v1576, %v1571
    %v2007 = vpack.c.b16 %v1582, %v1577
    %v2008 = vpack.c.b16 %v1583, %v1578
    %v2009 = vpack.c.b16 %v1584, %v1579
    %v2010 = vpack.c.b16 %v1585, %v1580
    %v2011 = vpack.c.b16 %v1586, %v1581
    %v2012 = vpack.c.b16 %v1592, %v1587
    %v2013 = vpack.c.b16 %v1593, %v1588
    %v2014 = vpack.c.b16 %v1594, %v1589
    %v2015 = vpack.c.b16 %v1595, %v1590
    %v2016 = vpack.c.b16 %v1596, %v1591
    %v2017 = vpack.c.b16 %v1602, %v1597
    %v2018 = vpack.c.b16 %v1603, %v1598
    %v2019 = vpack.c.b16 %v1604, %v1599
    %v2020 = vpack.c.b16 %v1605, %v1600
    %v2021 = vpack.c.b16 %v1606, %v1601
    %v2022 = vpack.c.b16 %v1612, %v1607
    %v2023 = vpack.c.b16 %v1613, %v1608
    %v2024 = vpack.c.b16 %v1614, %v1609
    %v2025 = vpack.c.b16 %v1615, %v1610
    %v2026 = vpack.c.b16 %v1616, %v1611
    %v2027 = vpack.c.b16 %v1622, %v1617
    %v2028 = vpack.c.b16 %v1623, %v1618
    %v2029 = vpack.c.b16 %v1624, %v1619
    %v2030 = vpack.c.b16 %v1625, %v1620
    %v2031 = vpack.c.b16 %v1626, %v1621
    %v2032 = vpack.c.b16 %v1632, %v1627
    %v2033 = vpack.c.b16 %v1633, %v1628
    %v2034 = vpack.c.b16 %v1634, %v1629
    %v2035 = vpack.c.b16 %v1635, %v1630
    %v2036 = vpack.c.b16 %v1636, %v1631
    %v2037 = vpack.c.b16 %v1642, %v1637
    %v2038 = vpack.c.b16 %v1643, %v1638
    %v2039 = vpack.c.b16 %v1644, %v1639
    %v2040 = vpack.c.b16 %v1645, %v1640
    %v2041 = vpack.c.b16 %v1646, %v1641
    %v2042 = vpack.c.b16 %v1652, %v1647
    %v2043 = vpack.c.b16 %v1653, %v1648
    %v2044 = vpack.c.b16 %v1654, %v1649
    %v2045 = vpack.c.b16 %v1655, %v1650
    %v2046 = vpack.c.b16 %v1656, %v1651
    %v2047 = vpack.c.b16 %v1662, %v1657
    %v2048 = vpack.c.b16 %v1663, %v1658
    %v2049 = vpack.c.b16 %v1664, %v1659
    %v2050 = vpack.c.b16 %v1665, %v1660
    %v2051 = vpack.c.b16 %v1666, %v1661
    %v2052 = vpack.c.b16 %v1672, %v1667
    %v2053 = vpack.c.b16 %v1673, %v1668
    %v2054 = vpack.c.b16 %v1674, %v1669
    %v2055 = vpack.c.b16 %v1675, %v1670
    %v2056 = vpack.c.b16 %v1676, %v1671
    %v2057 = vpack.c.b16 %v1682, %v1677
    %v2058 = vpack.c.b16 %v1683, %v1678
    %v2059 = vpack.c.b16 %v1684, %v1679
    %v2060 = vpack.c.b16 %v1685, %v1680
    %v2061 = vpack.c.b16 %v1686, %v1681
    %v2062 = vpack.c.b16 %v1692, %v1687
    %v2063 = vpack.c.b16 %v1693, %v1688
    %v2064 = vpack.c.b16 %v1694, %v1689
    %v2065 = vpack.c.b16 %v1695, %v1690
    %v2066 = vpack.c.b16 %v1696, %v1691
    %v2067 = vpack.c.b16 %v1702, %v1697
    %v2068 = vpack.c.b16 %v1703, %v1698
    %v2069 = vpack.c.b16 %v1704, %v1699
    %v2070 = vpack.c.b16 %v1705, %v1700
    %v2071 = vpack.c.b16 %v1706, %v1701
    %v2072 = vpack.c.b16 %v1712, %v1707
    %v2073 = vpack.c.b16 %v1713, %v1708
    %v2074 = vpack.c.b16 %v1714, %v1709
    %v2075 = vpack.c.b16 %v1715, %v1710
    %v2076 = vpack.c.b16 %v1716, %v1711
    %v2077 = vpack.c.b16 %v1722, %v1717
    %v2078 = vpack.c.b16 %v1723, %v1718
    %v2079 = vpack.c.b16 %v1724, %v1719
    %v2080 = vpack.c.b16 %v1725, %v1720
    %v2081 = vpack.c.b16 %v1726, %v1721
    %v2082 = vpack.c.b16 %v1732, %v1727
    %v2083 = vpack.c.b16 %v1733, %v1728
    %v2084 = vpack.c.b16 %v1734, %v1729
    %v2085 = vpack.c.b16 %v1735, %v1730
    %v2086 = vpack.c.b16 %v1736, %v1731
    %v2087 = vpack.c.b16 %v1742, %v1737
    %v2088 = vpack.c.b16 %v1743, %v1738
    %v2089 = vpack.c.b16 %v1744, %v1739
    %v2090 = vpack.c.b16 %v1745, %v1740
    %v2091 = vpack.c.b16 %v1746, %v1741
    %v2092 = vpack.c.b16 %v1752, %v1747
    %v2093 = vpack.c.b16 %v1753, %v1748
    %v2094 = vpack.c.b16 %v1754, %v1749
    %v2095 = vpack.c.b16 %v1755, %v1750
    %v2096 = vpack.c.b16 %v1756, %v1751
    %v2097 = vpack.c.b16 %v1762, %v1757
    %v2098 = vpack.c.b16 %v1763, %v1758
    %v2099 = vpack.c.b16 %v1764, %v1759
    %v2100 = vpack.c.b16 %v1765, %v1760
    %v2101 = vpack.c.b16 %v1766, %v1761
    %v2102 = vpack.c.b16 %v1772, %v1767
    %v2103 = vpack.c.b16 %v1773, %v1768
    %v2104 = vpack.c.b16 %v1774, %v1769
    %v2105 = vpack.c.b16 %v1775, %v1770
    %v2106 = vpack.c.b16 %v1776, %v1771
    %v2107 = vpack.c.b16 %v1782, %v1777
    %v2108 = vpack.c.b16 %v1783, %v1778
    %v2109 = vpack.c.b16 %v1784, %v1779
    %v2110 = vpack.c.b16 %v1785, %v1780
    %v2111 = vpack.c.b16 %v1786, %v1781
    %v2112 = vpack.c.b16 %v1792, %v1787
    %v2113 = vpack.c.b16 %v1793, %v1788
    %v2114 = vpack.c.b16 %v1794, %v1789
    %v2115 = vpack.c.b16 %v1795, %v1790
    %v2116 = vpack.c.b16 %v1796, %v1791
    %v2117 = vpack.c.b16 %v1802, %v1797
    %v2118 = vpack.c.b16 %v1803, %v1798
    %v2119 = vpack.c.b16 %v1804, %v1799
    %v2120 = vpack.c.b16 %v1805, %v1800
    %v2121 = vpack.c.b16 %v1806, %v1801
    %v2122 = vpack.c.b16 %v1812, %v1807
    %v2123 = vpack.c.b16 %v1813, %v1808
    %v2124 = vpack.c.b16 %v1814, %v1809
    %v2125 = vpack.c.b16 %v1815, %v1810
    %v2126 = vpack.c.b16 %v1816, %v1811
    %v2127 = vpack.c.b16 %v1822, %v1817
    %v2128 = vpack.c.b16 %v1823, %v1818
    %v2129 = vpack.c.b16 %v1824, %v1819
    %v2130 = vpack.c.b16 %v1825, %v1820
    %v2131 = vpack.c.b16 %v1826, %v1821
    %v2132 = vpack.c.b16 %v1832, %v1827
    %v2133 = vpack.c.b16 %v1833, %v1828
    %v2134 = vpack.c.b16 %v1834, %v1829
    %v2135 = vpack.c.b16 %v1835, %v1830
    %v2136 = vpack.c.b16 %v1836, %v1831
    %v2137 = vpack.c.b16 %v1842, %v1837
    %v2138 = vpack.c.b16 %v1843, %v1838
    %v2139 = vpack.c.b16 %v1844, %v1839
    %v2140 = vpack.c.b16 %v1845, %v1840
    %v2141 = vpack.c.b16 %v1846, %v1841
    %v2142 = vpack.c.b16 %v1852, %v1847
    %v2143 = vpack.c.b16 %v1853, %v1848
    %v2144 = vpack.c.b16 %v1854, %v1849
    %v2145 = vpack.c.b16 %v1855, %v1850
    %v2146 = vpack.c.b16 %v1856, %v1851
    %v2147 = vpack.c.b16 %v1862, %v1857
    %v2148 = vpack.c.b16 %v1863, %v1858
    %v2149 = vpack.c.b16 %v1864, %v1859
    %v2150 = vpack.c.b16 %v1865, %v1860
    %v2151 = vpack.c.b16 %v1866, %v1861
    %v2152 = vpack.c.b16 %v1872, %v1867
    %v2153 = vpack.c.b16 %v1873, %v1868
    %v2154 = vpack.c.b16 %v1874, %v1869
    %v2155 = vpack.c.b16 %v1875, %v1870
    %v2156 = vpack.c.b16 %v1876, %v1871
    %v2157 = vpack.c.b16 %v1882, %v1877
    %v2158 = vpack.c.b16 %v1883, %v1878
    %v2159 = vpack.c.b16 %v1884, %v1879
    %v2160 = vpack.c.b16 %v1885, %v1880
    %v2161 = vpack.c.b16 %v1886, %v1881
    %v2162 = vpack.c.b16 %v1892, %v1887
    %v2163 = vpack.c.b16 %v1893, %v1888
    %v2164 = vpack.c.b16 %v1894, %v1889
    %v2165 = vpack.c.b16 %v1895, %v1890
    %v2166 = vpack.c.b16 %v1896, %v1891
    %v2167 = vpack.c.b16 %v1902, %v1897
    %v2168 = vpack.c.b16 %v1903, %v1898
    %v2169 = vpack.c.b16 %v1904, %v1899
    %v2170 = vpack.c.b16 %v1905, %v1900
    %v2171 = vpack.c.b16 %v1906, %v1901
    %v2172 = vpack.c.b16 %v1912, %v1907
    %v2173 = vpack.c.b16 %v1913, %v1908
    %v2174 = vpack.c.b16 %v1914, %v1909
    %v2175 = vpack.c.b16 %v1915, %v1910
    %v2176 = vpack.c.b16 %v1916, %v1911
    %v2177 = vpack.c.b16 %v1922, %v1917
    %v2178 = vpack.c.b16 %v1923, %v1918
    %v2179 = vpack.c.b16 %v1924, %v1919
    %v2180 = vpack.c.b16 %v1925, %v1920
    %v2181 = vpack.c.b16 %v1926, %v1921
    %v2182 = vpack.c.b16 %v1932, %v1927
    %v2183 = vpack.c.b16 %v1933, %v1928
    %v2184 = vpack.c.b16 %v1934, %v1929
    %v2185 = vpack.c.b16 %v1935, %v1930
    %v2186 = vpack.c.b16 %v1936, %v1931
    %v2438 = vsel %vm367, %v678, 0
    %2440 = vmatprep.subr.bf16.mxu0 %v1938
    %2441 = vmatpush1.bf16.msra.mxu0 %v1937
    %2442 = vmatprep.subr.bf16.mxu0 %v1943
    %2443 = vmatpush1.bf16.msra.mxu0 %v1942
    %2444 = vmatprep.subr.bf16.mxu0 %v1948
    %2445 = vmatpush1.bf16.msra.mxu0 %v1947
    %2446 = vmatprep.subr.bf16.mxu0 %v1953
    %2447 = vmatpush1.bf16.msra.mxu0 %v1952
    %2448 = vmatprep.subr.bf16.mxu0 %v1958
    %2449 = vmatpush1.bf16.msra.mxu0 %v1957
    %2450 = vmatprep.subr.bf16.mxu0 %v1963
    %2451 = vmatpush1.bf16.msra.mxu0 %v1962
    %2452 = vmatprep.subr.bf16.mxu0 %v1968
    %2453 = vmatpush1.bf16.msra.mxu0 %v1967
    %2454 = vmatprep.subr.bf16.mxu0 %v1973
    %2455 = vmatpush1.bf16.msra.mxu0 %v1972
    %2456 = vmatprep.subr.bf16.mxu0 %v1978
    %2457 = vmatpush1.bf16.msra.mxu0 %v1977
    %2458 = vmatprep.subr.bf16.mxu0 %v1983
    %2459 = vmatpush1.bf16.msra.mxu0 %v1982
    %2460 = vmatprep.subr.bf16.mxu0 %v1988
    %2461 = vmatpush1.bf16.msra.mxu0 %v1987
    %2462 = vmatprep.subr.bf16.mxu0 %v1993
    %2463 = vmatpush1.bf16.msra.mxu0 %v1992
    %2464 = vmatprep.subr.bf16.mxu0 %v1998
    %2465 = vmatpush1.bf16.msra.mxu0 %v1997
    %2466 = vmatprep.subr.bf16.mxu0 %v2003
    %2467 = vmatpush1.bf16.msra.mxu0 %v2002
    %2468 = vmatprep.subr.bf16.mxu0 %v2008
    %2469 = vmatpush1.bf16.msra.mxu0 %v2007
    %2470 = vmatprep.subr.bf16.mxu0 %v2013
    %2471 = vmatpush1.bf16.msra.mxu0 %v2012
    %2472 = vmatprep.mubr.bf16.mxu0 %v673
    %2473 = vmatmul.mubr.bf16.gmra.mrb[0].mxu0 %v672
    %v2474 = vpop.f32.mrb[0].mxu0
    %v2475 = vadd.f32 %v1050, %v2474
    %v2476 = vpop.f32.mrb[0].mxu0
    %v2477 = vadd.f32 %v1052, %v2476
    %v2478 = vpop.f32.mrb[0].mxu0
    %v2479 = vpop.f32.mrb[0].mxu0
    %2480 = vdwg.mxu0
    %2481 = vmatprep.subr.bf16.mxu0 %v2018
    %2482 = vmatpush1.bf16.msra.mxu0 %v2017
    %2483 = vmatprep.subr.bf16.mxu0 %v2023
    %2484 = vmatpush1.bf16.msra.mxu0 %v2022
    %2485 = vmatprep.subr.bf16.mxu0 %v2028
    %2486 = vmatpush1.bf16.msra.mxu0 %v2027
    %2487 = vmatprep.subr.bf16.mxu0 %v2033
    %2488 = vmatpush1.bf16.msra.mxu0 %v2032
    %2489 = vmatprep.subr.bf16.mxu0 %v2038
    %2490 = vmatpush1.bf16.msra.mxu0 %v2037
    %2491 = vmatprep.subr.bf16.mxu0 %v2043
    %2492 = vmatpush1.bf16.msra.mxu0 %v2042
    %2493 = vmatprep.subr.bf16.mxu0 %v2048
    %2494 = vmatpush1.bf16.msra.mxu0 %v2047
    %2495 = vmatprep.subr.bf16.mxu0 %v2053
    %2496 = vmatpush1.bf16.msra.mxu0 %v2052
    %2497 = vmatprep.subr.bf16.mxu0 %v2058
    %2498 = vmatpush1.bf16.msra.mxu0 %v2057
    %2499 = vmatprep.subr.bf16.mxu0 %v2063
    %2500 = vmatpush1.bf16.msra.mxu0 %v2062
    %2501 = vmatprep.subr.bf16.mxu0 %v2068
    %2502 = vmatpush1.bf16.msra.mxu0 %v2067
    %2503 = vmatprep.subr.bf16.mxu0 %v2073
    %2504 = vmatpush1.bf16.msra.mxu0 %v2072
    %2505 = vmatprep.subr.bf16.mxu0 %v2078
    %2506 = vmatpush1.bf16.msra.mxu0 %v2077
    %2507 = vmatprep.subr.bf16.mxu0 %v2083
    %2508 = vmatpush1.bf16.msra.mxu0 %v2082
    %2509 = vmatprep.subr.bf16.mxu0 %v2088
    %2510 = vmatpush1.bf16.msra.mxu0 %v2087
    %2511 = vmatprep.subr.bf16.mxu0 %v2093
    %2512 = vmatpush1.bf16.msra.mxu0 %v2092
    %2513 = vmatprep.mubr.bf16.mxu0 %v675
    %2514 = vmatmul.mubr.bf16.gmra.mrb[0].mxu0 %v674
    %v2515 = vpop.f32.mrb[0].mxu0
    %v2516 = vadd.f32 %v2475, %v2515
    %v2517 = vpop.f32.mrb[0].mxu0
    %v2518 = vadd.f32 %v2477, %v2517
    %v2519 = vpop.f32.mrb[0].mxu0
    %v2520 = vpop.f32.mrb[0].mxu0
    %2521 = vdwg.mxu0
    %2522 = vmatprep.subr.bf16.mxu0 %v2098
    %2523 = vmatpush1.bf16.msra.mxu0 %v2097
    %2524 = vmatprep.subr.bf16.mxu0 %v2103
    %2525 = vmatpush1.bf16.msra.mxu0 %v2102
    %2526 = vmatprep.subr.bf16.mxu0 %v2108
    %2527 = vmatpush1.bf16.msra.mxu0 %v2107
    %2528 = vmatprep.subr.bf16.mxu0 %v2113
    %2529 = vmatpush1.bf16.msra.mxu0 %v2112
    %2530 = vmatprep.subr.bf16.mxu0 %v2118
    %2531 = vmatpush1.bf16.msra.mxu0 %v2117
    %2532 = vmatprep.subr.bf16.mxu0 %v2123
    %2533 = vmatpush1.bf16.msra.mxu0 %v2122
    %2534 = vmatprep.subr.bf16.mxu0 %v2128
    %2535 = vmatpush1.bf16.msra.mxu0 %v2127
    %2536 = vmatprep.subr.bf16.mxu0 %v2133
    %2537 = vmatpush1.bf16.msra.mxu0 %v2132
    %2538 = vmatprep.subr.bf16.mxu0 %v2138
    %2539 = vmatpush1.bf16.msra.mxu0 %v2137
    %2540 = vmatprep.subr.bf16.mxu0 %v2143
    %2541 = vmatpush1.bf16.msra.mxu0 %v2142
    %2542 = vmatprep.subr.bf16.mxu0 %v2148
    %2543 = vmatpush1.bf16.msra.mxu0 %v2147
    %2544 = vmatprep.subr.bf16.mxu0 %v2153
    %2545 = vmatpush1.bf16.msra.mxu0 %v2152
    %2546 = vmatprep.subr.bf16.mxu0 %v2158
    %2547 = vmatpush1.bf16.msra.mxu0 %v2157
    %2548 = vmatprep.subr.bf16.mxu0 %v2163
    %2549 = vmatpush1.bf16.msra.mxu0 %v2162
    %2550 = vmatprep.subr.bf16.mxu0 %v2168
    %2551 = vmatpush1.bf16.msra.mxu0 %v2167
    %2552 = vmatprep.subr.bf16.mxu0 %v2173
    %2553 = vmatpush1.bf16.msra.mxu0 %v2172
    %2554 = vmatprep.mubr.bf16.mxu0 %v677
    %2555 = vmatmul.mubr.bf16.gmra.mrb[0].mxu0 %v676
    %v2556 = vpop.f32.mrb[0].mxu0
    %v2557 = vadd.f32 %v2516, %v2556
    %v2558 = vpop.f32.mrb[0].mxu0
    %v2559 = vadd.f32 %v2518, %v2558
    %v2560 = vpop.f32.mrb[0].mxu0
    %v2561 = vpop.f32.mrb[0].mxu0
    %2562 = vdwg.mxu0
    %2563 = vmatprep.subr.bf16.mxu0 %v2178
    %2564 = vmatpush1.bf16.msra.mxu0 %v2177
    %2565 = vmatprep.subr.bf16.mxu0 %v2183
    %2566 = vmatpush1.bf16.msra.mxu0 %v2182
    %2567 = vmatprep.subr.bf16.mxu0 0
    %2568 = vmatpush1.bf16.msra.mxu0 0
    %2569 = vmatprep.subr.bf16.mxu0 0
    %2570 = vmatpush1.bf16.msra.mxu0 0
    %2571 = vmatprep.subr.bf16.mxu0 0
    %2572 = vmatpush1.bf16.msra.mxu0 0
    %2573 = vmatprep.subr.bf16.mxu0 0
    %2574 = vmatpush1.bf16.msra.mxu0 0
    %2575 = vmatprep.subr.bf16.mxu0 0
    %2576 = vmatpush1.bf16.msra.mxu0 0
    %2577 = vmatprep.subr.bf16.mxu0 0
    %2578 = vmatpush1.bf16.msra.mxu0 0
    %2579 = vmatprep.subr.bf16.mxu0 0
    %2580 = vmatpush1.bf16.msra.mxu0 0
    %2581 = vmatprep.subr.bf16.mxu0 0
    %2582 = vmatpush1.bf16.msra.mxu0 0
    %2583 = vmatprep.subr.bf16.mxu0 0
    %2584 = vmatpush1.bf16.msra.mxu0 0
    %2585 = vmatprep.subr.bf16.mxu0 0
    %2586 = vmatpush1.bf16.msra.mxu0 0
    %2587 = vmatprep.subr.bf16.mxu0 0
    %2588 = vmatpush1.bf16.msra.mxu0 0
    %2589 = vmatprep.subr.bf16.mxu0 0
    %2590 = vmatpush1.bf16.msra.mxu0 0
    %2591 = vmatprep.subr.bf16.mxu0 0
    %2592 = vmatpush1.bf16.msra.mxu0 0
    %2593 = vmatprep.subr.bf16.mxu0 0
    %2594 = vmatpush1.bf16.msra.mxu0 0
    %2595 = vmatprep.mubr.bf16.mxu0 0
    %2596 = vmatmul.mubr.bf16.gmra.mrb[0].mxu0 %v2438
    %v2597 = vpop.f32.mrb[0].mxu0
    %v2598 = vadd.f32 %v2557, %v2597
    %v2599 = vpop.f32.mrb[0].mxu0
    %v2600 = vadd.f32 %v2559, %v2599
    %v2601 = vpop.f32.mrb[0].mxu0
    %v2602 = vpop.f32.mrb[0].mxu0
    %2603 = vdwg.mxu0
    %2604 = vmatprep.subr.bf16.mxu0 %v1940
    %2605 = vmatpush1.bf16.msra.mxu0 %v1939
    %2606 = vmatprep.subr.bf16.mxu0 %v1945
    %2607 = vmatpush1.bf16.msra.mxu0 %v1944
    %2608 = vmatprep.subr.bf16.mxu0 %v1950
    %2609 = vmatpush1.bf16.msra.mxu0 %v1949
    %2610 = vmatprep.subr.bf16.mxu0 %v1955
    %2611 = vmatpush1.bf16.msra.mxu0 %v1954
    %2612 = vmatprep.subr.bf16.mxu0 %v1960
    %2613 = vmatpush1.bf16.msra.mxu0 %v1959
    %2614 = vmatprep.subr.bf16.mxu0 %v1965
    %2615 = vmatpush1.bf16.msra.mxu0 %v1964
    %2616 = vmatprep.subr.bf16.mxu0 %v1970
    %2617 = vmatpush1.bf16.msra.mxu0 %v1969
    %2618 = vmatprep.subr.bf16.mxu0 %v1975
    %2619 = vmatpush1.bf16.msra.mxu0 %v1974
    %2620 = vmatprep.subr.bf16.mxu0 %v1980
    %2621 = vmatpush1.bf16.msra.mxu0 %v1979
    %2622 = vmatprep.subr.bf16.mxu0 %v1985
    %2623 = vmatpush1.bf16.msra.mxu0 %v1984
    %2624 = vmatprep.subr.bf16.mxu0 %v1990
    %2625 = vmatpush1.bf16.msra.mxu0 %v1989
    %2626 = vmatprep.subr.bf16.mxu0 %v1995
    %2627 = vmatpush1.bf16.msra.mxu0 %v1994
    %2628 = vmatprep.subr.bf16.mxu0 %v2000
    %2629 = vmatpush1.bf16.msra.mxu0 %v1999
    %2630 = vmatprep.subr.bf16.mxu0 %v2005
    %2631 = vmatpush1.bf16.msra.mxu0 %v2004
    %2632 = vmatprep.subr.bf16.mxu0 %v2010
    %2633 = vmatpush1.bf16.msra.mxu0 %v2009
    %2634 = vmatprep.subr.bf16.mxu0 %v2015
    %2635 = vmatpush1.bf16.msra.mxu0 %v2014
    %2636 = vmatprep.mubr.bf16.mxu0 %v673
    %2637 = vmatmul.mubr.bf16.gmra.mrb[0].mxu0 %v672
    %v2638 = vpop.f32.mrb[0].mxu0
    %v2639 = vadd.f32 %v1091, %v2638
    %v2640 = vpop.f32.mrb[0].mxu0
    %v2641 = vadd.f32 %v1093, %v2640
    %v2642 = vpop.f32.mrb[0].mxu0
    %v2643 = vpop.f32.mrb[0].mxu0
    %2644 = vdwg.mxu0
    %2645 = vmatprep.subr.bf16.mxu0 %v2020
    %2646 = vmatpush1.bf16.msra.mxu0 %v2019
    %2647 = vmatprep.subr.bf16.mxu0 %v2025
    %2648 = vmatpush1.bf16.msra.mxu0 %v2024
    %2649 = vmatprep.subr.bf16.mxu0 %v2030
    %2650 = vmatpush1.bf16.msra.mxu0 %v2029
    %2651 = vmatprep.subr.bf16.mxu0 %v2035
    %2652 = vmatpush1.bf16.msra.mxu0 %v2034
    %2653 = vmatprep.subr.bf16.mxu0 %v2040
    %2654 = vmatpush1.bf16.msra.mxu0 %v2039
    %2655 = vmatprep.subr.bf16.mxu0 %v2045
    %2656 = vmatpush1.bf16.msra.mxu0 %v2044
    %2657 = vmatprep.subr.bf16.mxu0 %v2050
    %2658 = vmatpush1.bf16.msra.mxu0 %v2049
    %2659 = vmatprep.subr.bf16.mxu0 %v2055
    %2660 = vmatpush1.bf16.msra.mxu0 %v2054
    %2661 = vmatprep.subr.bf16.mxu0 %v2060
    %2662 = vmatpush1.bf16.msra.mxu0 %v2059
    %2663 = vmatprep.subr.bf16.mxu0 %v2065
    %2664 = vmatpush1.bf16.msra.mxu0 %v2064
    %2665 = vmatprep.subr.bf16.mxu0 %v2070
    %2666 = vmatpush1.bf16.msra.mxu0 %v2069
    %2667 = vmatprep.subr.bf16.mxu0 %v2075
    %2668 = vmatpush1.bf16.msra.mxu0 %v2074
    %2669 = vmatprep.subr.bf16.mxu0 %v2080
    %2670 = vmatpush1.bf16.msra.mxu0 %v2079
    %2671 = vmatprep.subr.bf16.mxu0 %v2085
    %2672 = vmatpush1.bf16.msra.mxu0 %v2084
    %2673 = vmatprep.subr.bf16.mxu0 %v2090
    %2674 = vmatpush1.bf16.msra.mxu0 %v2089
    %2675 = vmatprep.subr.bf16.mxu0 %v2095
    %2676 = vmatpush1.bf16.msra.mxu0 %v2094
    %2677 = vmatprep.mubr.bf16.mxu0 %v675
    %2678 = vmatmul.mubr.bf16.gmra.mrb[0].mxu0 %v674
    %v2679 = vpop.f32.mrb[0].mxu0
    %v2680 = vadd.f32 %v2639, %v2679
    %v2681 = vpop.f32.mrb[0].mxu0
    %v2682 = vadd.f32 %v2641, %v2681
    %v2683 = vpop.f32.mrb[0].mxu0
    %v2684 = vpop.f32.mrb[0].mxu0
    %2685 = vdwg.mxu0
    %2686 = vmatprep.subr.bf16.mxu0 %v2100
    %2687 = vmatpush1.bf16.msra.mxu0 %v2099
    %2688 = vmatprep.subr.bf16.mxu0 %v2105
    %2689 = vmatpush1.bf16.msra.mxu0 %v2104
    %2690 = vmatprep.subr.bf16.mxu0 %v2110
    %2691 = vmatpush1.bf16.msra.mxu0 %v2109
    %2692 = vmatprep.subr.bf16.mxu0 %v2115
    %2693 = vmatpush1.bf16.msra.mxu0 %v2114
    %2694 = vmatprep.subr.bf16.mxu0 %v2120
    %2695 = vmatpush1.bf16.msra.mxu0 %v2119
    %2696 = vmatprep.subr.bf16.mxu0 %v2125
    %2697 = vmatpush1.bf16.msra.mxu0 %v2124
    %2698 = vmatprep.subr.bf16.mxu0 %v2130
    %2699 = vmatpush1.bf16.msra.mxu0 %v2129
    %2700 = vmatprep.subr.bf16.mxu0 %v2135
    %2701 = vmatpush1.bf16.msra.mxu0 %v2134
    %2702 = vmatprep.subr.bf16.mxu0 %v2140
    %2703 = vmatpush1.bf16.msra.mxu0 %v2139
    %2704 = vmatprep.subr.bf16.mxu0 %v2145
    %2705 = vmatpush1.bf16.msra.mxu0 %v2144
    %2706 = vmatprep.subr.bf16.mxu0 %v2150
    %2707 = vmatpush1.bf16.msra.mxu0 %v2149
    %2708 = vmatprep.subr.bf16.mxu0 %v2155
    %2709 = vmatpush1.bf16.msra.mxu0 %v2154
    %2710 = vmatprep.subr.bf16.mxu0 %v2160
    %2711 = vmatpush1.bf16.msra.mxu0 %v2159
    %2712 = vmatprep.subr.bf16.mxu0 %v2165
    %2713 = vmatpush1.bf16.msra.mxu0 %v2164
    %2714 = vmatprep.subr.bf16.mxu0 %v2170
    %2715 = vmatpush1.bf16.msra.mxu0 %v2169
    %2716 = vmatprep.subr.bf16.mxu0 %v2175
    %2717 = vmatpush1.bf16.msra.mxu0 %v2174
    %2718 = vmatprep.mubr.bf16.mxu0 %v677
    %2719 = vmatmul.mubr.bf16.gmra.mrb[0].mxu0 %v676
    %v2720 = vpop.f32.mrb[0].mxu0
    %v2721 = vadd.f32 %v2680, %v2720
    %v2722 = vpop.f32.mrb[0].mxu0
    %v2723 = vadd.f32 %v2682, %v2722
    %v2724 = vpop.f32.mrb[0].mxu0
    %v2725 = vpop.f32.mrb[0].mxu0
    %2726 = vdwg.mxu0
    %2727 = vmatprep.subr.bf16.mxu0 %v2180
    %2728 = vmatpush1.bf16.msra.mxu0 %v2179
    %2729 = vmatprep.subr.bf16.mxu0 %v2185
    %2730 = vmatpush1.bf16.msra.mxu0 %v2184
    %2731 = vmatprep.subr.bf16.mxu0 0
    %2732 = vmatpush1.bf16.msra.mxu0 0
    %2733 = vmatprep.subr.bf16.mxu0 0
    %2734 = vmatpush1.bf16.msra.mxu0 0
    %2735 = vmatprep.subr.bf16.mxu0 0
    %2736 = vmatpush1.bf16.msra.mxu0 0
    %2737 = vmatprep.subr.bf16.mxu0 0
    %2738 = vmatpush1.bf16.msra.mxu0 0
    %2739 = vmatprep.subr.bf16.mxu0 0
    %2740 = vmatpush1.bf16.msra.mxu0 0
    %2741 = vmatprep.subr.bf16.mxu0 0
    %2742 = vmatpush1.bf16.msra.mxu0 0
    %2743 = vmatprep.subr.bf16.mxu0 0
    %2744 = vmatpush1.bf16.msra.mxu0 0
    %2745 = vmatprep.subr.bf16.mxu0 0
    %2746 = vmatpush1.bf16.msra.mxu0 0
    %2747 = vmatprep.subr.bf16.mxu0 0
    %2748 = vmatpush1.bf16.msra.mxu0 0
    %2749 = vmatprep.subr.bf16.mxu0 0
    %2750 = vmatpush1.bf16.msra.mxu0 0
    %2751 = vmatprep.subr.bf16.mxu0 0
    %2752 = vmatpush1.bf16.msra.mxu0 0
    %2753 = vmatprep.subr.bf16.mxu0 0
    %2754 = vmatpush1.bf16.msra.mxu0 0
    %2755 = vmatprep.subr.bf16.mxu0 0
    %2756 = vmatpush1.bf16.msra.mxu0 0
    %2757 = vmatprep.subr.bf16.mxu0 0
    %2758 = vmatpush1.bf16.msra.mxu0 0
    %2759 = vmatprep.mubr.bf16.mxu0 0
    %2760 = vmatmul.mubr.bf16.gmra.mrb[0].mxu0 %v2438
    %v2761 = vpop.f32.mrb[0].mxu0
    %v2762 = vadd.f32 %v2721, %v2761
    %v2763 = vpop.f32.mrb[0].mxu0
    %v2764 = vadd.f32 %v2723, %v2763
    %v2765 = vpop.f32.mrb[0].mxu0
    %v2766 = vpop.f32.mrb[0].mxu0
    %2767 = vdwg.mxu0
    %2768 = vmatprep.subr.bf16.mxu0 0
    %2769 = vmatpush1.bf16.msra.mxu0 %v1941
    %2770 = vmatprep.subr.bf16.mxu0 0
    %2771 = vmatpush1.bf16.msra.mxu0 %v1946
    %2772 = vmatprep.subr.bf16.mxu0 0
    %2773 = vmatpush1.bf16.msra.mxu0 %v1951
    %2774 = vmatprep.subr.bf16.mxu0 0
    %2775 = vmatpush1.bf16.msra.mxu0 %v1956
    %2776 = vmatprep.subr.bf16.mxu0 0
    %2777 = vmatpush1.bf16.msra.mxu0 %v1961
    %2778 = vmatprep.subr.bf16.mxu0 0
    %2779 = vmatpush1.bf16.msra.mxu0 %v1966
    %2780 = vmatprep.subr.bf16.mxu0 0
    %2781 = vmatpush1.bf16.msra.mxu0 %v1971
    %2782 = vmatprep.subr.bf16.mxu0 0
    %2783 = vmatpush1.bf16.msra.mxu0 %v1976
    %2784 = vmatprep.subr.bf16.mxu0 0
    %2785 = vmatpush1.bf16.msra.mxu0 %v1981
    %2786 = vmatprep.subr.bf16.mxu0 0
    %2787 = vmatpush1.bf16.msra.mxu0 %v1986
    %2788 = vmatprep.subr.bf16.mxu0 0
    %2789 = vmatpush1.bf16.msra.mxu0 %v1991
    %2790 = vmatprep.subr.bf16.mxu0 0
    %2791 = vmatpush1.bf16.msra.mxu0 %v1996
    %2792 = vmatprep.subr.bf16.mxu0 0
    %2793 = vmatpush1.bf16.msra.mxu0 %v2001
    %2794 = vmatprep.subr.bf16.mxu0 0
    %2795 = vmatpush1.bf16.msra.mxu0 %v2006
    %2796 = vmatprep.subr.bf16.mxu0 0
    %2797 = vmatpush1.bf16.msra.mxu0 %v2011
    %2798 = vmatprep.subr.bf16.mxu0 0
    %2799 = vmatpush1.bf16.msra.mxu0 %v2016
    %2800 = vmatprep.mubr.bf16.mxu0 %v673
    %2801 = vmatmul.mubr.bf16.gmra.mrb[0].mxu0 %v672
    %v2802 = vpop.f32.mrb[0].mxu0
    %v2803 = vadd.f32 %v1132, %v2802
    %v2804 = vpop.f32.mrb[0].mxu0
    %v2805 = vpop.f32.mrb[0].mxu0
    %v2806 = vpop.f32.mrb[0].mxu0
    %2807 = vdwg.mxu0
    %2808 = vmatprep.subr.bf16.mxu0 0
    %2809 = vmatpush1.bf16.msra.mxu0 %v2021
    %2810 = vmatprep.subr.bf16.mxu0 0
    %2811 = vmatpush1.bf16.msra.mxu0 %v2026
    %2812 = vmatprep.subr.bf16.mxu0 0
    %2813 = vmatpush1.bf16.msra.mxu0 %v2031
    %2814 = vmatprep.subr.bf16.mxu0 0
    %2815 = vmatpush1.bf16.msra.mxu0 %v2036
    %2816 = vmatprep.subr.bf16.mxu0 0
    %2817 = vmatpush1.bf16.msra.mxu0 %v2041
    %2818 = vmatprep.subr.bf16.mxu0 0
    %2819 = vmatpush1.bf16.msra.mxu0 %v2046
    %2820 = vmatprep.subr.bf16.mxu0 0
    %2821 = vmatpush1.bf16.msra.mxu0 %v2051
    %2822 = vmatprep.subr.bf16.mxu0 0
    %2823 = vmatpush1.bf16.msra.mxu0 %v2056
    %2824 = vmatprep.subr.bf16.mxu0 0
    %2825 = vmatpush1.bf16.msra.mxu0 %v2061
    %2826 = vmatprep.subr.bf16.mxu0 0
    %2827 = vmatpush1.bf16.msra.mxu0 %v2066
    %2828 = vmatprep.subr.bf16.mxu0 0
    %2829 = vmatpush1.bf16.msra.mxu0 %v2071
    %2830 = vmatprep.subr.bf16.mxu0 0
    %2831 = vmatpush1.bf16.msra.mxu0 %v2076
    %2832 = vmatprep.subr.bf16.mxu0 0
    %2833 = vmatpush1.bf16.msra.mxu0 %v2081
    %2834 = vmatprep.subr.bf16.mxu0 0
    %2835 = vmatpush1.bf16.msra.mxu0 %v2086
    %2836 = vmatprep.subr.bf16.mxu0 0
    %2837 = vmatpush1.bf16.msra.mxu0 %v2091
    %2838 = vmatprep.subr.bf16.mxu0 0
    %2839 = vmatpush1.bf16.msra.mxu0 %v2096
    %2840 = vmatprep.mubr.bf16.mxu0 %v675
    %2841 = vmatmul.mubr.bf16.gmra.mrb[0].mxu0 %v674
    %v2842 = vpop.f32.mrb[0].mxu0
    %v2843 = vadd.f32 %v2803, %v2842
    %v2844 = vpop.f32.mrb[0].mxu0
    %v2845 = vpop.f32.mrb[0].mxu0
    %v2846 = vpop.f32.mrb[0].mxu0
    %2847 = vdwg.mxu0
    %2848 = vmatprep.subr.bf16.mxu0 0
    %2849 = vmatpush1.bf16.msra.mxu0 %v2101
    %2850 = vmatprep.subr.bf16.mxu0 0
    %2851 = vmatpush1.bf16.msra.mxu0 %v2106
    %2852 = vmatprep.subr.bf16.mxu0 0
    %2853 = vmatpush1.bf16.msra.mxu0 %v2111
    %2854 = vmatprep.subr.bf16.mxu0 0
    %2855 = vmatpush1.bf16.msra.mxu0 %v2116
    %2856 = vmatprep.subr.bf16.mxu0 0
    %2857 = vmatpush1.bf16.msra.mxu0 %v2121
    %2858 = vmatprep.subr.bf16.mxu0 0
    %2859 = vmatpush1.bf16.msra.mxu0 %v2126
    %2860 = vmatprep.subr.bf16.mxu0 0
    %2861 = vmatpush1.bf16.msra.mxu0 %v2131
    %2862 = vmatprep.subr.bf16.mxu0 0
    %2863 = vmatpush1.bf16.msra.mxu0 %v2136
    %2864 = vmatprep.subr.bf16.mxu0 0
    %2865 = vmatpush1.bf16.msra.mxu0 %v2141
    %2866 = vmatprep.subr.bf16.mxu0 0
    %2867 = vmatpush1.bf16.msra.mxu0 %v2146
    %2868 = vmatprep.subr.bf16.mxu0 0
    %2869 = vmatpush1.bf16.msra.mxu0 %v2151
    %2870 = vmatprep.subr.bf16.mxu0 0
    %2871 = vmatpush1.bf16.msra.mxu0 %v2156
    %2872 = vmatprep.subr.bf16.mxu0 0
    %2873 = vmatpush1.bf16.msra.mxu0 %v2161
    %2874 = vmatprep.subr.bf16.mxu0 0
    %2875 = vmatpush1.bf16.msra.mxu0 %v2166
    %2876 = vmatprep.subr.bf16.mxu0 0
    %2877 = vmatpush1.bf16.msra.mxu0 %v2171
    %2878 = vmatprep.subr.bf16.mxu0 0
    %2879 = vmatpush1.bf16.msra.mxu0 %v2176
    %2880 = vmatprep.mubr.bf16.mxu0 %v677
    %2881 = vmatmul.mubr.bf16.gmra.mrb[0].mxu0 %v676
    %v2882 = vpop.f32.mrb[0].mxu0
    %v2883 = vadd.f32 %v2843, %v2882
    %v2884 = vpop.f32.mrb[0].mxu0
    %v2885 = vpop.f32.mrb[0].mxu0
    %v2886 = vpop.f32.mrb[0].mxu0
    %2887 = vdwg.mxu0
    %2888 = vmatprep.subr.bf16.mxu0 0
    %2889 = vmatpush1.bf16.msra.mxu0 %v2181
    %2890 = vmatprep.subr.bf16.mxu0 0
    %2891 = vmatpush1.bf16.msra.mxu0 %v2186
    %2892 = vmatprep.subr.bf16.mxu0 0
    %2893 = vmatpush1.bf16.msra.mxu0 0
    %2894 = vmatprep.subr.bf16.mxu0 0
    %2895 = vmatpush1.bf16.msra.mxu0 0
    %2896 = vmatprep.subr.bf16.mxu0 0
    %2897 = vmatpush1.bf16.msra.mxu0 0
    %2898 = vmatprep.subr.bf16.mxu0 0
    %2899 = vmatpush1.bf16.msra.mxu0 0
    %2900 = vmatprep.subr.bf16.mxu0 0
    %2901 = vmatpush1.bf16.msra.mxu0 0
    %2902 = vmatprep.subr.bf16.mxu0 0
    %2903 = vmatpush1.bf16.msra.mxu0 0
    %2904 = vmatprep.subr.bf16.mxu0 0
    %2905 = vmatpush1.bf16.msra.mxu0 0
    %2906 = vmatprep.subr.bf16.mxu0 0
    %2907 = vmatpush1.bf16.msra.mxu0 0
    %2908 = vmatprep.subr.bf16.mxu0 0
    %2909 = vmatpush1.bf16.msra.mxu0 0
    %2910 = vmatprep.subr.bf16.mxu0 0
    %2911 = vmatpush1.bf16.msra.mxu0 0
    %2912 = vmatprep.subr.bf16.mxu0 0
    %2913 = vmatpush1.bf16.msra.mxu0 0
    %2914 = vmatprep.subr.bf16.mxu0 0
    %2915 = vmatpush1.bf16.msra.mxu0 0
    %2916 = vmatprep.subr.bf16.mxu0 0
    %2917 = vmatpush1.bf16.msra.mxu0 0
    %2918 = vmatprep.subr.bf16.mxu0 0
    %2919 = vmatpush1.bf16.msra.mxu0 0
    %2920 = vmatprep.mubr.bf16.mxu0 0
    %2921 = vmatmul.mubr.bf16.gmra.mrb[0].mxu0 %v2438
    %v2922 = vpop.f32.mrb[0].mxu0
    %v2923 = vadd.f32 %v2883, %v2922
    %v2924 = vpop.f32.mrb[0].mxu0
    %v2925 = vpop.f32.mrb[0].mxu0
    %v2926 = vpop.f32.mrb[0].mxu0
    %2927 = vdwg.mxu0
    %v2928 = vld [vmem:[%s6] sm:$0x1f]
    %v2930 = vlaneseq
    %v2931 = vshrl.u32 %v2930, 7
    %v2932 = vsub.s32 0, %v2931
    %v2933 = vrot.slane %v2928, %v2932
    %v2934 = vlaneseq
    %v2935 = vshrl.u32 %v2934, 7
    %v2936 = vsub.s32 1, %v2935
    %v2937 = vrot.slane %v2928, %v2936
    %v2938 = vlaneseq
    %v2939 = vshrl.u32 %v2938, 7
    %v2940 = vsub.s32 2, %v2939
    %v2941 = vrot.slane %v2928, %v2940
    %v2942 = vlaneseq
    %v2943 = vshrl.u32 %v2942, 7
    %v2944 = vsub.s32 3, %v2943
    %v2945 = vrot.slane %v2928, %v2944
    %v2946 = vlaneseq
    %v2947 = vshrl.u32 %v2946, 7
    %v2948 = vsub.s32 4, %v2947
    %v2949 = vrot.slane %v2928, %v2948
    %v2955 = vadd.f32 %v2598, %v2933
    %v2956 = vadd.f32 %v2600, %v2937
    %v2957 = vadd.f32 %v2762, %v2941
    %v2958 = vadd.f32 %v2764, %v2945
    %v2959 = vadd.f32 %v2923, %v2949
    %v2960 = vmax.f32 %v2955, 0.0
    %v2961 = vmax.f32 %v2956, 0.0
    %v2962 = vmax.f32 %v2957, 0.0
    %v2963 = vmax.f32 %v2958, 0.0
    %v2964 = vmax.f32 %v2959, 0.0
    %v2965 = vld [vmem:[%s10] sm:$0x1f]
    %v2967 = vlaneseq
    %v2968 = vshrl.u32 %v2967, 7
    %v2969 = vsub.s32 0, %v2968
    %v2970 = vrot.slane %v2965, %v2969
    %v2971 = vlaneseq
    %v2972 = vshrl.u32 %v2971, 7
    %v2973 = vsub.s32 1, %v2972
    %v2974 = vrot.slane %v2965, %v2973
    %v2975 = vlaneseq
    %v2976 = vshrl.u32 %v2975, 7
    %v2977 = vsub.s32 2, %v2976
    %v2978 = vrot.slane %v2965, %v2977
    %v2979 = vlaneseq
    %v2980 = vshrl.u32 %v2979, 7
    %v2981 = vsub.s32 3, %v2980
    %v2982 = vrot.slane %v2965, %v2981
    %v2983 = vlaneseq
    %v2984 = vshrl.u32 %v2983, 7
    %v2985 = vsub.s32 4, %v2984
    %v2986 = vrot.slane %v2965, %v2985
    %v2992 = vmul.f32 %v2960, %v2970
    %v2993 = vmul.f32 %v2961, %v2974
    %v2994 = vmul.f32 %v2962, %v2978
    %v2995 = vmul.f32 %v2963, %v2982
    %v2996 = vmul.f32 %v2964, %v2986
    %v2997 = vadd.f32 %v2992, %v2993
    %v2998 = vadd.f32 %v2997, %v2994
    %v2999 = vadd.f32 %v2998, %v2995
    %v3000 = vadd.f32 %v2999, %v2996
    %3001 = vadd.xlane.f32.xlu0 %v3000
    %v3002 = vpop.xlane.xlu0 %3001
    %v3003 = vpack.c.bf16 %v665, %v665
    %v3004 = vpack.c.bf16 %v666, %v666
    %v3005 = vpack.c.bf16 %v667, %v667
    %v3006 = vpack.c.bf16 %v668, %v668
    %v3007 = vpack.c.bf16 %v669, %v669
    %v3008 = vpack.c.bf16 %v670, %v670
    %v3009 = vpack.c.bf16 %v671, %v671
    %v3010 = vld [vmem:[#allocation7] sm:$0xff]
    %v3011 = vld [vmem:[#allocation7 + $0x8] sm:$0xff]
    %v3012 = vld [vmem:[#allocation7 + $0x10] sm:$0xf]
    %v3013 = vld [vmem:[#allocation7 + $0x14] sm:$0xff]
    %v3014 = vld [vmem:[#allocation7 + $0x1c] sm:$0xff]
    %v3015 = vld [vmem:[#allocation7 + $0x24] sm:$0xf]
    %v3016 = vld [vmem:[#allocation7 + $0x28] sm:$0xff]
    %v3017 = vld [vmem:[#allocation7 + $0x30] sm:$0xff]
    %v3018 = vld [vmem:[#allocation7 + $0x38] sm:$0xf]
    %v3019 = vld [vmem:[#allocation7 + $0x3c] sm:$0xff]
    %v3020 = vld [vmem:[#allocation7 + $0x44] sm:$0xff]
    %v3021 = vld [vmem:[#allocation7 + $0x4c] sm:$0xf]
    %v3022 = vld [vmem:[#allocation7 + $0x50] sm:$0xff]
    %v3023 = vld [vmem:[#allocation7 + $0x58] sm:$0xff]
    %v3024 = vld [vmem:[#allocation7 + $0x60] sm:$0xf]
    %v3025 = vld [vmem:[#allocation7 + $0x64] sm:$0xff]
    %v3026 = vld [vmem:[#allocation7 + $0x6c] sm:$0xff]
    %v3027 = vld [vmem:[#allocation7 + $0x74] sm:$0xf]
    %v3028 = vld [vmem:[#allocation7 + $0x78] sm:$0xff]
    %v3029 = vld [vmem:[#allocation7 + $0x80] sm:$0xff]
    %v3030 = vld [vmem:[#allocation7 + $0x88] sm:$0xf]
    %v3031 = vld [vmem:[#allocation7 + $0x8c] sm:$0xff]
    %v3032 = vld [vmem:[#allocation7 + $0x94] sm:$0xff]
    %v3033 = vld [vmem:[#allocation7 + $0x9c] sm:$0xf]
    %v3034 = vld [vmem:[#allocation7 + $0xa0] sm:$0xff]
    %v3035 = vld [vmem:[#allocation7 + $0xa8] sm:$0xff]
    %v3036 = vld [vmem:[#allocation7 + $0xb0] sm:$0xf]
    %v3037 = vld [vmem:[#allocation7 + $0xb4] sm:$0xff]
    %v3038 = vld [vmem:[#allocation7 + $0xbc] sm:$0xff]
    %v3039 = vld [vmem:[#allocation7 + $0xc4] sm:$0xf]
    %v3040 = vld [vmem:[#allocation7 + $0xc8] sm:$0xff]
    %v3041 = vld [vmem:[#allocation7 + $0xd0] sm:$0xff]
    %v3042 = vld [vmem:[#allocation7 + $0xd8] sm:$0xf]
    %v3043 = vld [vmem:[#allocation7 + $0xdc] sm:$0xff]
    %v3044 = vld [vmem:[#allocation7 + $0xe4] sm:$0xff]
    %v3045 = vld [vmem:[#allocation7 + $0xec] sm:$0xf]
    %v3046 = vld [vmem:[#allocation7 + $0xf0] sm:$0xff]
    %v3047 = vld [vmem:[#allocation7 + $0xf8] sm:$0xff]
    %v3048 = vld [vmem:[#allocation7 + $0x100] sm:$0xf]
    %v3049 = vld [vmem:[#allocation7 + $0x104] sm:$0xff]
    %v3050 = vld [vmem:[#allocation7 + $0x10c] sm:$0xff]
    %v3051 = vld [vmem:[#allocation7 + $0x114] sm:$0xf]
    %v3052 = vld [vmem:[#allocation7 + $0x118] sm:$0xff]
    %v3053 = vld [vmem:[#allocation7 + $0x120] sm:$0xff]
    %v3054 = vld [vmem:[#allocation7 + $0x128] sm:$0xf]
    %v3055 = vld [vmem:[#allocation7 + $0x12c] sm:$0xff]
    %v3056 = vld [vmem:[#allocation7 + $0x134] sm:$0xff]
    %v3057 = vld [vmem:[#allocation7 + $0x13c] sm:$0xf]
    %v3058 = vld [vmem:[#allocation7 + $0x140] sm:$0xff]
    %v3059 = vld [vmem:[#allocation7 + $0x148] sm:$0xff]
    %v3060 = vld [vmem:[#allocation7 + $0x150] sm:$0xf]
    %v3061 = vld [vmem:[#allocation7 + $0x154] sm:$0xff]
    %v3062 = vld [vmem:[#allocation7 + $0x15c] sm:$0xff]
    %v3063 = vld [vmem:[#allocation7 + $0x164] sm:$0xf]
    %v3064 = vld [vmem:[#allocation7 + $0x168] sm:$0xff]
    %v3065 = vld [vmem:[#allocation7 + $0x170] sm:$0xff]
    %v3066 = vld [vmem:[#allocation7 + $0x178] sm:$0xf]
    %v3067 = vld [vmem:[#allocation7 + $0x17c] sm:$0xff]
    %v3068 = vld [vmem:[#allocation7 + $0x184] sm:$0xff]
    %v3069 = vld [vmem:[#allocation7 + $0x18c] sm:$0xf]
    %v3070 = vld [vmem:[#allocation7 + $0x190] sm:$0xff]
    %v3071 = vld [vmem:[#allocation7 + $0x198] sm:$0xff]
    %v3072 = vld [vmem:[#allocation7 + $0x1a0] sm:$0xf]
    %v3073 = vld [vmem:[#allocation7 + $0x1a4] sm:$0xff]
    %v3074 = vld [vmem:[#allocation7 + $0x1ac] sm:$0xff]
    %v3075 = vld [vmem:[#allocation7 + $0x1b4] sm:$0xf]
    %v3076 = vld [vmem:[#allocation7 + $0x1b8] sm:$0xff]
    %v3077 = vld [vmem:[#allocation7 + $0x1c0] sm:$0xff]
    %v3078 = vld [vmem:[#allocation7 + $0x1c8] sm:$0xf]
    %v3079 = vld [vmem:[#allocation7 + $0x1cc] sm:$0xff]
    %v3080 = vld [vmem:[#allocation7 + $0x1d4] sm:$0xff]
    %v3081 = vld [vmem:[#allocation7 + $0x1dc] sm:$0xf]
    %v3082 = vld [vmem:[#allocation7 + $0x1e0] sm:$0xff]
    %v3083 = vld [vmem:[#allocation7 + $0x1e8] sm:$0xff]
    %v3084 = vld [vmem:[#allocation7 + $0x1f0] sm:$0xf]
    %v3085 = vld [vmem:[#allocation7 + $0x1f4] sm:$0xff]
    %v3086 = vld [vmem:[#allocation7 + $0x1fc] sm:$0xff]
    %v3087 = vld [vmem:[#allocation7 + $0x204] sm:$0xf]
    %v3088 = vld [vmem:[#allocation7 + $0x208] sm:$0xff]
    %v3089 = vld [vmem:[#allocation7 + $0x210] sm:$0xff]
    %v3090 = vld [vmem:[#allocation7 + $0x218] sm:$0xf]
    %v3091 = vld [vmem:[#allocation7 + $0x21c] sm:$0xff]
    %v3092 = vld [vmem:[#allocation7 + $0x224] sm:$0xff]
    %v3093 = vld [vmem:[#allocation7 + $0x22c] sm:$0xf]
    %v3094 = vld [vmem:[#allocation7 + $0x230] sm:$0xff]
    %v3095 = vld [vmem:[#allocation7 + $0x238] sm:$0xff]
    %v3096 = vld [vmem:[#allocation7 + $0x240] sm:$0xf]
    %v3097 = vld [vmem:[#allocation7 + $0x244] sm:$0xff]
    %v3098 = vld [vmem:[#allocation7 + $0x24c] sm:$0xff]
    %v3099 = vld [vmem:[#allocation7 + $0x254] sm:$0xf]
    %v3100 = vld [vmem:[#allocation7 + $0x258] sm:$0xff]
    %v3101 = vld [vmem:[#allocation7 + $0x260] sm:$0xff]
    %v3102 = vld [vmem:[#allocation7 + $0x268] sm:$0xf]
    %v3103 = vld [vmem:[#allocation7 + $0x26c] sm:$0xff]
    %v3104 = vld [vmem:[#allocation7 + $0x274] sm:$0xff]
    %v3105 = vld [vmem:[#allocation7 + $0x27c] sm:$0xf]
    %v3106 = vld [vmem:[#allocation7 + $0x280] sm:$0xff]
    %v3107 = vld [vmem:[#allocation7 + $0x288] sm:$0xff]
    %v3108 = vld [vmem:[#allocation7 + $0x290] sm:$0xf]
    %v3109 = vld [vmem:[#allocation7 + $0x294] sm:$0xff]
    %v3110 = vld [vmem:[#allocation7 + $0x29c] sm:$0xff]
    %v3111 = vld [vmem:[#allocation7 + $0x2a4] sm:$0xf]
    %v3112 = vld [vmem:[#allocation7 + $0x2a8] sm:$0xff]
    %v3113 = vld [vmem:[#allocation7 + $0x2b0] sm:$0xff]
    %v3114 = vld [vmem:[#allocation7 + $0x2b8] sm:$0xf]
    %v3115 = vld [vmem:[#allocation7 + $0x2bc] sm:$0xff]
    %v3116 = vld [vmem:[#allocation7 + $0x2c4] sm:$0xff]
    %v3117 = vld [vmem:[#allocation7 + $0x2cc] sm:$0xf]
    %v3118 = vld [vmem:[#allocation7 + $0x2d0] sm:$0xff]
    %v3119 = vld [vmem:[#allocation7 + $0x2d8] sm:$0xff]
    %v3120 = vld [vmem:[#allocation7 + $0x2e0] sm:$0xf]
    %v3121 = vld [vmem:[#allocation7 + $0x2e4] sm:$0xff]
    %v3122 = vld [vmem:[#allocation7 + $0x2ec] sm:$0xff]
    %v3123 = vld [vmem:[#allocation7 + $0x2f4] sm:$0xf]
    %v3124 = vld [vmem:[#allocation7 + $0x2f8] sm:$0xff]
    %v3125 = vld [vmem:[#allocation7 + $0x300] sm:$0xff]
    %v3126 = vld [vmem:[#allocation7 + $0x308] sm:$0xf]
    %v3127 = vld [vmem:[#allocation7 + $0x30c] sm:$0xff]
    %v3128 = vld [vmem:[#allocation7 + $0x314] sm:$0xff]
    %v3129 = vld [vmem:[#allocation7 + $0x31c] sm:$0xf]
    %v3130 = vld [vmem:[#allocation7 + $0x320] sm:$0xff]
    %v3131 = vld [vmem:[#allocation7 + $0x328] sm:$0xff]
    %v3132 = vld [vmem:[#allocation7 + $0x330] sm:$0xf]
    %v3133 = vld [vmem:[#allocation7 + $0x334] sm:$0xff]
    %v3134 = vld [vmem:[#allocation7 + $0x33c] sm:$0xff]
    %v3135 = vld [vmem:[#allocation7 + $0x344] sm:$0xf]
    %v3136 = vld [vmem:[#allocation7 + $0x348] sm:$0xff]
    %v3137 = vld [vmem:[#allocation7 + $0x350] sm:$0xff]
    %v3138 = vld [vmem:[#allocation7 + $0x358] sm:$0xf]
    %v3139 = vld [vmem:[#allocation7 + $0x35c] sm:$0xff]
    %v3140 = vld [vmem:[#allocation7 + $0x364] sm:$0xff]
    %v3141 = vld [vmem:[#allocation7 + $0x36c] sm:$0xf]
    %v3142 = vld [vmem:[#allocation7 + $0x370] sm:$0xff]
    %v3143 = vld [vmem:[#allocation7 + $0x378] sm:$0xff]
    %v3144 = vld [vmem:[#allocation7 + $0x380] sm:$0xf]
    %v3145 = vld [vmem:[#allocation7 + $0x384] sm:$0xff]
    %v3146 = vld [vmem:[#allocation7 + $0x38c] sm:$0xff]
    %v3147 = vld [vmem:[#allocation7 + $0x394] sm:$0xf]
    %v3148 = vld [vmem:[#allocation7 + $0x398] sm:$0xff]
    %v3149 = vld [vmem:[#allocation7 + $0x3a0] sm:$0xff]
    %v3150 = vld [vmem:[#allocation7 + $0x3a8] sm:$0xf]
    %v3151 = vld [vmem:[#allocation7 + $0x3ac] sm:$0xff]
    %v3152 = vld [vmem:[#allocation7 + $0x3b4] sm:$0xff]
    %v3153 = vld [vmem:[#allocation7 + $0x3bc] sm:$0xf]
    %v3154 = vld [vmem:[#allocation7 + $0x3c0] sm:$0xff]
    %v3155 = vld [vmem:[#allocation7 + $0x3c8] sm:$0xff]
    %v3156 = vld [vmem:[#allocation7 + $0x3d0] sm:$0xf]
    %v3157 = vld [vmem:[#allocation7 + $0x3d4] sm:$0xff]
    %v3158 = vld [vmem:[#allocation7 + $0x3dc] sm:$0xff]
    %v3159 = vld [vmem:[#allocation7 + $0x3e4] sm:$0xf]
    %v3160 = vld [vmem:[#allocation7 + $0x3e8] sm:$0xff]
    %v3161 = vld [vmem:[#allocation7 + $0x3f0] sm:$0xff]
    %v3162 = vld [vmem:[#allocation7 + $0x3f8] sm:$0xf]
    %v3163 = vld [vmem:[#allocation7 + $0x3fc] sm:$0xff]
    %v3164 = vld [vmem:[#allocation7 + $0x404] sm:$0xff]
    %v3165 = vld [vmem:[#allocation7 + $0x40c] sm:$0xf]
    %v3166 = vld [vmem:[#allocation7 + $0x410] sm:$0xff]
    %v3167 = vld [vmem:[#allocation7 + $0x418] sm:$0xff]
    %v3168 = vld [vmem:[#allocation7 + $0x420] sm:$0xf]
    %v3169 = vld [vmem:[#allocation7 + $0x424] sm:$0xff]
    %v3170 = vld [vmem:[#allocation7 + $0x42c] sm:$0xff]
    %v3171 = vld [vmem:[#allocation7 + $0x434] sm:$0xf]
    %v3172 = vld [vmem:[#allocation7 + $0x438] sm:$0xff]
    %v3173 = vld [vmem:[#allocation7 + $0x440] sm:$0xff]
    %v3174 = vld [vmem:[#allocation7 + $0x448] sm:$0xf]
    %v3175 = vld [vmem:[#allocation7 + $0x44c] sm:$0xff]
    %v3176 = vld [vmem:[#allocation7 + $0x454] sm:$0xff]
    %v3177 = vld [vmem:[#allocation7 + $0x45c] sm:$0xf]
    %v3178 = vld [vmem:[#allocation7 + $0x460] sm:$0xff]
    %v3179 = vld [vmem:[#allocation7 + $0x468] sm:$0xff]
    %v3180 = vld [vmem:[#allocation7 + $0x470] sm:$0xf]
    %v3181 = vld [vmem:[#allocation7 + $0x474] sm:$0xff]
    %v3182 = vld [vmem:[#allocation7 + $0x47c] sm:$0xff]
    %v3183 = vld [vmem:[#allocation7 + $0x484] sm:$0xf]
    %v3184 = vld [vmem:[#allocation7 + $0x488] sm:$0xff]
    %v3185 = vld [vmem:[#allocation7 + $0x490] sm:$0xff]
    %v3186 = vld [vmem:[#allocation7 + $0x498] sm:$0xf]
    %v3187 = vld [vmem:[#allocation7 + $0x49c] sm:$0xff]
    %v3188 = vld [vmem:[#allocation7 + $0x4a4] sm:$0xff]
    %v3189 = vld [vmem:[#allocation7 + $0x4ac] sm:$0xf]
    %v3190 = vld [vmem:[#allocation7 + $0x4b0] sm:$0xff]
    %v3191 = vld [vmem:[#allocation7 + $0x4b8] sm:$0xff]
    %v3192 = vld [vmem:[#allocation7 + $0x4c0] sm:$0xf]
    %v3193 = vld [vmem:[#allocation7 + $0x4c4] sm:$0xff]
    %v3194 = vld [vmem:[#allocation7 + $0x4cc] sm:$0xff]
    %v3195 = vld [vmem:[#allocation7 + $0x4d4] sm:$0xf]
    %v3196 = vld [vmem:[#allocation7 + $0x4d8] sm:$0xff]
    %v3197 = vld [vmem:[#allocation7 + $0x4e0] sm:$0xff]
    %v3198 = vld [vmem:[#allocation7 + $0x4e8] sm:$0xf]
    %v3199 = vld [vmem:[#allocation7 + $0x4ec] sm:$0xff]
    %v3200 = vld [vmem:[#allocation7 + $0x4f4] sm:$0xff]
    %v3201 = vld [vmem:[#allocation7 + $0x4fc] sm:$0xf]
    %v3202 = vld [vmem:[#allocation7 + $0x500] sm:$0xff]
    %v3203 = vld [vmem:[#allocation7 + $0x508] sm:$0xff]
    %v3204 = vld [vmem:[#allocation7 + $0x510] sm:$0xf]
    %v3205 = vld [vmem:[#allocation7 + $0x514] sm:$0xff]
    %v3206 = vld [vmem:[#allocation7 + $0x51c] sm:$0xff]
    %v3207 = vld [vmem:[#allocation7 + $0x524] sm:$0xf]
    %v3208 = vld [vmem:[#allocation7 + $0x528] sm:$0xff]
    %v3209 = vld [vmem:[#allocation7 + $0x530] sm:$0xff]
    %v3210 = vld [vmem:[#allocation7 + $0x538] sm:$0xf]
    %v3211 = vld [vmem:[#allocation7 + $0x53c] sm:$0xff]
    %v3212 = vld [vmem:[#allocation7 + $0x544] sm:$0xff]
    %v3213 = vld [vmem:[#allocation7 + $0x54c] sm:$0xf]
    %v3214 = vld [vmem:[#allocation7 + $0x550] sm:$0xff]
    %v3215 = vld [vmem:[#allocation7 + $0x558] sm:$0xff]
    %v3216 = vld [vmem:[#allocation7 + $0x560] sm:$0xf]
    %v3217 = vld [vmem:[#allocation7 + $0x564] sm:$0xff]
    %v3218 = vld [vmem:[#allocation7 + $0x56c] sm:$0xff]
    %v3219 = vld [vmem:[#allocation7 + $0x574] sm:$0xf]
    %v3220 = vld [vmem:[#allocation7 + $0x578] sm:$0xff]
    %v3221 = vld [vmem:[#allocation7 + $0x580] sm:$0xff]
    %v3222 = vld [vmem:[#allocation7 + $0x588] sm:$0xf]
    %v3223 = vld [vmem:[#allocation7 + $0x58c] sm:$0xff]
    %v3224 = vld [vmem:[#allocation7 + $0x594] sm:$0xff]
    %v3225 = vld [vmem:[#allocation7 + $0x59c] sm:$0xf]
    %v3226 = vld [vmem:[#allocation7 + $0x5a0] sm:$0xff]
    %v3227 = vld [vmem:[#allocation7 + $0x5a8] sm:$0xff]
    %v3228 = vld [vmem:[#allocation7 + $0x5b0] sm:$0xf]
    %v3229 = vld [vmem:[#allocation7 + $0x5b4] sm:$0xff]
    %v3230 = vld [vmem:[#allocation7 + $0x5bc] sm:$0xff]
    %v3231 = vld [vmem:[#allocation7 + $0x5c4] sm:$0xf]
    %v3232 = vld [vmem:[#allocation7 + $0x5c8] sm:$0xff]
    %v3233 = vld [vmem:[#allocation7 + $0x5d0] sm:$0xff]
    %v3234 = vld [vmem:[#allocation7 + $0x5d8] sm:$0xf]
    %v3235 = vld [vmem:[#allocation7 + $0x5dc] sm:$0xff]
    %v3236 = vld [vmem:[#allocation7 + $0x5e4] sm:$0xff]
    %v3237 = vld [vmem:[#allocation7 + $0x5ec] sm:$0xf]
    %v3238 = vld [vmem:[#allocation7 + $0x5f0] sm:$0xff]
    %v3239 = vld [vmem:[#allocation7 + $0x5f8] sm:$0xff]
    %v3240 = vld [vmem:[#allocation7 + $0x600] sm:$0xf]
    %v3241 = vld [vmem:[#allocation7 + $0x604] sm:$0xff]
    %v3242 = vld [vmem:[#allocation7 + $0x60c] sm:$0xff]
    %v3243 = vld [vmem:[#allocation7 + $0x614] sm:$0xf]
    %v3244 = vld [vmem:[#allocation7 + $0x618] sm:$0xff]
    %v3245 = vld [vmem:[#allocation7 + $0x620] sm:$0xff]
    %v3246 = vld [vmem:[#allocation7 + $0x628] sm:$0xf]
    %v3247 = vld [vmem:[#allocation7 + $0x62c] sm:$0xff]
    %v3248 = vld [vmem:[#allocation7 + $0x634] sm:$0xff]
    %v3249 = vld [vmem:[#allocation7 + $0x63c] sm:$0xf]
    %v3250 = vld [vmem:[#allocation7 + $0x640] sm:$0xff]
    %v3251 = vld [vmem:[#allocation7 + $0x648] sm:$0xff]
    %v3252 = vld [vmem:[#allocation7 + $0x650] sm:$0xf]
    %v3253 = vld [vmem:[#allocation7 + $0x654] sm:$0xff]
    %v3254 = vld [vmem:[#allocation7 + $0x65c] sm:$0xff]
    %v3255 = vld [vmem:[#allocation7 + $0x664] sm:$0xf]
    %v3256 = vld [vmem:[#allocation7 + $0x668] sm:$0xff]
    %v3257 = vld [vmem:[#allocation7 + $0x670] sm:$0xff]
    %v3258 = vld [vmem:[#allocation7 + $0x678] sm:$0xf]
    %v3259 = vld [vmem:[#allocation7 + $0x67c] sm:$0xff]
    %v3260 = vld [vmem:[#allocation7 + $0x684] sm:$0xff]
    %v3261 = vld [vmem:[#allocation7 + $0x68c] sm:$0xf]
    %v3262 = vld [vmem:[#allocation7 + $0x690] sm:$0xff]
    %v3263 = vld [vmem:[#allocation7 + $0x698] sm:$0xff]
    %v3264 = vld [vmem:[#allocation7 + $0x6a0] sm:$0xf]
    %v3265 = vld [vmem:[#allocation7 + $0x6a4] sm:$0xff]
    %v3266 = vld [vmem:[#allocation7 + $0x6ac] sm:$0xff]
    %v3267 = vld [vmem:[#allocation7 + $0x6b4] sm:$0xf]
    %v3268 = vld [vmem:[#allocation7 + $0x6b8] sm:$0xff]
    %v3269 = vld [vmem:[#allocation7 + $0x6c0] sm:$0xff]
    %v3270 = vld [vmem:[#allocation7 + $0x6c8] sm:$0xf]
    %v3271 = vld [vmem:[#allocation7 + $0x6cc] sm:$0xff]
    %v3272 = vld [vmem:[#allocation7 + $0x6d4] sm:$0xff]
    %v3273 = vld [vmem:[#allocation7 + $0x6dc] sm:$0xf]
    %v3274 = vld [vmem:[#allocation7 + $0x6e0] sm:$0xff]
    %v3275 = vld [vmem:[#allocation7 + $0x6e8] sm:$0xff]
    %v3276 = vld [vmem:[#allocation7 + $0x6f0] sm:$0xf]
    %v3277 = vld [vmem:[#allocation7 + $0x6f4] sm:$0xff]
    %v3278 = vld [vmem:[#allocation7 + $0x6fc] sm:$0xff]
    %v3279 = vld [vmem:[#allocation7 + $0x704] sm:$0xf]
    %v3280 = vld [vmem:[#allocation7 + $0x708] sm:$0xff]
    %v3281 = vld [vmem:[#allocation7 + $0x710] sm:$0xff]
    %v3282 = vld [vmem:[#allocation7 + $0x718] sm:$0xf]
    %v3283 = vld [vmem:[#allocation7 + $0x71c] sm:$0xff]
    %v3284 = vld [vmem:[#allocation7 + $0x724] sm:$0xff]
    %v3285 = vld [vmem:[#allocation7 + $0x72c] sm:$0xf]
    %v3286 = vld [vmem:[#allocation7 + $0x730] sm:$0xff]
    %v3287 = vld [vmem:[#allocation7 + $0x738] sm:$0xff]
    %v3288 = vld [vmem:[#allocation7 + $0x740] sm:$0xf]
    %v3289 = vld [vmem:[#allocation7 + $0x744] sm:$0xff]
    %v3290 = vld [vmem:[#allocation7 + $0x74c] sm:$0xff]
    %v3291 = vld [vmem:[#allocation7 + $0x754] sm:$0xf]
    %v3292 = vld [vmem:[#allocation7 + $0x758] sm:$0xff]
    %v3293 = vld [vmem:[#allocation7 + $0x760] sm:$0xff]
    %v3294 = vld [vmem:[#allocation7 + $0x768] sm:$0xf]
    %v3295 = vld [vmem:[#allocation7 + $0x76c] sm:$0xff]
    %v3296 = vld [vmem:[#allocation7 + $0x774] sm:$0xff]
    %v3297 = vld [vmem:[#allocation7 + $0x77c] sm:$0xf]
    %v3298 = vld [vmem:[#allocation7 + $0x780] sm:$0xff]
    %v3299 = vld [vmem:[#allocation7 + $0x788] sm:$0xff]
    %v3300 = vld [vmem:[#allocation7 + $0x790] sm:$0xf]
    %v3301 = vld [vmem:[#allocation7 + $0x794] sm:$0xff]
    %v3302 = vld [vmem:[#allocation7 + $0x79c] sm:$0xff]
    %v3303 = vld [vmem:[#allocation7 + $0x7a4] sm:$0xf]
    %v3304 = vld [vmem:[#allocation7 + $0x7a8] sm:$0xff]
    %v3305 = vld [vmem:[#allocation7 + $0x7b0] sm:$0xff]
    %v3306 = vld [vmem:[#allocation7 + $0x7b8] sm:$0xf]
    %v3307 = vld [vmem:[#allocation7 + $0x7bc] sm:$0xff]
    %v3308 = vld [vmem:[#allocation7 + $0x7c4] sm:$0xff]
    %v3309 = vld [vmem:[#allocation7 + $0x7cc] sm:$0xf]
    %v3310 = vld [vmem:[#allocation9] sm:$0xff]
    %v3311 = vld [vmem:[#allocation9 + $0x8] sm:$0xff]
    %v3312 = vld [vmem:[#allocation9 + $0x10] sm:$0xf]
    %v3313 = vld [vmem:[#allocation9 + $0x14] sm:$0xff]
    %v3314 = vld [vmem:[#allocation9 + $0x1c] sm:$0xff]
    %v3315 = vld [vmem:[#allocation9 + $0x24] sm:$0xf]
    %v3322 = vunpack.c.l.b16 %v3310
    %v3323 = vunpack.c.h.b16 %v3310
    %v3324 = vunpack.c.l.b16 %v3311
    %v3325 = vunpack.c.h.b16 %v3311
    %v3326 = vunpack.c.l.b16 %v3312
    %v3327 = vunpack.c.l.b16 %v3313
    %v3328 = vunpack.c.h.b16 %v3313
    %v3329 = vunpack.c.l.b16 %v3314
    %v3330 = vunpack.c.h.b16 %v3314
    %v3331 = vunpack.c.l.b16 %v3315
    %v3332 = vpack.c.b16 %v3327, %v3322
    %v3333 = vpack.c.b16 %v3328, %v3323
    %v3334 = vpack.c.b16 %v3329, %v3324
    %v3335 = vpack.c.b16 %v3330, %v3325
    %v3336 = vpack.c.b16 %v3331, %v3326
    %3342 = vmatprep.subr.bf16.mxu0 %v3333
    %3343 = vmatpush1.bf16.msra.mxu0 %v3332
    %3344 = vmatprep.subr.bf16.mxu0 0
    %3345 = vmatpush1.bf16.msra.mxu0 0
    %3346 = vmatprep.subr.bf16.mxu0 0
    %3347 = vmatpush1.bf16.msra.mxu0 0
    %3348 = vmatprep.subr.bf16.mxu0 0
    %3349 = vmatpush1.bf16.msra.mxu0 0
    %3350 = vmatprep.subr.bf16.mxu0 0
    %3351 = vmatpush1.bf16.msra.mxu0 0
    %3352 = vmatprep.subr.bf16.mxu0 0
    %3353 = vmatpush1.bf16.msra.mxu0 0
    %3354 = vmatprep.subr.bf16.mxu0 0
    %3355 = vmatpush1.bf16.msra.mxu0 0
    %3356 = vmatprep.subr.bf16.mxu0 0
    %3357 = vmatpush1.bf16.msra.mxu0 0
    %3358 = vmatprep.subr.bf16.mxu0 0
    %3359 = vmatpush1.bf16.msra.mxu0 0
    %3360 = vmatprep.subr.bf16.mxu0 0
    %3361 = vmatpush1.bf16.msra.mxu0 0
    %3362 = vmatprep.subr.bf16.mxu0 0
    %3363 = vmatpush1.bf16.msra.mxu0 0
    %3364 = vmatprep.subr.bf16.mxu0 0
    %3365 = vmatpush1.bf16.msra.mxu0 0
    %3366 = vmatprep.subr.bf16.mxu0 0
    %3367 = vmatpush1.bf16.msra.mxu0 0
    %3368 = vmatprep.subr.bf16.mxu0 0
    %3369 = vmatpush1.bf16.msra.mxu0 0
    %3370 = vmatprep.subr.bf16.mxu0 0
    %3371 = vmatpush1.bf16.msra.mxu0 0
    %3372 = vmatprep.subr.bf16.mxu0 0
    %3373 = vmatpush1.bf16.msra.mxu0 0
    %3374 = vmatprep.mubr.bf16.mxu0 0
    %3375 = vmatmul.mubr.bf16.gmra.mrb[0].mxu0 %v1013
    %v3376 = vpop.f32.mrb[0].mxu0
    %v3377 = vadd.f32 0.0, %v3376
    %v3378 = vpop.f32.mrb[0].mxu0
    %v3379 = vadd.f32 0.0, %v3378
    %v3380 = vpop.f32.mrb[0].mxu0
    %v3381 = vpop.f32.mrb[0].mxu0
    %3382 = vdwg.mxu0
    %3383 = vmatprep.subr.bf16.mxu0 %v3335
    %3384 = vmatpush1.bf16.msra.mxu0 %v3334
    %3385 = vmatprep.subr.bf16.mxu0 0
    %3386 = vmatpush1.bf16.msra.mxu0 0
    %3387 = vmatprep.subr.bf16.mxu0 0
    %3388 = vmatpush1.bf16.msra.mxu0 0
    %3389 = vmatprep.subr.bf16.mxu0 0
    %3390 = vmatpush1.bf16.msra.mxu0 0
    %3391 = vmatprep.subr.bf16.mxu0 0
    %3392 = vmatpush1.bf16.msra.mxu0 0
    %3393 = vmatprep.subr.bf16.mxu0 0
    %3394 = vmatpush1.bf16.msra.mxu0 0
    %3395 = vmatprep.subr.bf16.mxu0 0
    %3396 = vmatpush1.bf16.msra.mxu0 0
    %3397 = vmatprep.subr.bf16.mxu0 0
    %3398 = vmatpush1.bf16.msra.mxu0 0
    %3399 = vmatprep.subr.bf16.mxu0 0
    %3400 = vmatpush1.bf16.msra.mxu0 0
    %3401 = vmatprep.subr.bf16.mxu0 0
    %3402 = vmatpush1.bf16.msra.mxu0 0
    %3403 = vmatprep.subr.bf16.mxu0 0
    %3404 = vmatpush1.bf16.msra.mxu0 0
    %3405 = vmatprep.subr.bf16.mxu0 0
    %3406 = vmatpush1.bf16.msra.mxu0 0
    %3407 = vmatprep.subr.bf16.mxu0 0
    %3408 = vmatpush1.bf16.msra.mxu0 0
    %3409 = vmatprep.subr.bf16.mxu0 0
    %3410 = vmatpush1.bf16.msra.mxu0 0
    %3411 = vmatprep.subr.bf16.mxu0 0
    %3412 = vmatpush1.bf16.msra.mxu0 0
    %3413 = vmatprep.subr.bf16.mxu0 0
    %3414 = vmatpush1.bf16.msra.mxu0 0
    %3415 = vmatprep.mubr.bf16.mxu0 0
    %3416 = vmatmul.mubr.bf16.gmra.mrb[0].mxu0 %v1013
    %v3417 = vpop.f32.mrb[0].mxu0
    %v3418 = vadd.f32 0.0, %v3417
    %v3419 = vpop.f32.mrb[0].mxu0
    %v3420 = vadd.f32 0.0, %v3419
    %v3421 = vpop.f32.mrb[0].mxu0
    %v3422 = vpop.f32.mrb[0].mxu0
    %3423 = vdwg.mxu0
    %3424 = vmatprep.subr.bf16.mxu0 0
    %3425 = vmatpush1.bf16.msra.mxu0 %v3336
    %3426 = vmatprep.subr.bf16.mxu0 0
    %3427 = vmatpush1.bf16.msra.mxu0 0
    %3428 = vmatprep.subr.bf16.mxu0 0
    %3429 = vmatpush1.bf16.msra.mxu0 0
    %3430 = vmatprep.subr.bf16.mxu0 0
    %3431 = vmatpush1.bf16.msra.mxu0 0
    %3432 = vmatprep.subr.bf16.mxu0 0
    %3433 = vmatpush1.bf16.msra.mxu0 0
    %3434 = vmatprep.subr.bf16.mxu0 0
    %3435 = vmatpush1.bf16.msra.mxu0 0
    %3436 = vmatprep.subr.bf16.mxu0 0
    %3437 = vmatpush1.bf16.msra.mxu0 0
    %3438 = vmatprep.subr.bf16.mxu0 0
    %3439 = vmatpush1.bf16.msra.mxu0 0
    %3440 = vmatprep.subr.bf16.mxu0 0
    %3441 = vmatpush1.bf16.msra.mxu0 0
    %3442 = vmatprep.subr.bf16.mxu0 0
    %3443 = vmatpush1.bf16.msra.mxu0 0
    %3444 = vmatprep.subr.bf16.mxu0 0
    %3445 = vmatpush1.bf16.msra.mxu0 0
    %3446 = vmatprep.subr.bf16.mxu0 0
    %3447 = vmatpush1.bf16.msra.mxu0 0
    %3448 = vmatprep.subr.bf16.mxu0 0
    %3449 = vmatpush1.bf16.msra.mxu0 0
    %3450 = vmatprep.subr.bf16.mxu0 0
    %3451 = vmatpush1.bf16.msra.mxu0 0
    %3452 = vmatprep.subr.bf16.mxu0 0
    %3453 = vmatpush1.bf16.msra.mxu0 0
    %3454 = vmatprep.subr.bf16.mxu0 0
    %3455 = vmatpush1.bf16.msra.mxu0 0
    %3456 = vmatprep.mubr.bf16.mxu0 0
    %3457 = vmatmul.mubr.bf16.gmra.mrb[0].mxu0 %v1013
    %v3458 = vpop.f32.mrb[0].mxu0
    %v3459 = vadd.f32 0.0, %v3458
    %v3460 = vpop.f32.mrb[0].mxu0
    %v3461 = vpop.f32.mrb[0].mxu0
    %v3462 = vpop.f32.mrb[0].mxu0
    %3463 = vdwg.mxu0
    %v3764 = vunpack.c.l.b16 %v3010
    %v3765 = vunpack.c.h.b16 %v3010
    %v3766 = vunpack.c.l.b16 %v3011
    %v3767 = vunpack.c.h.b16 %v3011
    %v3768 = vunpack.c.l.b16 %v3012
    %v3769 = vunpack.c.l.b16 %v3013
    %v3770 = vunpack.c.h.b16 %v3013
    %v3771 = vunpack.c.l.b16 %v3014
    %v3772 = vunpack.c.h.b16 %v3014
    %v3773 = vunpack.c.l.b16 %v3015
    %v3774 = vunpack.c.l.b16 %v3016
    %v3775 = vunpack.c.h.b16 %v3016
    %v3776 = vunpack.c.l.b16 %v3017
    %v3777 = vunpack.c.h.b16 %v3017
    %v3778 = vunpack.c.l.b16 %v3018
    %v3779 = vunpack.c.l.b16 %v3019
    %v3780 = vunpack.c.h.b16 %v3019
    %v3781 = vunpack.c.l.b16 %v3020
    %v3782 = vunpack.c.h.b16 %v3020
    %v3783 = vunpack.c.l.b16 %v3021
    %v3784 = vunpack.c.l.b16 %v3022
    %v3785 = vunpack.c.h.b16 %v3022
    %v3786 = vunpack.c.l.b16 %v3023
    %v3787 = vunpack.c.h.b16 %v3023
    %v3788 = vunpack.c.l.b16 %v3024
    %v3789 = vunpack.c.l.b16 %v3025
    %v3790 = vunpack.c.h.b16 %v3025
    %v3791 = vunpack.c.l.b16 %v3026
    %v3792 = vunpack.c.h.b16 %v3026
    %v3793 = vunpack.c.l.b16 %v3027
    %v3794 = vunpack.c.l.b16 %v3028
    %v3795 = vunpack.c.h.b16 %v3028
    %v3796 = vunpack.c.l.b16 %v3029
    %v3797 = vunpack.c.h.b16 %v3029
    %v3798 = vunpack.c.l.b16 %v3030
    %v3799 = vunpack.c.l.b16 %v3031
    %v3800 = vunpack.c.h.b16 %v3031
    %v3801 = vunpack.c.l.b16 %v3032
    %v3802 = vunpack.c.h.b16 %v3032
    %v3803 = vunpack.c.l.b16 %v3033
    %v3804 = vunpack.c.l.b16 %v3034
    %v3805 = vunpack.c.h.b16 %v3034
    %v3806 = vunpack.c.l.b16 %v3035
    %v3807 = vunpack.c.h.b16 %v3035
    %v3808 = vunpack.c.l.b16 %v3036
    %v3809 = vunpack.c.l.b16 %v3037
    %v3810 = vunpack.c.h.b16 %v3037
    %v3811 = vunpack.c.l.b16 %v3038
    %v3812 = vunpack.c.h.b16 %v3038
    %v3813 = vunpack.c.l.b16 %v3039
    %v3814 = vunpack.c.l.b16 %v3040
    %v3815 = vunpack.c.h.b16 %v3040
    %v3816 = vunpack.c.l.b16 %v3041
    %v3817 = vunpack.c.h.b16 %v3041
    %v3818 = vunpack.c.l.b16 %v3042
    %v3819 = vunpack.c.l.b16 %v3043
    %v3820 = vunpack.c.h.b16 %v3043
    %v3821 = vunpack.c.l.b16 %v3044
    %v3822 = vunpack.c.h.b16 %v3044
    %v3823 = vunpack.c.l.b16 %v3045
    %v3824 = vunpack.c.l.b16 %v3046
    %v3825 = vunpack.c.h.b16 %v3046
    %v3826 = vunpack.c.l.b16 %v3047
    %v3827 = vunpack.c.h.b16 %v3047
    %v3828 = vunpack.c.l.b16 %v3048
    %v3829 = vunpack.c.l.b16 %v3049
    %v3830 = vunpack.c.h.b16 %v3049
    %v3831 = vunpack.c.l.b16 %v3050
    %v3832 = vunpack.c.h.b16 %v3050
    %v3833 = vunpack.c.l.b16 %v3051
    %v3834 = vunpack.c.l.b16 %v3052
    %v3835 = vunpack.c.h.b16 %v3052
    %v3836 = vunpack.c.l.b16 %v3053
    %v3837 = vunpack.c.h.b16 %v3053
    %v3838 = vunpack.c.l.b16 %v3054
    %v3839 = vunpack.c.l.b16 %v3055
    %v3840 = vunpack.c.h.b16 %v3055
    %v3841 = vunpack.c.l.b16 %v3056
    %v3842 = vunpack.c.h.b16 %v3056
    %v3843 = vunpack.c.l.b16 %v3057
    %v3844 = vunpack.c.l.b16 %v3058
    %v3845 = vunpack.c.h.b16 %v3058
    %v3846 = vunpack.c.l.b16 %v3059
    %v3847 = vunpack.c.h.b16 %v3059
    %v3848 = vunpack.c.l.b16 %v3060
    %v3849 = vunpack.c.l.b16 %v3061
    %v3850 = vunpack.c.h.b16 %v3061
    %v3851 = vunpack.c.l.b16 %v3062
    %v3852 = vunpack.c.h.b16 %v3062
    %v3853 = vunpack.c.l.b16 %v3063
    %v3854 = vunpack.c.l.b16 %v3064
    %v3855 = vunpack.c.h.b16 %v3064
    %v3856 = vunpack.c.l.b16 %v3065
    %v3857 = vunpack.c.h.b16 %v3065
    %v3858 = vunpack.c.l.b16 %v3066
    %v3859 = vunpack.c.l.b16 %v3067
    %v3860 = vunpack.c.h.b16 %v3067
    %v3861 = vunpack.c.l.b16 %v3068
    %v3862 = vunpack.c.h.b16 %v3068
    %v3863 = vunpack.c.l.b16 %v3069
    %v3864 = vunpack.c.l.b16 %v3070
    %v3865 = vunpack.c.h.b16 %v3070
    %v3866 = vunpack.c.l.b16 %v3071
    %v3867 = vunpack.c.h.b16 %v3071
    %v3868 = vunpack.c.l.b16 %v3072
    %v3869 = vunpack.c.l.b16 %v3073
    %v3870 = vunpack.c.h.b16 %v3073
    %v3871 = vunpack.c.l.b16 %v3074
    %v3872 = vunpack.c.h.b16 %v3074
    %v3873 = vunpack.c.l.b16 %v3075
    %v3874 = vunpack.c.l.b16 %v3076
    %v3875 = vunpack.c.h.b16 %v3076
    %v3876 = vunpack.c.l.b16 %v3077
    %v3877 = vunpack.c.h.b16 %v3077
    %v3878 = vunpack.c.l.b16 %v3078
    %v3879 = vunpack.c.l.b16 %v3079
    %v3880 = vunpack.c.h.b16 %v3079
    %v3881 = vunpack.c.l.b16 %v3080
    %v3882 = vunpack.c.h.b16 %v3080
    %v3883 = vunpack.c.l.b16 %v3081
    %v3884 = vunpack.c.l.b16 %v3082
    %v3885 = vunpack.c.h.b16 %v3082
    %v3886 = vunpack.c.l.b16 %v3083
    %v3887 = vunpack.c.h.b16 %v3083
    %v3888 = vunpack.c.l.b16 %v3084
    %v3889 = vunpack.c.l.b16 %v3085
    %v3890 = vunpack.c.h.b16 %v3085
    %v3891 = vunpack.c.l.b16 %v3086
    %v3892 = vunpack.c.h.b16 %v3086
    %v3893 = vunpack.c.l.b16 %v3087
    %v3894 = vunpack.c.l.b16 %v3088
    %v3895 = vunpack.c.h.b16 %v3088
    %v3896 = vunpack.c.l.b16 %v3089
    %v3897 = vunpack.c.h.b16 %v3089
    %v3898 = vunpack.c.l.b16 %v3090
    %v3899 = vunpack.c.l.b16 %v3091
    %v3900 = vunpack.c.h.b16 %v3091
    %v3901 = vunpack.c.l.b16 %v3092
    %v3902 = vunpack.c.h.b16 %v3092
    %v3903 = vunpack.c.l.b16 %v3093
    %v3904 = vunpack.c.l.b16 %v3094
    %v3905 = vunpack.c.h.b16 %v3094
    %v3906 = vunpack.c.l.b16 %v3095
    %v3907 = vunpack.c.h.b16 %v3095
    %v3908 = vunpack.c.l.b16 %v3096
    %v3909 = vunpack.c.l.b16 %v3097
    %v3910 = vunpack.c.h.b16 %v3097
    %v3911 = vunpack.c.l.b16 %v3098
    %v3912 = vunpack.c.h.b16 %v3098
    %v3913 = vunpack.c.l.b16 %v3099
    %v3914 = vunpack.c.l.b16 %v3100
    %v3915 = vunpack.c.h.b16 %v3100
    %v3916 = vunpack.c.l.b16 %v3101
    %v3917 = vunpack.c.h.b16 %v3101
    %v3918 = vunpack.c.l.b16 %v3102
    %v3919 = vunpack.c.l.b16 %v3103
    %v3920 = vunpack.c.h.b16 %v3103
    %v3921 = vunpack.c.l.b16 %v3104
    %v3922 = vunpack.c.h.b16 %v3104
    %v3923 = vunpack.c.l.b16 %v3105
    %v3924 = vunpack.c.l.b16 %v3106
    %v3925 = vunpack.c.h.b16 %v3106
    %v3926 = vunpack.c.l.b16 %v3107
    %v3927 = vunpack.c.h.b16 %v3107
    %v3928 = vunpack.c.l.b16 %v3108
    %v3929 = vunpack.c.l.b16 %v3109
    %v3930 = vunpack.c.h.b16 %v3109
    %v3931 = vunpack.c.l.b16 %v3110
    %v3932 = vunpack.c.h.b16 %v3110
    %v3933 = vunpack.c.l.b16 %v3111
    %v3934 = vunpack.c.l.b16 %v3112
    %v3935 = vunpack.c.h.b16 %v3112
    %v3936 = vunpack.c.l.b16 %v3113
    %v3937 = vunpack.c.h.b16 %v3113
    %v3938 = vunpack.c.l.b16 %v3114
    %v3939 = vunpack.c.l.b16 %v3115
    %v3940 = vunpack.c.h.b16 %v3115
    %v3941 = vunpack.c.l.b16 %v3116
    %v3942 = vunpack.c.h.b16 %v3116
    %v3943 = vunpack.c.l.b16 %v3117
    %v3944 = vunpack.c.l.b16 %v3118
    %v3945 = vunpack.c.h.b16 %v3118
    %v3946 = vunpack.c.l.b16 %v3119
    %v3947 = vunpack.c.h.b16 %v3119
    %v3948 = vunpack.c.l.b16 %v3120
    %v3949 = vunpack.c.l.b16 %v3121
    %v3950 = vunpack.c.h.b16 %v3121
    %v3951 = vunpack.c.l.b16 %v3122
    %v3952 = vunpack.c.h.b16 %v3122
    %v3953 = vunpack.c.l.b16 %v3123
    %v3954 = vunpack.c.l.b16 %v3124
    %v3955 = vunpack.c.h.b16 %v3124
    %v3956 = vunpack.c.l.b16 %v3125
    %v3957 = vunpack.c.h.b16 %v3125
    %v3958 = vunpack.c.l.b16 %v3126
    %v3959 = vunpack.c.l.b16 %v3127
    %v3960 = vunpack.c.h.b16 %v3127
    %v3961 = vunpack.c.l.b16 %v3128
    %v3962 = vunpack.c.h.b16 %v3128
    %v3963 = vunpack.c.l.b16 %v3129
    %v3964 = vunpack.c.l.b16 %v3130
    %v3965 = vunpack.c.h.b16 %v3130
    %v3966 = vunpack.c.l.b16 %v3131
    %v3967 = vunpack.c.h.b16 %v3131
    %v3968 = vunpack.c.l.b16 %v3132
    %v3969 = vunpack.c.l.b16 %v3133
    %v3970 = vunpack.c.h.b16 %v3133
    %v3971 = vunpack.c.l.b16 %v3134
    %v3972 = vunpack.c.h.b16 %v3134
    %v3973 = vunpack.c.l.b16 %v3135
    %v3974 = vunpack.c.l.b16 %v3136
    %v3975 = vunpack.c.h.b16 %v3136
    %v3976 = vunpack.c.l.b16 %v3137
    %v3977 = vunpack.c.h.b16 %v3137
    %v3978 = vunpack.c.l.b16 %v3138
    %v3979 = vunpack.c.l.b16 %v3139
    %v3980 = vunpack.c.h.b16 %v3139
    %v3981 = vunpack.c.l.b16 %v3140
    %v3982 = vunpack.c.h.b16 %v3140
    %v3983 = vunpack.c.l.b16 %v3141
    %v3984 = vunpack.c.l.b16 %v3142
    %v3985 = vunpack.c.h.b16 %v3142
    %v3986 = vunpack.c.l.b16 %v3143
    %v3987 = vunpack.c.h.b16 %v3143
    %v3988 = vunpack.c.l.b16 %v3144
    %v3989 = vunpack.c.l.b16 %v3145
    %v3990 = vunpack.c.h.b16 %v3145
    %v3991 = vunpack.c.l.b16 %v3146
    %v3992 = vunpack.c.h.b16 %v3146
    %v3993 = vunpack.c.l.b16 %v3147
    %v3994 = vunpack.c.l.b16 %v3148
    %v3995 = vunpack.c.h.b16 %v3148
    %v3996 = vunpack.c.l.b16 %v3149
    %v3997 = vunpack.c.h.b16 %v3149
    %v3998 = vunpack.c.l.b16 %v3150
    %v3999 = vunpack.c.l.b16 %v3151
    %v4000 = vunpack.c.h.b16 %v3151
    %v4001 = vunpack.c.l.b16 %v3152
    %v4002 = vunpack.c.h.b16 %v3152
    %v4003 = vunpack.c.l.b16 %v3153
    %v4004 = vunpack.c.l.b16 %v3154
    %v4005 = vunpack.c.h.b16 %v3154
    %v4006 = vunpack.c.l.b16 %v3155
    %v4007 = vunpack.c.h.b16 %v3155
    %v4008 = vunpack.c.l.b16 %v3156
    %v4009 = vunpack.c.l.b16 %v3157
    %v4010 = vunpack.c.h.b16 %v3157
    %v4011 = vunpack.c.l.b16 %v3158
    %v4012 = vunpack.c.h.b16 %v3158
    %v4013 = vunpack.c.l.b16 %v3159
    %v4014 = vunpack.c.l.b16 %v3160
    %v4015 = vunpack.c.h.b16 %v3160
    %v4016 = vunpack.c.l.b16 %v3161
    %v4017 = vunpack.c.h.b16 %v3161
    %v4018 = vunpack.c.l.b16 %v3162
    %v4019 = vunpack.c.l.b16 %v3163
    %v4020 = vunpack.c.h.b16 %v3163
    %v4021 = vunpack.c.l.b16 %v3164
    %v4022 = vunpack.c.h.b16 %v3164
    %v4023 = vunpack.c.l.b16 %v3165
    %v4024 = vunpack.c.l.b16 %v3166
    %v4025 = vunpack.c.h.b16 %v3166
    %v4026 = vunpack.c.l.b16 %v3167
    %v4027 = vunpack.c.h.b16 %v3167
    %v4028 = vunpack.c.l.b16 %v3168
    %v4029 = vunpack.c.l.b16 %v3169
    %v4030 = vunpack.c.h.b16 %v3169
    %v4031 = vunpack.c.l.b16 %v3170
    %v4032 = vunpack.c.h.b16 %v3170
    %v4033 = vunpack.c.l.b16 %v3171
    %v4034 = vunpack.c.l.b16 %v3172
    %v4035 = vunpack.c.h.b16 %v3172
    %v4036 = vunpack.c.l.b16 %v3173
    %v4037 = vunpack.c.h.b16 %v3173
    %v4038 = vunpack.c.l.b16 %v3174
    %v4039 = vunpack.c.l.b16 %v3175
    %v4040 = vunpack.c.h.b16 %v3175
    %v4041 = vunpack.c.l.b16 %v3176
    %v4042 = vunpack.c.h.b16 %v3176
    %v4043 = vunpack.c.l.b16 %v3177
    %v4044 = vunpack.c.l.b16 %v3178
    %v4045 = vunpack.c.h.b16 %v3178
    %v4046 = vunpack.c.l.b16 %v3179
    %v4047 = vunpack.c.h.b16 %v3179
    %v4048 = vunpack.c.l.b16 %v3180
    %v4049 = vunpack.c.l.b16 %v3181
    %v4050 = vunpack.c.h.b16 %v3181
    %v4051 = vunpack.c.l.b16 %v3182
    %v4052 = vunpack.c.h.b16 %v3182
    %v4053 = vunpack.c.l.b16 %v3183
    %v4054 = vunpack.c.l.b16 %v3184
    %v4055 = vunpack.c.h.b16 %v3184
    %v4056 = vunpack.c.l.b16 %v3185
    %v4057 = vunpack.c.h.b16 %v3185
    %v4058 = vunpack.c.l.b16 %v3186
    %v4059 = vunpack.c.l.b16 %v3187
    %v4060 = vunpack.c.h.b16 %v3187
    %v4061 = vunpack.c.l.b16 %v3188
    %v4062 = vunpack.c.h.b16 %v3188
    %v4063 = vunpack.c.l.b16 %v3189
    %v4064 = vunpack.c.l.b16 %v3190
    %v4065 = vunpack.c.h.b16 %v3190
    %v4066 = vunpack.c.l.b16 %v3191
    %v4067 = vunpack.c.h.b16 %v3191
    %v4068 = vunpack.c.l.b16 %v3192
    %v4069 = vunpack.c.l.b16 %v3193
    %v4070 = vunpack.c.h.b16 %v3193
    %v4071 = vunpack.c.l.b16 %v3194
    %v4072 = vunpack.c.h.b16 %v3194
    %v4073 = vunpack.c.l.b16 %v3195
    %v4074 = vunpack.c.l.b16 %v3196
    %v4075 = vunpack.c.h.b16 %v3196
    %v4076 = vunpack.c.l.b16 %v3197
    %v4077 = vunpack.c.h.b16 %v3197
    %v4078 = vunpack.c.l.b16 %v3198
    %v4079 = vunpack.c.l.b16 %v3199
    %v4080 = vunpack.c.h.b16 %v3199
    %v4081 = vunpack.c.l.b16 %v3200
    %v4082 = vunpack.c.h.b16 %v3200
    %v4083 = vunpack.c.l.b16 %v3201
    %v4084 = vunpack.c.l.b16 %v3202
    %v4085 = vunpack.c.h.b16 %v3202
    %v4086 = vunpack.c.l.b16 %v3203
    %v4087 = vunpack.c.h.b16 %v3203
    %v4088 = vunpack.c.l.b16 %v3204
    %v4089 = vunpack.c.l.b16 %v3205
    %v4090 = vunpack.c.h.b16 %v3205
    %v4091 = vunpack.c.l.b16 %v3206
    %v4092 = vunpack.c.h.b16 %v3206
    %v4093 = vunpack.c.l.b16 %v3207
    %v4094 = vunpack.c.l.b16 %v3208
    %v4095 = vunpack.c.h.b16 %v3208
    %v4096 = vunpack.c.l.b16 %v3209
    %v4097 = vunpack.c.h.b16 %v3209
    %v4098 = vunpack.c.l.b16 %v3210
    %v4099 = vunpack.c.l.b16 %v3211
    %v4100 = vunpack.c.h.b16 %v3211
    %v4101 = vunpack.c.l.b16 %v3212
    %v4102 = vunpack.c.h.b16 %v3212
    %v4103 = vunpack.c.l.b16 %v3213
    %v4104 = vunpack.c.l.b16 %v3214
    %v4105 = vunpack.c.h.b16 %v3214
    %v4106 = vunpack.c.l.b16 %v3215
    %v4107 = vunpack.c.h.b16 %v3215
    %v4108 = vunpack.c.l.b16 %v3216
    %v4109 = vunpack.c.l.b16 %v3217
    %v4110 = vunpack.c.h.b16 %v3217
    %v4111 = vunpack.c.l.b16 %v3218
    %v4112 = vunpack.c.h.b16 %v3218
    %v4113 = vunpack.c.l.b16 %v3219
    %v4114 = vunpack.c.l.b16 %v3220
    %v4115 = vunpack.c.h.b16 %v3220
    %v4116 = vunpack.c.l.b16 %v3221
    %v4117 = vunpack.c.h.b16 %v3221
    %v4118 = vunpack.c.l.b16 %v3222
    %v4119 = vunpack.c.l.b16 %v3223
    %v4120 = vunpack.c.h.b16 %v3223
    %v4121 = vunpack.c.l.b16 %v3224
    %v4122 = vunpack.c.h.b16 %v3224
    %v4123 = vunpack.c.l.b16 %v3225
    %v4124 = vunpack.c.l.b16 %v3226
    %v4125 = vunpack.c.h.b16 %v3226
    %v4126 = vunpack.c.l.b16 %v3227
    %v4127 = vunpack.c.h.b16 %v3227
    %v4128 = vunpack.c.l.b16 %v3228
    %v4129 = vunpack.c.l.b16 %v3229
    %v4130 = vunpack.c.h.b16 %v3229
    %v4131 = vunpack.c.l.b16 %v3230
    %v4132 = vunpack.c.h.b16 %v3230
    %v4133 = vunpack.c.l.b16 %v3231
    %v4134 = vunpack.c.l.b16 %v3232
    %v4135 = vunpack.c.h.b16 %v3232
    %v4136 = vunpack.c.l.b16 %v3233
    %v4137 = vunpack.c.h.b16 %v3233
    %v4138 = vunpack.c.l.b16 %v3234
    %v4139 = vunpack.c.l.b16 %v3235
    %v4140 = vunpack.c.h.b16 %v3235
    %v4141 = vunpack.c.l.b16 %v3236
    %v4142 = vunpack.c.h.b16 %v3236
    %v4143 = vunpack.c.l.b16 %v3237
    %v4144 = vunpack.c.l.b16 %v3238
    %v4145 = vunpack.c.h.b16 %v3238
    %v4146 = vunpack.c.l.b16 %v3239
    %v4147 = vunpack.c.h.b16 %v3239
    %v4148 = vunpack.c.l.b16 %v3240
    %v4149 = vunpack.c.l.b16 %v3241
    %v4150 = vunpack.c.h.b16 %v3241
    %v4151 = vunpack.c.l.b16 %v3242
    %v4152 = vunpack.c.h.b16 %v3242
    %v4153 = vunpack.c.l.b16 %v3243
    %v4154 = vunpack.c.l.b16 %v3244
    %v4155 = vunpack.c.h.b16 %v3244
    %v4156 = vunpack.c.l.b16 %v3245
    %v4157 = vunpack.c.h.b16 %v3245
    %v4158 = vunpack.c.l.b16 %v3246
    %v4159 = vunpack.c.l.b16 %v3247
    %v4160 = vunpack.c.h.b16 %v3247
    %v4161 = vunpack.c.l.b16 %v3248
    %v4162 = vunpack.c.h.b16 %v3248
    %v4163 = vunpack.c.l.b16 %v3249
    %v4164 = vunpack.c.l.b16 %v3250
    %v4165 = vunpack.c.h.b16 %v3250
    %v4166 = vunpack.c.l.b16 %v3251
    %v4167 = vunpack.c.h.b16 %v3251
    %v4168 = vunpack.c.l.b16 %v3252
    %v4169 = vunpack.c.l.b16 %v3253
    %v4170 = vunpack.c.h.b16 %v3253
    %v4171 = vunpack.c.l.b16 %v3254
    %v4172 = vunpack.c.h.b16 %v3254
    %v4173 = vunpack.c.l.b16 %v3255
    %v4174 = vunpack.c.l.b16 %v3256
    %v4175 = vunpack.c.h.b16 %v3256
    %v4176 = vunpack.c.l.b16 %v3257
    %v4177 = vunpack.c.h.b16 %v3257
    %v4178 = vunpack.c.l.b16 %v3258
    %v4179 = vunpack.c.l.b16 %v3259
    %v4180 = vunpack.c.h.b16 %v3259
    %v4181 = vunpack.c.l.b16 %v3260
    %v4182 = vunpack.c.h.b16 %v3260
    %v4183 = vunpack.c.l.b16 %v3261
    %v4184 = vunpack.c.l.b16 %v3262
    %v4185 = vunpack.c.h.b16 %v3262
    %v4186 = vunpack.c.l.b16 %v3263
    %v4187 = vunpack.c.h.b16 %v3263
    %v4188 = vunpack.c.l.b16 %v3264
    %v4189 = vunpack.c.l.b16 %v3265
    %v4190 = vunpack.c.h.b16 %v3265
    %v4191 = vunpack.c.l.b16 %v3266
    %v4192 = vunpack.c.h.b16 %v3266
    %v4193 = vunpack.c.l.b16 %v3267
    %v4194 = vunpack.c.l.b16 %v3268
    %v4195 = vunpack.c.h.b16 %v3268
    %v4196 = vunpack.c.l.b16 %v3269
    %v4197 = vunpack.c.h.b16 %v3269
    %v4198 = vunpack.c.l.b16 %v3270
    %v4199 = vunpack.c.l.b16 %v3271
    %v4200 = vunpack.c.h.b16 %v3271
    %v4201 = vunpack.c.l.b16 %v3272
    %v4202 = vunpack.c.h.b16 %v3272
    %v4203 = vunpack.c.l.b16 %v3273
    %v4204 = vunpack.c.l.b16 %v3274
    %v4205 = vunpack.c.h.b16 %v3274
    %v4206 = vunpack.c.l.b16 %v3275
    %v4207 = vunpack.c.h.b16 %v3275
    %v4208 = vunpack.c.l.b16 %v3276
    %v4209 = vunpack.c.l.b16 %v3277
    %v4210 = vunpack.c.h.b16 %v3277
    %v4211 = vunpack.c.l.b16 %v3278
    %v4212 = vunpack.c.h.b16 %v3278
    %v4213 = vunpack.c.l.b16 %v3279
    %v4214 = vunpack.c.l.b16 %v3280
    %v4215 = vunpack.c.h.b16 %v3280
    %v4216 = vunpack.c.l.b16 %v3281
    %v4217 = vunpack.c.h.b16 %v3281
    %v4218 = vunpack.c.l.b16 %v3282
    %v4219 = vunpack.c.l.b16 %v3283
    %v4220 = vunpack.c.h.b16 %v3283
    %v4221 = vunpack.c.l.b16 %v3284
    %v4222 = vunpack.c.h.b16 %v3284
    %v4223 = vunpack.c.l.b16 %v3285
    %v4224 = vunpack.c.l.b16 %v3286
    %v4225 = vunpack.c.h.b16 %v3286
    %v4226 = vunpack.c.l.b16 %v3287
    %v4227 = vunpack.c.h.b16 %v3287
    %v4228 = vunpack.c.l.b16 %v3288
    %v4229 = vunpack.c.l.b16 %v3289
    %v4230 = vunpack.c.h.b16 %v3289
    %v4231 = vunpack.c.l.b16 %v3290
    %v4232 = vunpack.c.h.b16 %v3290
    %v4233 = vunpack.c.l.b16 %v3291
    %v4234 = vunpack.c.l.b16 %v3292
    %v4235 = vunpack.c.h.b16 %v3292
    %v4236 = vunpack.c.l.b16 %v3293
    %v4237 = vunpack.c.h.b16 %v3293
    %v4238 = vunpack.c.l.b16 %v3294
    %v4239 = vunpack.c.l.b16 %v3295
    %v4240 = vunpack.c.h.b16 %v3295
    %v4241 = vunpack.c.l.b16 %v3296
    %v4242 = vunpack.c.h.b16 %v3296
    %v4243 = vunpack.c.l.b16 %v3297
    %v4244 = vunpack.c.l.b16 %v3298
    %v4245 = vunpack.c.h.b16 %v3298
    %v4246 = vunpack.c.l.b16 %v3299
    %v4247 = vunpack.c.h.b16 %v3299
    %v4248 = vunpack.c.l.b16 %v3300
    %v4249 = vunpack.c.l.b16 %v3301
    %v4250 = vunpack.c.h.b16 %v3301
    %v4251 = vunpack.c.l.b16 %v3302
    %v4252 = vunpack.c.h.b16 %v3302
    %v4253 = vunpack.c.l.b16 %v3303
    %v4254 = vunpack.c.l.b16 %v3304
    %v4255 = vunpack.c.h.b16 %v3304
    %v4256 = vunpack.c.l.b16 %v3305
    %v4257 = vunpack.c.h.b16 %v3305
    %v4258 = vunpack.c.l.b16 %v3306
    %v4259 = vunpack.c.l.b16 %v3307
    %v4260 = vunpack.c.h.b16 %v3307
    %v4261 = vunpack.c.l.b16 %v3308
    %v4262 = vunpack.c.h.b16 %v3308
    %v4263 = vunpack.c.l.b16 %v3309
    %v4264 = vpack.c.b16 %v3769, %v3764
    %v4265 = vpack.c.b16 %v3770, %v3765
    %v4266 = vpack.c.b16 %v3771, %v3766
    %v4267 = vpack.c.b16 %v3772, %v3767
    %v4268 = vpack.c.b16 %v3773, %v3768
    %v4269 = vpack.c.b16 %v3779, %v3774
    %v4270 = vpack.c.b16 %v3780, %v3775
    %v4271 = vpack.c.b16 %v3781, %v3776
    %v4272 = vpack.c.b16 %v3782, %v3777
    %v4273 = vpack.c.b16 %v3783, %v3778
    %v4274 = vpack.c.b16 %v3789, %v3784
    %v4275 = vpack.c.b16 %v3790, %v3785
    %v4276 = vpack.c.b16 %v3791, %v3786
    %v4277 = vpack.c.b16 %v3792, %v3787
    %v4278 = vpack.c.b16 %v3793, %v3788
    %v4279 = vpack.c.b16 %v3799, %v3794
    %v4280 = vpack.c.b16 %v3800, %v3795
    %v4281 = vpack.c.b16 %v3801, %v3796
    %v4282 = vpack.c.b16 %v3802, %v3797
    %v4283 = vpack.c.b16 %v3803, %v3798
    %v4284 = vpack.c.b16 %v3809, %v3804
    %v4285 = vpack.c.b16 %v3810, %v3805
    %v4286 = vpack.c.b16 %v3811, %v3806
    %v4287 = vpack.c.b16 %v3812, %v3807
    %v4288 = vpack.c.b16 %v3813, %v3808
    %v4289 = vpack.c.b16 %v3819, %v3814
    %v4290 = vpack.c.b16 %v3820, %v3815
    %v4291 = vpack.c.b16 %v3821, %v3816
    %v4292 = vpack.c.b16 %v3822, %v3817
    %v4293 = vpack.c.b16 %v3823, %v3818
    %v4294 = vpack.c.b16 %v3829, %v3824
    %v4295 = vpack.c.b16 %v3830, %v3825
    %v4296 = vpack.c.b16 %v3831, %v3826
    %v4297 = vpack.c.b16 %v3832, %v3827
    %v4298 = vpack.c.b16 %v3833, %v3828
    %v4299 = vpack.c.b16 %v3839, %v3834
    %v4300 = vpack.c.b16 %v3840, %v3835
    %v4301 = vpack.c.b16 %v3841, %v3836
    %v4302 = vpack.c.b16 %v3842, %v3837
    %v4303 = vpack.c.b16 %v3843, %v3838
    %v4304 = vpack.c.b16 %v3849, %v3844
    %v4305 = vpack.c.b16 %v3850, %v3845
    %v4306 = vpack.c.b16 %v3851, %v3846
    %v4307 = vpack.c.b16 %v3852, %v3847
    %v4308 = vpack.c.b16 %v3853, %v3848
    %v4309 = vpack.c.b16 %v3859, %v3854
    %v4310 = vpack.c.b16 %v3860, %v3855
    %v4311 = vpack.c.b16 %v3861, %v3856
    %v4312 = vpack.c.b16 %v3862, %v3857
    %v4313 = vpack.c.b16 %v3863, %v3858
    %v4314 = vpack.c.b16 %v3869, %v3864
    %v4315 = vpack.c.b16 %v3870, %v3865
    %v4316 = vpack.c.b16 %v3871, %v3866
    %v4317 = vpack.c.b16 %v3872, %v3867
    %v4318 = vpack.c.b16 %v3873, %v3868
    %v4319 = vpack.c.b16 %v3879, %v3874
    %v4320 = vpack.c.b16 %v3880, %v3875
    %v4321 = vpack.c.b16 %v3881, %v3876
    %v4322 = vpack.c.b16 %v3882, %v3877
    %v4323 = vpack.c.b16 %v3883, %v3878
    %v4324 = vpack.c.b16 %v3889, %v3884
    %v4325 = vpack.c.b16 %v3890, %v3885
    %v4326 = vpack.c.b16 %v3891, %v3886
    %v4327 = vpack.c.b16 %v3892, %v3887
    %v4328 = vpack.c.b16 %v3893, %v3888
    %v4329 = vpack.c.b16 %v3899, %v3894
    %v4330 = vpack.c.b16 %v3900, %v3895
    %v4331 = vpack.c.b16 %v3901, %v3896
    %v4332 = vpack.c.b16 %v3902, %v3897
    %v4333 = vpack.c.b16 %v3903, %v3898
    %v4334 = vpack.c.b16 %v3909, %v3904
    %v4335 = vpack.c.b16 %v3910, %v3905
    %v4336 = vpack.c.b16 %v3911, %v3906
    %v4337 = vpack.c.b16 %v3912, %v3907
    %v4338 = vpack.c.b16 %v3913, %v3908
    %v4339 = vpack.c.b16 %v3919, %v3914
    %v4340 = vpack.c.b16 %v3920, %v3915
    %v4341 = vpack.c.b16 %v3921, %v3916
    %v4342 = vpack.c.b16 %v3922, %v3917
    %v4343 = vpack.c.b16 %v3923, %v3918
    %v4344 = vpack.c.b16 %v3929, %v3924
    %v4345 = vpack.c.b16 %v3930, %v3925
    %v4346 = vpack.c.b16 %v3931, %v3926
    %v4347 = vpack.c.b16 %v3932, %v3927
    %v4348 = vpack.c.b16 %v3933, %v3928
    %v4349 = vpack.c.b16 %v3939, %v3934
    %v4350 = vpack.c.b16 %v3940, %v3935
    %v4351 = vpack.c.b16 %v3941, %v3936
    %v4352 = vpack.c.b16 %v3942, %v3937
    %v4353 = vpack.c.b16 %v3943, %v3938
    %v4354 = vpack.c.b16 %v3949, %v3944
    %v4355 = vpack.c.b16 %v3950, %v3945
    %v4356 = vpack.c.b16 %v3951, %v3946
    %v4357 = vpack.c.b16 %v3952, %v3947
    %v4358 = vpack.c.b16 %v3953, %v3948
    %v4359 = vpack.c.b16 %v3959, %v3954
    %v4360 = vpack.c.b16 %v3960, %v3955
    %v4361 = vpack.c.b16 %v3961, %v3956
    %v4362 = vpack.c.b16 %v3962, %v3957
    %v4363 = vpack.c.b16 %v3963, %v3958
    %v4364 = vpack.c.b16 %v3969, %v3964
    %v4365 = vpack.c.b16 %v3970, %v3965
    %v4366 = vpack.c.b16 %v3971, %v3966
    %v4367 = vpack.c.b16 %v3972, %v3967
    %v4368 = vpack.c.b16 %v3973, %v3968
    %v4369 = vpack.c.b16 %v3979, %v3974
    %v4370 = vpack.c.b16 %v3980, %v3975
    %v4371 = vpack.c.b16 %v3981, %v3976
    %v4372 = vpack.c.b16 %v3982, %v3977
    %v4373 = vpack.c.b16 %v3983, %v3978
    %v4374 = vpack.c.b16 %v3989, %v3984
    %v4375 = vpack.c.b16 %v3990, %v3985
    %v4376 = vpack.c.b16 %v3991, %v3986
    %v4377 = vpack.c.b16 %v3992, %v3987
    %v4378 = vpack.c.b16 %v3993, %v3988
    %v4379 = vpack.c.b16 %v3999, %v3994
    %v4380 = vpack.c.b16 %v4000, %v3995
    %v4381 = vpack.c.b16 %v4001, %v3996
    %v4382 = vpack.c.b16 %v4002, %v3997
    %v4383 = vpack.c.b16 %v4003, %v3998
    %v4384 = vpack.c.b16 %v4009, %v4004
    %v4385 = vpack.c.b16 %v4010, %v4005
    %v4386 = vpack.c.b16 %v4011, %v4006
    %v4387 = vpack.c.b16 %v4012, %v4007
    %v4388 = vpack.c.b16 %v4013, %v4008
    %v4389 = vpack.c.b16 %v4019, %v4014
    %v4390 = vpack.c.b16 %v4020, %v4015
    %v4391 = vpack.c.b16 %v4021, %v4016
    %v4392 = vpack.c.b16 %v4022, %v4017
    %v4393 = vpack.c.b16 %v4023, %v4018
    %v4394 = vpack.c.b16 %v4029, %v4024
    %v4395 = vpack.c.b16 %v4030, %v4025
    %v4396 = vpack.c.b16 %v4031, %v4026
    %v4397 = vpack.c.b16 %v4032, %v4027
    %v4398 = vpack.c.b16 %v4033, %v4028
    %v4399 = vpack.c.b16 %v4039, %v4034
    %v4400 = vpack.c.b16 %v4040, %v4035
    %v4401 = vpack.c.b16 %v4041, %v4036
    %v4402 = vpack.c.b16 %v4042, %v4037
    %v4403 = vpack.c.b16 %v4043, %v4038
    %v4404 = vpack.c.b16 %v4049, %v4044
    %v4405 = vpack.c.b16 %v4050, %v4045
    %v4406 = vpack.c.b16 %v4051, %v4046
    %v4407 = vpack.c.b16 %v4052, %v4047
    %v4408 = vpack.c.b16 %v4053, %v4048
    %v4409 = vpack.c.b16 %v4059, %v4054
    %v4410 = vpack.c.b16 %v4060, %v4055
    %v4411 = vpack.c.b16 %v4061, %v4056
    %v4412 = vpack.c.b16 %v4062, %v4057
    %v4413 = vpack.c.b16 %v4063, %v4058
    %v4414 = vpack.c.b16 %v4069, %v4064
    %v4415 = vpack.c.b16 %v4070, %v4065
    %v4416 = vpack.c.b16 %v4071, %v4066
    %v4417 = vpack.c.b16 %v4072, %v4067
    %v4418 = vpack.c.b16 %v4073, %v4068
    %v4419 = vpack.c.b16 %v4079, %v4074
    %v4420 = vpack.c.b16 %v4080, %v4075
    %v4421 = vpack.c.b16 %v4081, %v4076
    %v4422 = vpack.c.b16 %v4082, %v4077
    %v4423 = vpack.c.b16 %v4083, %v4078
    %v4424 = vpack.c.b16 %v4089, %v4084
    %v4425 = vpack.c.b16 %v4090, %v4085
    %v4426 = vpack.c.b16 %v4091, %v4086
    %v4427 = vpack.c.b16 %v4092, %v4087
    %v4428 = vpack.c.b16 %v4093, %v4088
    %v4429 = vpack.c.b16 %v4099, %v4094
    %v4430 = vpack.c.b16 %v4100, %v4095
    %v4431 = vpack.c.b16 %v4101, %v4096
    %v4432 = vpack.c.b16 %v4102, %v4097
    %v4433 = vpack.c.b16 %v4103, %v4098
    %v4434 = vpack.c.b16 %v4109, %v4104
    %v4435 = vpack.c.b16 %v4110, %v4105
    %v4436 = vpack.c.b16 %v4111, %v4106
    %v4437 = vpack.c.b16 %v4112, %v4107
    %v4438 = vpack.c.b16 %v4113, %v4108
    %v4439 = vpack.c.b16 %v4119, %v4114
    %v4440 = vpack.c.b16 %v4120, %v4115
    %v4441 = vpack.c.b16 %v4121, %v4116
    %v4442 = vpack.c.b16 %v4122, %v4117
    %v4443 = vpack.c.b16 %v4123, %v4118
    %v4444 = vpack.c.b16 %v4129, %v4124
    %v4445 = vpack.c.b16 %v4130, %v4125
    %v4446 = vpack.c.b16 %v4131, %v4126
    %v4447 = vpack.c.b16 %v4132, %v4127
    %v4448 = vpack.c.b16 %v4133, %v4128
    %v4449 = vpack.c.b16 %v4139, %v4134
    %v4450 = vpack.c.b16 %v4140, %v4135
    %v4451 = vpack.c.b16 %v4141, %v4136
    %v4452 = vpack.c.b16 %v4142, %v4137
    %v4453 = vpack.c.b16 %v4143, %v4138
    %v4454 = vpack.c.b16 %v4149, %v4144
    %v4455 = vpack.c.b16 %v4150, %v4145
    %v4456 = vpack.c.b16 %v4151, %v4146
    %v4457 = vpack.c.b16 %v4152, %v4147
    %v4458 = vpack.c.b16 %v4153, %v4148
    %v4459 = vpack.c.b16 %v4159, %v4154
    %v4460 = vpack.c.b16 %v4160, %v4155
    %v4461 = vpack.c.b16 %v4161, %v4156
    %v4462 = vpack.c.b16 %v4162, %v4157
    %v4463 = vpack.c.b16 %v4163, %v4158
    %v4464 = vpack.c.b16 %v4169, %v4164
    %v4465 = vpack.c.b16 %v4170, %v4165
    %v4466 = vpack.c.b16 %v4171, %v4166
    %v4467 = vpack.c.b16 %v4172, %v4167
    %v4468 = vpack.c.b16 %v4173, %v4168
    %v4469 = vpack.c.b16 %v4179, %v4174
    %v4470 = vpack.c.b16 %v4180, %v4175
    %v4471 = vpack.c.b16 %v4181, %v4176
    %v4472 = vpack.c.b16 %v4182, %v4177
    %v4473 = vpack.c.b16 %v4183, %v4178
    %v4474 = vpack.c.b16 %v4189, %v4184
    %v4475 = vpack.c.b16 %v4190, %v4185
    %v4476 = vpack.c.b16 %v4191, %v4186
    %v4477 = vpack.c.b16 %v4192, %v4187
    %v4478 = vpack.c.b16 %v4193, %v4188
    %v4479 = vpack.c.b16 %v4199, %v4194
    %v4480 = vpack.c.b16 %v4200, %v4195
    %v4481 = vpack.c.b16 %v4201, %v4196
    %v4482 = vpack.c.b16 %v4202, %v4197
    %v4483 = vpack.c.b16 %v4203, %v4198
    %v4484 = vpack.c.b16 %v4209, %v4204
    %v4485 = vpack.c.b16 %v4210, %v4205
    %v4486 = vpack.c.b16 %v4211, %v4206
    %v4487 = vpack.c.b16 %v4212, %v4207
    %v4488 = vpack.c.b16 %v4213, %v4208
    %v4489 = vpack.c.b16 %v4219, %v4214
    %v4490 = vpack.c.b16 %v4220, %v4215
    %v4491 = vpack.c.b16 %v4221, %v4216
    %v4492 = vpack.c.b16 %v4222, %v4217
    %v4493 = vpack.c.b16 %v4223, %v4218
    %v4494 = vpack.c.b16 %v4229, %v4224
    %v4495 = vpack.c.b16 %v4230, %v4225
    %v4496 = vpack.c.b16 %v4231, %v4226
    %v4497 = vpack.c.b16 %v4232, %v4227
    %v4498 = vpack.c.b16 %v4233, %v4228
    %v4499 = vpack.c.b16 %v4239, %v4234
    %v4500 = vpack.c.b16 %v4240, %v4235
    %v4501 = vpack.c.b16 %v4241, %v4236
    %v4502 = vpack.c.b16 %v4242, %v4237
    %v4503 = vpack.c.b16 %v4243, %v4238
    %v4504 = vpack.c.b16 %v4249, %v4244
    %v4505 = vpack.c.b16 %v4250, %v4245
    %v4506 = vpack.c.b16 %v4251, %v4246
    %v4507 = vpack.c.b16 %v4252, %v4247
    %v4508 = vpack.c.b16 %v4253, %v4248
    %v4509 = vpack.c.b16 %v4259, %v4254
    %v4510 = vpack.c.b16 %v4260, %v4255
    %v4511 = vpack.c.b16 %v4261, %v4256
    %v4512 = vpack.c.b16 %v4262, %v4257
    %v4513 = vpack.c.b16 %v4263, %v4258
    %v4765 = vsel %vm367, %v3009, 0
    %4767 = vmatprep.subr.bf16.mxu0 %v4265
    %4768 = vmatpush1.bf16.msra.mxu0 %v4264
    %4769 = vmatprep.subr.bf16.mxu0 %v4270
    %4770 = vmatpush1.bf16.msra.mxu0 %v4269
    %4771 = vmatprep.subr.bf16.mxu0 %v4275
    %4772 = vmatpush1.bf16.msra.mxu0 %v4274
    %4773 = vmatprep.subr.bf16.mxu0 %v4280
    %4774 = vmatpush1.bf16.msra.mxu0 %v4279
    %4775 = vmatprep.subr.bf16.mxu0 %v4285
    %4776 = vmatpush1.bf16.msra.mxu0 %v4284
    %4777 = vmatprep.subr.bf16.mxu0 %v4290
    %4778 = vmatpush1.bf16.msra.mxu0 %v4289
    %4779 = vmatprep.subr.bf16.mxu0 %v4295
    %4780 = vmatpush1.bf16.msra.mxu0 %v4294
    %4781 = vmatprep.subr.bf16.mxu0 %v4300
    %4782 = vmatpush1.bf16.msra.mxu0 %v4299
    %4783 = vmatprep.subr.bf16.mxu0 %v4305
    %4784 = vmatpush1.bf16.msra.mxu0 %v4304
    %4785 = vmatprep.subr.bf16.mxu0 %v4310
    %4786 = vmatpush1.bf16.msra.mxu0 %v4309
    %4787 = vmatprep.subr.bf16.mxu0 %v4315
    %4788 = vmatpush1.bf16.msra.mxu0 %v4314
    %4789 = vmatprep.subr.bf16.mxu0 %v4320
    %4790 = vmatpush1.bf16.msra.mxu0 %v4319
    %4791 = vmatprep.subr.bf16.mxu0 %v4325
    %4792 = vmatpush1.bf16.msra.mxu0 %v4324
    %4793 = vmatprep.subr.bf16.mxu0 %v4330
    %4794 = vmatpush1.bf16.msra.mxu0 %v4329
    %4795 = vmatprep.subr.bf16.mxu0 %v4335
    %4796 = vmatpush1.bf16.msra.mxu0 %v4334
    %4797 = vmatprep.subr.bf16.mxu0 %v4340
    %4798 = vmatpush1.bf16.msra.mxu0 %v4339
    %4799 = vmatprep.mubr.bf16.mxu0 %v3004
    %4800 = vmatmul.mubr.bf16.gmra.mrb[0].mxu0 %v3003
    %v4801 = vpop.f32.mrb[0].mxu0
    %v4802 = vadd.f32 %v3377, %v4801
    %v4803 = vpop.f32.mrb[0].mxu0
    %v4804 = vadd.f32 %v3379, %v4803
    %v4805 = vpop.f32.mrb[0].mxu0
    %v4806 = vpop.f32.mrb[0].mxu0
    %4807 = vdwg.mxu0
    %4808 = vmatprep.subr.bf16.mxu0 %v4345
    %4809 = vmatpush1.bf16.msra.mxu0 %v4344
    %4810 = vmatprep.subr.bf16.mxu0 %v4350
    %4811 = vmatpush1.bf16.msra.mxu0 %v4349
    %4812 = vmatprep.subr.bf16.mxu0 %v4355
    %4813 = vmatpush1.bf16.msra.mxu0 %v4354
    %4814 = vmatprep.subr.bf16.mxu0 %v4360
    %4815 = vmatpush1.bf16.msra.mxu0 %v4359
    %4816 = vmatprep.subr.bf16.mxu0 %v4365
    %4817 = vmatpush1.bf16.msra.mxu0 %v4364
    %4818 = vmatprep.subr.bf16.mxu0 %v4370
    %4819 = vmatpush1.bf16.msra.mxu0 %v4369
    %4820 = vmatprep.subr.bf16.mxu0 %v4375
    %4821 = vmatpush1.bf16.msra.mxu0 %v4374
    %4822 = vmatprep.subr.bf16.mxu0 %v4380
    %4823 = vmatpush1.bf16.msra.mxu0 %v4379
    %4824 = vmatprep.subr.bf16.mxu0 %v4385
    %4825 = vmatpush1.bf16.msra.mxu0 %v4384
    %4826 = vmatprep.subr.bf16.mxu0 %v4390
    %4827 = vmatpush1.bf16.msra.mxu0 %v4389
    %4828 = vmatprep.subr.bf16.mxu0 %v4395
    %4829 = vmatpush1.bf16.msra.mxu0 %v4394
    %4830 = vmatprep.subr.bf16.mxu0 %v4400
    %4831 = vmatpush1.bf16.msra.mxu0 %v4399
    %4832 = vmatprep.subr.bf16.mxu0 %v4405
    %4833 = vmatpush1.bf16.msra.mxu0 %v4404
    %4834 = vmatprep.subr.bf16.mxu0 %v4410
    %4835 = vmatpush1.bf16.msra.mxu0 %v4409
    %4836 = vmatprep.subr.bf16.mxu0 %v4415
    %4837 = vmatpush1.bf16.msra.mxu0 %v4414
    %4838 = vmatprep.subr.bf16.mxu0 %v4420
    %4839 = vmatpush1.bf16.msra.mxu0 %v4419
    %4840 = vmatprep.mubr.bf16.mxu0 %v3006
    %4841 = vmatmul.mubr.bf16.gmra.mrb[0].mxu0 %v3005
    %v4842 = vpop.f32.mrb[0].mxu0
    %v4843 = vadd.f32 %v4802, %v4842
    %v4844 = vpop.f32.mrb[0].mxu0
    %v4845 = vadd.f32 %v4804, %v4844
    %v4846 = vpop.f32.mrb[0].mxu0
    %v4847 = vpop.f32.mrb[0].mxu0
    %4848 = vdwg.mxu0
    %4849 = vmatprep.subr.bf16.mxu0 %v4425
    %4850 = vmatpush1.bf16.msra.mxu0 %v4424
    %4851 = vmatprep.subr.bf16.mxu0 %v4430
    %4852 = vmatpush1.bf16.msra.mxu0 %v4429
    %4853 = vmatprep.subr.bf16.mxu0 %v4435
    %4854 = vmatpush1.bf16.msra.mxu0 %v4434
    %4855 = vmatprep.subr.bf16.mxu0 %v4440
    %4856 = vmatpush1.bf16.msra.mxu0 %v4439
    %4857 = vmatprep.subr.bf16.mxu0 %v4445
    %4858 = vmatpush1.bf16.msra.mxu0 %v4444
    %4859 = vmatprep.subr.bf16.mxu0 %v4450
    %4860 = vmatpush1.bf16.msra.mxu0 %v4449
    %4861 = vmatprep.subr.bf16.mxu0 %v4455
    %4862 = vmatpush1.bf16.msra.mxu0 %v4454
    %4863 = vmatprep.subr.bf16.mxu0 %v4460
    %4864 = vmatpush1.bf16.msra.mxu0 %v4459
    %4865 = vmatprep.subr.bf16.mxu0 %v4465
    %4866 = vmatpush1.bf16.msra.mxu0 %v4464
    %4867 = vmatprep.subr.bf16.mxu0 %v4470
    %4868 = vmatpush1.bf16.msra.mxu0 %v4469
    %4869 = vmatprep.subr.bf16.mxu0 %v4475
    %4870 = vmatpush1.bf16.msra.mxu0 %v4474
    %4871 = vmatprep.subr.bf16.mxu0 %v4480
    %4872 = vmatpush1.bf16.msra.mxu0 %v4479
    %4873 = vmatprep.subr.bf16.mxu0 %v4485
    %4874 = vmatpush1.bf16.msra.mxu0 %v4484
    %4875 = vmatprep.subr.bf16.mxu0 %v4490
    %4876 = vmatpush1.bf16.msra.mxu0 %v4489
    %4877 = vmatprep.subr.bf16.mxu0 %v4495
    %4878 = vmatpush1.bf16.msra.mxu0 %v4494
    %4879 = vmatprep.subr.bf16.mxu0 %v4500
    %4880 = vmatpush1.bf16.msra.mxu0 %v4499
    %4881 = vmatprep.mubr.bf16.mxu0 %v3008
    %4882 = vmatmul.mubr.bf16.gmra.mrb[0].mxu0 %v3007
    %v4883 = vpop.f32.mrb[0].mxu0
    %v4884 = vadd.f32 %v4843, %v4883
    %v4885 = vpop.f32.mrb[0].mxu0
    %v4886 = vadd.f32 %v4845, %v4885
    %v4887 = vpop.f32.mrb[0].mxu0
    %v4888 = vpop.f32.mrb[0].mxu0
    %4889 = vdwg.mxu0
    %4890 = vmatprep.subr.bf16.mxu0 %v4505
    %4891 = vmatpush1.bf16.msra.mxu0 %v4504
    %4892 = vmatprep.subr.bf16.mxu0 %v4510
    %4893 = vmatpush1.bf16.msra.mxu0 %v4509
    %4894 = vmatprep.subr.bf16.mxu0 0
    %4895 = vmatpush1.bf16.msra.mxu0 0
    %4896 = vmatprep.subr.bf16.mxu0 0
    %4897 = vmatpush1.bf16.msra.mxu0 0
    %4898 = vmatprep.subr.bf16.mxu0 0
    %4899 = vmatpush1.bf16.msra.mxu0 0
    %4900 = vmatprep.subr.bf16.mxu0 0
    %4901 = vmatpush1.bf16.msra.mxu0 0
    %4902 = vmatprep.subr.bf16.mxu0 0
    %4903 = vmatpush1.bf16.msra.mxu0 0
    %4904 = vmatprep.subr.bf16.mxu0 0
    %4905 = vmatpush1.bf16.msra.mxu0 0
    %4906 = vmatprep.subr.bf16.mxu0 0
    %4907 = vmatpush1.bf16.msra.mxu0 0
    %4908 = vmatprep.subr.bf16.mxu0 0
    %4909 = vmatpush1.bf16.msra.mxu0 0
    %4910 = vmatprep.subr.bf16.mxu0 0
    %4911 = vmatpush1.bf16.msra.mxu0 0
    %4912 = vmatprep.subr.bf16.mxu0 0
    %4913 = vmatpush1.bf16.msra.mxu0 0
    %4914 = vmatprep.subr.bf16.mxu0 0
    %4915 = vmatpush1.bf16.msra.mxu0 0
    %4916 = vmatprep.subr.bf16.mxu0 0
    %4917 = vmatpush1.bf16.msra.mxu0 0
    %4918 = vmatprep.subr.bf16.mxu0 0
    %4919 = vmatpush1.bf16.msra.mxu0 0
    %4920 = vmatprep.subr.bf16.mxu0 0
    %4921 = vmatpush1.bf16.msra.mxu0 0
    %4922 = vmatprep.mubr.bf16.mxu0 0
    %4923 = vmatmul.mubr.bf16.gmra.mrb[0].mxu0 %v4765
    %v4924 = vpop.f32.mrb[0].mxu0
    %v4925 = vadd.f32 %v4884, %v4924
    %v4926 = vpop.f32.mrb[0].mxu0
    %v4927 = vadd.f32 %v4886, %v4926
    %v4928 = vpop.f32.mrb[0].mxu0
    %v4929 = vpop.f32.mrb[0].mxu0
    %4930 = vdwg.mxu0
    %4931 = vmatprep.subr.bf16.mxu0 %v4267
    %4932 = vmatpush1.bf16.msra.mxu0 %v4266
    %4933 = vmatprep.subr.bf16.mxu0 %v4272
    %4934 = vmatpush1.bf16.msra.mxu0 %v4271
    %4935 = vmatprep.subr.bf16.mxu0 %v4277
    %4936 = vmatpush1.bf16.msra.mxu0 %v4276
    %4937 = vmatprep.subr.bf16.mxu0 %v4282
    %4938 = vmatpush1.bf16.msra.mxu0 %v4281
    %4939 = vmatprep.subr.bf16.mxu0 %v4287
    %4940 = vmatpush1.bf16.msra.mxu0 %v4286
    %4941 = vmatprep.subr.bf16.mxu0 %v4292
    %4942 = vmatpush1.bf16.msra.mxu0 %v4291
    %4943 = vmatprep.subr.bf16.mxu0 %v4297
    %4944 = vmatpush1.bf16.msra.mxu0 %v4296
    %4945 = vmatprep.subr.bf16.mxu0 %v4302
    %4946 = vmatpush1.bf16.msra.mxu0 %v4301
    %4947 = vmatprep.subr.bf16.mxu0 %v4307
    %4948 = vmatpush1.bf16.msra.mxu0 %v4306
    %4949 = vmatprep.subr.bf16.mxu0 %v4312
    %4950 = vmatpush1.bf16.msra.mxu0 %v4311
    %4951 = vmatprep.subr.bf16.mxu0 %v4317
    %4952 = vmatpush1.bf16.msra.mxu0 %v4316
    %4953 = vmatprep.subr.bf16.mxu0 %v4322
    %4954 = vmatpush1.bf16.msra.mxu0 %v4321
    %4955 = vmatprep.subr.bf16.mxu0 %v4327
    %4956 = vmatpush1.bf16.msra.mxu0 %v4326
    %4957 = vmatprep.subr.bf16.mxu0 %v4332
    %4958 = vmatpush1.bf16.msra.mxu0 %v4331
    %4959 = vmatprep.subr.bf16.mxu0 %v4337
    %4960 = vmatpush1.bf16.msra.mxu0 %v4336
    %4961 = vmatprep.subr.bf16.mxu0 %v4342
    %4962 = vmatpush1.bf16.msra.mxu0 %v4341
    %4963 = vmatprep.mubr.bf16.mxu0 %v3004
    %4964 = vmatmul.mubr.bf16.gmra.mrb[0].mxu0 %v3003
    %v4965 = vpop.f32.mrb[0].mxu0
    %v4966 = vadd.f32 %v3418, %v4965
    %v4967 = vpop.f32.mrb[0].mxu0
    %v4968 = vadd.f32 %v3420, %v4967
    %v4969 = vpop.f32.mrb[0].mxu0
    %v4970 = vpop.f32.mrb[0].mxu0
    %4971 = vdwg.mxu0
    %4972 = vmatprep.subr.bf16.mxu0 %v4347
    %4973 = vmatpush1.bf16.msra.mxu0 %v4346
    %4974 = vmatprep.subr.bf16.mxu0 %v4352
    %4975 = vmatpush1.bf16.msra.mxu0 %v4351
    %4976 = vmatprep.subr.bf16.mxu0 %v4357
    %4977 = vmatpush1.bf16.msra.mxu0 %v4356
    %4978 = vmatprep.subr.bf16.mxu0 %v4362
    %4979 = vmatpush1.bf16.msra.mxu0 %v4361
    %4980 = vmatprep.subr.bf16.mxu0 %v4367
    %4981 = vmatpush1.bf16.msra.mxu0 %v4366
    %4982 = vmatprep.subr.bf16.mxu0 %v4372
    %4983 = vmatpush1.bf16.msra.mxu0 %v4371
    %4984 = vmatprep.subr.bf16.mxu0 %v4377
    %4985 = vmatpush1.bf16.msra.mxu0 %v4376
    %4986 = vmatprep.subr.bf16.mxu0 %v4382
    %4987 = vmatpush1.bf16.msra.mxu0 %v4381
    %4988 = vmatprep.subr.bf16.mxu0 %v4387
    %4989 = vmatpush1.bf16.msra.mxu0 %v4386
    %4990 = vmatprep.subr.bf16.mxu0 %v4392
    %4991 = vmatpush1.bf16.msra.mxu0 %v4391
    %4992 = vmatprep.subr.bf16.mxu0 %v4397
    %4993 = vmatpush1.bf16.msra.mxu0 %v4396
    %4994 = vmatprep.subr.bf16.mxu0 %v4402
    %4995 = vmatpush1.bf16.msra.mxu0 %v4401
    %4996 = vmatprep.subr.bf16.mxu0 %v4407
    %4997 = vmatpush1.bf16.msra.mxu0 %v4406
    %4998 = vmatprep.subr.bf16.mxu0 %v4412
    %4999 = vmatpush1.bf16.msra.mxu0 %v4411
    %5000 = vmatprep.subr.bf16.mxu0 %v4417
    %5001 = vmatpush1.bf16.msra.mxu0 %v4416
    %5002 = vmatprep.subr.bf16.mxu0 %v4422
    %5003 = vmatpush1.bf16.msra.mxu0 %v4421
    %5004 = vmatprep.mubr.bf16.mxu0 %v3006
    %5005 = vmatmul.mubr.bf16.gmra.mrb[0].mxu0 %v3005
    %v5006 = vpop.f32.mrb[0].mxu0
    %v5007 = vadd.f32 %v4966, %v5006
    %v5008 = vpop.f32.mrb[0].mxu0
    %v5009 = vadd.f32 %v4968, %v5008
    %v5010 = vpop.f32.mrb[0].mxu0
    %v5011 = vpop.f32.mrb[0].mxu0
    %5012 = vdwg.mxu0
    %5013 = vmatprep.subr.bf16.mxu0 %v4427
    %5014 = vmatpush1.bf16.msra.mxu0 %v4426
    %5015 = vmatprep.subr.bf16.mxu0 %v4432
    %5016 = vmatpush1.bf16.msra.mxu0 %v4431
    %5017 = vmatprep.subr.bf16.mxu0 %v4437
    %5018 = vmatpush1.bf16.msra.mxu0 %v4436
    %5019 = vmatprep.subr.bf16.mxu0 %v4442
    %5020 = vmatpush1.bf16.msra.mxu0 %v4441
    %5021 = vmatprep.subr.bf16.mxu0 %v4447
    %5022 = vmatpush1.bf16.msra.mxu0 %v4446
    %5023 = vmatprep.subr.bf16.mxu0 %v4452
    %5024 = vmatpush1.bf16.msra.mxu0 %v4451
    %5025 = vmatprep.subr.bf16.mxu0 %v4457
    %5026 = vmatpush1.bf16.msra.mxu0 %v4456
    %5027 = vmatprep.subr.bf16.mxu0 %v4462
    %5028 = vmatpush1.bf16.msra.mxu0 %v4461
    %5029 = vmatprep.subr.bf16.mxu0 %v4467
    %5030 = vmatpush1.bf16.msra.mxu0 %v4466
    %5031 = vmatprep.subr.bf16.mxu0 %v4472
    %5032 = vmatpush1.bf16.msra.mxu0 %v4471
    %5033 = vmatprep.subr.bf16.mxu0 %v4477
    %5034 = vmatpush1.bf16.msra.mxu0 %v4476
    %5035 = vmatprep.subr.bf16.mxu0 %v4482
    %5036 = vmatpush1.bf16.msra.mxu0 %v4481
    %5037 = vmatprep.subr.bf16.mxu0 %v4487
    %5038 = vmatpush1.bf16.msra.mxu0 %v4486
    %5039 = vmatprep.subr.bf16.mxu0 %v4492
    %5040 = vmatpush1.bf16.msra.mxu0 %v4491
    %5041 = vmatprep.subr.bf16.mxu0 %v4497
    %5042 = vmatpush1.bf16.msra.mxu0 %v4496
    %5043 = vmatprep.subr.bf16.mxu0 %v4502
    %5044 = vmatpush1.bf16.msra.mxu0 %v4501
    %5045 = vmatprep.mubr.bf16.mxu0 %v3008
    %5046 = vmatmul.mubr.bf16.gmra.mrb[0].mxu0 %v3007
    %v5047 = vpop.f32.mrb[0].mxu0
    %v5048 = vadd.f32 %v5007, %v5047
    %v5049 = vpop.f32.mrb[0].mxu0
    %v5050 = vadd.f32 %v5009, %v5049
    %v5051 = vpop.f32.mrb[0].mxu0
    %v5052 = vpop.f32.mrb[0].mxu0
    %5053 = vdwg.mxu0
    %5054 = vmatprep.subr.bf16.mxu0 %v4507
    %5055 = vmatpush1.bf16.msra.mxu0 %v4506
    %5056 = vmatprep.subr.bf16.mxu0 %v4512
    %5057 = vmatpush1.bf16.msra.mxu0 %v4511
    %5058 = vmatprep.subr.bf16.mxu0 0
    %5059 = vmatpush1.bf16.msra.mxu0 0
    %5060 = vmatprep.subr.bf16.mxu0 0
    %5061 = vmatpush1.bf16.msra.mxu0 0
    %5062 = vmatprep.subr.bf16.mxu0 0
    %5063 = vmatpush1.bf16.msra.mxu0 0
    %5064 = vmatprep.subr.bf16.mxu0 0
    %5065 = vmatpush1.bf16.msra.mxu0 0
    %5066 = vmatprep.subr.bf16.mxu0 0
    %5067 = vmatpush1.bf16.msra.mxu0 0
    %5068 = vmatprep.subr.bf16.mxu0 0
    %5069 = vmatpush1.bf16.msra.mxu0 0
    %5070 = vmatprep.subr.bf16.mxu0 0
    %5071 = vmatpush1.bf16.msra.mxu0 0
    %5072 = vmatprep.subr.bf16.mxu0 0
    %5073 = vmatpush1.bf16.msra.mxu0 0
    %5074 = vmatprep.subr.bf16.mxu0 0
    %5075 = vmatpush1.bf16.msra.mxu0 0
    %5076 = vmatprep.subr.bf16.mxu0 0
    %5077 = vmatpush1.bf16.msra.mxu0 0
    %5078 = vmatprep.subr.bf16.mxu0 0
    %5079 = vmatpush1.bf16.msra.mxu0 0
    %5080 = vmatprep.subr.bf16.mxu0 0
    %5081 = vmatpush1.bf16.msra.mxu0 0
    %5082 = vmatprep.subr.bf16.mxu0 0
    %5083 = vmatpush1.bf16.msra.mxu0 0
    %5084 = vmatprep.subr.bf16.mxu0 0
    %5085 = vmatpush1.bf16.msra.mxu0 0
    %5086 = vmatprep.mubr.bf16.mxu0 0
    %5087 = vmatmul.mubr.bf16.gmra.mrb[0].mxu0 %v4765
    %v5088 = vpop.f32.mrb[0].mxu0
    %v5089 = vadd.f32 %v5048, %v5088
    %v5090 = vpop.f32.mrb[0].mxu0
    %v5091 = vadd.f32 %v5050, %v5090
    %v5092 = vpop.f32.mrb[0].mxu0
    %v5093 = vpop.f32.mrb[0].mxu0
    %5094 = vdwg.mxu0
    %5095 = vmatprep.subr.bf16.mxu0 0
    %5096 = vmatpush1.bf16.msra.mxu0 %v4268
    %5097 = vmatprep.subr.bf16.mxu0 0
    %5098 = vmatpush1.bf16.msra.mxu0 %v4273
    %5099 = vmatprep.subr.bf16.mxu0 0
    %5100 = vmatpush1.bf16.msra.mxu0 %v4278
    %5101 = vmatprep.subr.bf16.mxu0 0
    %5102 = vmatpush1.bf16.msra.mxu0 %v4283
    %5103 = vmatprep.subr.bf16.mxu0 0
    %5104 = vmatpush1.bf16.msra.mxu0 %v4288
    %5105 = vmatprep.subr.bf16.mxu0 0
    %5106 = vmatpush1.bf16.msra.mxu0 %v4293
    %5107 = vmatprep.subr.bf16.mxu0 0
    %5108 = vmatpush1.bf16.msra.mxu0 %v4298
    %5109 = vmatprep.subr.bf16.mxu0 0
    %5110 = vmatpush1.bf16.msra.mxu0 %v4303
    %5111 = vmatprep.subr.bf16.mxu0 0
    %5112 = vmatpush1.bf16.msra.mxu0 %v4308
    %5113 = vmatprep.subr.bf16.mxu0 0
    %5114 = vmatpush1.bf16.msra.mxu0 %v4313
    %5115 = vmatprep.subr.bf16.mxu0 0
    %5116 = vmatpush1.bf16.msra.mxu0 %v4318
    %5117 = vmatprep.subr.bf16.mxu0 0
    %5118 = vmatpush1.bf16.msra.mxu0 %v4323
    %5119 = vmatprep.subr.bf16.mxu0 0
    %5120 = vmatpush1.bf16.msra.mxu0 %v4328
    %5121 = vmatprep.subr.bf16.mxu0 0
    %5122 = vmatpush1.bf16.msra.mxu0 %v4333
    %5123 = vmatprep.subr.bf16.mxu0 0
    %5124 = vmatpush1.bf16.msra.mxu0 %v4338
    %5125 = vmatprep.subr.bf16.mxu0 0
    %5126 = vmatpush1.bf16.msra.mxu0 %v4343
    %5127 = vmatprep.mubr.bf16.mxu0 %v3004
    %5128 = vmatmul.mubr.bf16.gmra.mrb[0].mxu0 %v3003
    %v5129 = vpop.f32.mrb[0].mxu0
    %v5130 = vadd.f32 %v3459, %v5129
    %v5131 = vpop.f32.mrb[0].mxu0
    %v5132 = vpop.f32.mrb[0].mxu0
    %v5133 = vpop.f32.mrb[0].mxu0
    %5134 = vdwg.mxu0
    %5135 = vmatprep.subr.bf16.mxu0 0
    %5136 = vmatpush1.bf16.msra.mxu0 %v4348
    %5137 = vmatprep.subr.bf16.mxu0 0
    %5138 = vmatpush1.bf16.msra.mxu0 %v4353
    %5139 = vmatprep.subr.bf16.mxu0 0
    %5140 = vmatpush1.bf16.msra.mxu0 %v4358
    %5141 = vmatprep.subr.bf16.mxu0 0
    %5142 = vmatpush1.bf16.msra.mxu0 %v4363
    %5143 = vmatprep.subr.bf16.mxu0 0
    %5144 = vmatpush1.bf16.msra.mxu0 %v4368
    %5145 = vmatprep.subr.bf16.mxu0 0
    %5146 = vmatpush1.bf16.msra.mxu0 %v4373
    %5147 = vmatprep.subr.bf16.mxu0 0
    %5148 = vmatpush1.bf16.msra.mxu0 %v4378
    %5149 = vmatprep.subr.bf16.mxu0 0
    %5150 = vmatpush1.bf16.msra.mxu0 %v4383
    %5151 = vmatprep.subr.bf16.mxu0 0
    %5152 = vmatpush1.bf16.msra.mxu0 %v4388
    %5153 = vmatprep.subr.bf16.mxu0 0
    %5154 = vmatpush1.bf16.msra.mxu0 %v4393
    %5155 = vmatprep.subr.bf16.mxu0 0
    %5156 = vmatpush1.bf16.msra.mxu0 %v4398
    %5157 = vmatprep.subr.bf16.mxu0 0
    %5158 = vmatpush1.bf16.msra.mxu0 %v4403
    %5159 = vmatprep.subr.bf16.mxu0 0
    %5160 = vmatpush1.bf16.msra.mxu0 %v4408
    %5161 = vmatprep.subr.bf16.mxu0 0
    %5162 = vmatpush1.bf16.msra.mxu0 %v4413
    %5163 = vmatprep.subr.bf16.mxu0 0
    %5164 = vmatpush1.bf16.msra.mxu0 %v4418
    %5165 = vmatprep.subr.bf16.mxu0 0
    %5166 = vmatpush1.bf16.msra.mxu0 %v4423
    %5167 = vmatprep.mubr.bf16.mxu0 %v3006
    %5168 = vmatmul.mubr.bf16.gmra.mrb[0].mxu0 %v3005
    %v5169 = vpop.f32.mrb[0].mxu0
    %v5170 = vadd.f32 %v5130, %v5169
    %v5171 = vpop.f32.mrb[0].mxu0
    %v5172 = vpop.f32.mrb[0].mxu0
    %v5173 = vpop.f32.mrb[0].mxu0
    %5174 = vdwg.mxu0
    %5175 = vmatprep.subr.bf16.mxu0 0
    %5176 = vmatpush1.bf16.msra.mxu0 %v4428
    %5177 = vmatprep.subr.bf16.mxu0 0
    %5178 = vmatpush1.bf16.msra.mxu0 %v4433
    %5179 = vmatprep.subr.bf16.mxu0 0
    %5180 = vmatpush1.bf16.msra.mxu0 %v4438
    %5181 = vmatprep.subr.bf16.mxu0 0
    %5182 = vmatpush1.bf16.msra.mxu0 %v4443
    %5183 = vmatprep.subr.bf16.mxu0 0
    %5184 = vmatpush1.bf16.msra.mxu0 %v4448
    %5185 = vmatprep.subr.bf16.mxu0 0
    %5186 = vmatpush1.bf16.msra.mxu0 %v4453
    %5187 = vmatprep.subr.bf16.mxu0 0
    %5188 = vmatpush1.bf16.msra.mxu0 %v4458
    %5189 = vmatprep.subr.bf16.mxu0 0
    %5190 = vmatpush1.bf16.msra.mxu0 %v4463
    %5191 = vmatprep.subr.bf16.mxu0 0
    %5192 = vmatpush1.bf16.msra.mxu0 %v4468
    %5193 = vmatprep.subr.bf16.mxu0 0
    %5194 = vmatpush1.bf16.msra.mxu0 %v4473
    %5195 = vmatprep.subr.bf16.mxu0 0
    %5196 = vmatpush1.bf16.msra.mxu0 %v4478
    %5197 = vmatprep.subr.bf16.mxu0 0
    %5198 = vmatpush1.bf16.msra.mxu0 %v4483
    %5199 = vmatprep.subr.bf16.mxu0 0
    %5200 = vmatpush1.bf16.msra.mxu0 %v4488
    %5201 = vmatprep.subr.bf16.mxu0 0
    %5202 = vmatpush1.bf16.msra.mxu0 %v4493
    %5203 = vmatprep.subr.bf16.mxu0 0
    %5204 = vmatpush1.bf16.msra.mxu0 %v4498
    %5205 = vmatprep.subr.bf16.mxu0 0
    %5206 = vmatpush1.bf16.msra.mxu0 %v4503
    %5207 = vmatprep.mubr.bf16.mxu0 %v3008
    %5208 = vmatmul.mubr.bf16.gmra.mrb[0].mxu0 %v3007
    %v5209 = vpop.f32.mrb[0].mxu0
    %v5210 = vadd.f32 %v5170, %v5209
    %v5211 = vpop.f32.mrb[0].mxu0
    %v5212 = vpop.f32.mrb[0].mxu0
    %v5213 = vpop.f32.mrb[0].mxu0
    %5214 = vdwg.mxu0
    %5215 = vmatprep.subr.bf16.mxu0 0
    %5216 = vmatpush1.bf16.msra.mxu0 %v4508
    %5217 = vmatprep.subr.bf16.mxu0 0
    %5218 = vmatpush1.bf16.msra.mxu0 %v4513
    %5219 = vmatprep.subr.bf16.mxu0 0
    %5220 = vmatpush1.bf16.msra.mxu0 0
    %5221 = vmatprep.subr.bf16.mxu0 0
    %5222 = vmatpush1.bf16.msra.mxu0 0
    %5223 = vmatprep.subr.bf16.mxu0 0
    %5224 = vmatpush1.bf16.msra.mxu0 0
    %5225 = vmatprep.subr.bf16.mxu0 0
    %5226 = vmatpush1.bf16.msra.mxu0 0
    %5227 = vmatprep.subr.bf16.mxu0 0
    %5228 = vmatpush1.bf16.msra.mxu0 0
    %5229 = vmatprep.subr.bf16.mxu0 0
    %5230 = vmatpush1.bf16.msra.mxu0 0
    %5231 = vmatprep.subr.bf16.mxu0 0
    %5232 = vmatpush1.bf16.msra.mxu0 0
    %5233 = vmatprep.subr.bf16.mxu0 0
    %5234 = vmatpush1.bf16.msra.mxu0 0
    %5235 = vmatprep.subr.bf16.mxu0 0
    %5236 = vmatpush1.bf16.msra.mxu0 0
    %5237 = vmatprep.subr.bf16.mxu0 0
    %5238 = vmatpush1.bf16.msra.mxu0 0
    %5239 = vmatprep.subr.bf16.mxu0 0
    %5240 = vmatpush1.bf16.msra.mxu0 0
    %5241 = vmatprep.subr.bf16.mxu0 0
    %5242 = vmatpush1.bf16.msra.mxu0 0
    %5243 = vmatprep.subr.bf16.mxu0 0
    %5244 = vmatpush1.bf16.msra.mxu0 0
    %5245 = vmatprep.subr.bf16.mxu0 0
    %5246 = vmatpush1.bf16.msra.mxu0 0
    %5247 = vmatprep.mubr.bf16.mxu0 0
    %5248 = vmatmul.mubr.bf16.gmra.mrb[0].mxu0 %v4765
    %v5249 = vpop.f32.mrb[0].mxu0
    %v5250 = vadd.f32 %v5210, %v5249
    %v5251 = vpop.f32.mrb[0].mxu0
    %v5252 = vpop.f32.mrb[0].mxu0
    %v5253 = vpop.f32.mrb[0].mxu0
    %5254 = vdwg.mxu0
    %v5255 = vld [vmem:[#allocation10] sm:$0x1f]
    %v5257 = vlaneseq
    %v5258 = vshrl.u32 %v5257, 7
    %v5259 = vsub.s32 0, %v5258
    %v5260 = vrot.slane %v5255, %v5259
    %v5261 = vlaneseq
    %v5262 = vshrl.u32 %v5261, 7
    %v5263 = vsub.s32 1, %v5262
    %v5264 = vrot.slane %v5255, %v5263
    %v5265 = vlaneseq
    %v5266 = vshrl.u32 %v5265, 7
    %v5267 = vsub.s32 2, %v5266
    %v5268 = vrot.slane %v5255, %v5267
    %v5269 = vlaneseq
    %v5270 = vshrl.u32 %v5269, 7
    %v5271 = vsub.s32 3, %v5270
    %v5272 = vrot.slane %v5255, %v5271
    %v5273 = vlaneseq
    %v5274 = vshrl.u32 %v5273, 7
    %v5275 = vsub.s32 4, %v5274
    %v5276 = vrot.slane %v5255, %v5275
    %v5282 = vadd.f32 %v4925, %v5260
    %v5283 = vadd.f32 %v4927, %v5264
    %v5284 = vadd.f32 %v5089, %v5268
    %v5285 = vadd.f32 %v5091, %v5272
    %v5286 = vadd.f32 %v5250, %v5276
    %v5287 = vmax.f32 %v5282, 0.0
    %v5288 = vmax.f32 %v5283, 0.0
    %v5289 = vmax.f32 %v5284, 0.0
    %v5290 = vmax.f32 %v5285, 0.0
    %v5291 = vmax.f32 %v5286, 0.0
    %v5292 = vld [vmem:[%s11] sm:$0x1f]
    %v5294 = vlaneseq
    %v5295 = vshrl.u32 %v5294, 7
    %v5296 = vsub.s32 0, %v5295
    %v5297 = vrot.slane %v5292, %v5296
    %v5298 = vlaneseq
    %v5299 = vshrl.u32 %v5298, 7
    %v5300 = vsub.s32 1, %v5299
    %v5301 = vrot.slane %v5292, %v5300
    %v5302 = vlaneseq
    %v5303 = vshrl.u32 %v5302, 7
    %v5304 = vsub.s32 2, %v5303
    %v5305 = vrot.slane %v5292, %v5304
    %v5306 = vlaneseq
    %v5307 = vshrl.u32 %v5306, 7
    %v5308 = vsub.s32 3, %v5307
    %v5309 = vrot.slane %v5292, %v5308
    %v5310 = vlaneseq
    %v5311 = vshrl.u32 %v5310, 7
    %v5312 = vsub.s32 4, %v5311
    %v5313 = vrot.slane %v5292, %v5312
    %v5319 = vmul.f32 %v5287, %v5297
    %v5320 = vmul.f32 %v5288, %v5301
    %v5321 = vmul.f32 %v5289, %v5305
    %v5322 = vmul.f32 %v5290, %v5309
    %v5323 = vmul.f32 %v5291, %v5313
    %v5324 = vadd.f32 %v5319, %v5320
    %v5325 = vadd.f32 %v5324, %v5321
    %v5326 = vadd.f32 %v5325, %v5322
    %v5327 = vadd.f32 %v5326, %v5323
    %5328 = vadd.xlane.f32.xlu0 %v5327
    %v5329 = vpop.xlane.xlu0 %5328
    %vm5330 = vcmask 7168
    %v5331 = vsel %vm5330, %v3002, %v5329
    %v5332 = vld [vmem:[%s12] sm:$0x1]
    %v5334 = vlaneseq
    %v5335 = vshrl.u32 %v5334, 7
    %v5336 = vsub.s32 0, %v5335
    %v5337 = vrot.slane %v5332, %v5336
    %v5339 = vadd.f32 %v5331, %v5337
    %vm5340 = vcmask 15360
    %5341 = vst.msk [vmem:[%s13] sm:$0xff] %vm5340, %v5339
    // Predicated region
    $region78: #{critic_forward.1} parent=1 // pred_check
      _
    $region79: #{critic_forward.1} parent=1 // pred_check_branch
      %5343 = sbr.rel (0) target = $region81
    $region80: #{critic_forward.1} parent=1 // pred_region
      _
    $region81: #{critic_forward.1} parent=1 // pred_fallthru
      _
    // Predicated region
    $region82: #{critic_forward.1} parent=1 // pred_check
      _
    $region83: #{critic_forward.1} parent=1 // pred_check_branch
      %5345 = sbr.rel (0) target = $region85
    $region84: #{critic_forward.1} parent=1 // pred_region
      _
    $region85: #{critic_forward.1} parent=1 // pred_fallthru
      _
    %5346 = vsyncpa [#allocation3], 1
    %5347 = vsyncpa [#allocation5], 1
    %5348 = vsyncpa [#allocation8], 1
    %5349 = vsyncpa [#allocation11], 1

</llo_original>
